<compile_context>
chip_gen: v7x
topology: tpu7x:2x2x1
jax: 0.10.0
libtpu: 0.0.40
codegen_flags: <defaults>
</compile_context>

<pallas_src>
import functools
import math

import jax
import jax.numpy as jnp
import numpy as np
from jax import lax
from jax.experimental import pallas as pl
from jax.experimental.pallas import tpu as pltpu

EMBED = 200      # embed_len (the residual connections force 200)
EP = 256         # embed dim padded to a lane-tile multiple (zero padded, exact)
DK = 200         # per-head dim: Linear(embed_len, 200 * head) -> view(..., head, 200)
DKP = 256        # per-head dim padded to a lane-tile multiple (zero padded, exact)
EPS = 1e-5       # nn.LayerNorm default eps
NEG_INF = -1e30  # finite "minus infinity": no NaN even for fully masked rows


def _layer_norm(x, g, b):
    """LayerNorm over the first EMBED (=200) columns of an EP-wide, zero-padded x.

    Uses E[x^2]-E[x]^2 so the zero pad columns do not perturb the statistics;
    g/b are zero in the pad columns, so the output pad columns are exactly zero.
    """
    inv_n = 1.0 / EMBED
    mu = jnp.sum(x, axis=-1, keepdims=True) * inv_n
    ex2 = jnp.sum(x * x, axis=-1, keepdims=True) * inv_n
    var = ex2 - mu * mu
    return (x - mu) * lax.rsqrt(var + EPS) * g + b


def stack_kernel(batch, seq, head,
                 y0_ref, mask_ref,
                 wqkv_ref, bqkv_ref, wf_ref, bf_ref,
                 w1_ref, b1_ref, w2_ref, b2_ref,
                 g0_ref, be0_ref, g1_ref, be1_ref,
                 wout_ref, bout_ref,
                 logits_ref,
                 y_sc):
    """Whole decoder stack; grid axis = layer ("arbitrary"), activations carried in VMEM."""
    layer = pl.program_id(0)

    @pl.when(layer == 0)
    def _():
        y_sc[...] = y0_ref[...]

    y = y_sc[...]                                    # (B*S, EP) f32 carry, pad cols = 0
    y_bf = y.astype(jnp.bfloat16)

    # ---- fused QKV projection: one (B*S, EP) @ (EP, 3*H*DKP) MXU matmul ----
    # 1/sqrt(dk) already folded into the Q weights/bias at pack time.
    qkv = jnp.dot(y_bf, wqkv_ref[0],
                  preferred_element_type=jnp.float32) + bqkv_ref[0]
    qkv_bf = qkv.astype(jnp.bfloat16)                # single cast (no per-slice casts)

    # ---- multi-head attention per (batch, head); B and H are tiny & static ----
    ctx_rows = []
    for b in range(batch):
        r0 = b * seq
        head_parts = []
        for h in range(head):
            qo = (0 * head + h) * DKP
            ko = (1 * head + h) * DKP
            vo = (2 * head + h) * DKP
            q = qkv_bf[r0:r0 + seq, qo:qo + DKP]
            k = qkv_bf[r0:r0 + seq, ko:ko + DKP]
            v = qkv_bf[r0:r0 + seq, vo:vo + DKP]
            # scores: contract last dims directly -> no explicit transpose of K
            s = lax.dot_general(q, k, (((1,), (1,)), ((), ())),
                                preferred_element_type=jnp.float32)
            s = s + mask_ref[b * head + h]           # additive {0, -1e30} mask
            s = s - jnp.max(s, axis=-1, keepdims=True)
            p = jnp.exp(s)
            p = p * pl.reciprocal(jnp.sum(p, axis=-1, keepdims=True), approx=True)
            ctx = jnp.dot(p.astype(jnp.bfloat16), v,
                          preferred_element_type=jnp.float32)    # (S, DKP)
            head_parts.append(ctx)
        ctx_rows.append(jnp.concatenate(head_parts, axis=1))     # (S, H*DKP)
    ctx_all = jnp.concatenate(ctx_rows, axis=0)                  # (B*S, H*DKP)

    # ---- fuse(Linear(200*head, 200)): ONE matmul for all batches & heads ----
    att = jnp.dot(ctx_all.astype(jnp.bfloat16), wf_ref[0],
                  preferred_element_type=jnp.float32) + bf_ref[0]   # (B*S, EP)

    # ---- add & norm, FFN, add & norm (row-wise -> all B*S rows at once) ----
    x = _layer_norm(y + att, g0_ref[0], be0_ref[0])                  # lns[0]
    h1 = jnp.maximum(
        jnp.dot(x.astype(jnp.bfloat16), w1_ref[0],
                preferred_element_type=jnp.float32) + b1_ref[0], 0.0)
    ffn = jnp.dot(h1.astype(jnp.bfloat16), w2_ref[0],
                  preferred_element_type=jnp.float32) + b2_ref[0]
    y_new = _layer_norm(x + ffn, g1_ref[0], be1_ref[0])              # lns[1]
    y_sc[...] = y_new

    # ---- final vocab projection fused into the last grid step (lane-dense, V padded to 128) ----
    @pl.when(layer == pl.num_programs(0) - 1)
    def _():
        logits_ref[...] = (jnp.dot(y_new.astype(jnp.bfloat16), wout_ref[...],
                                   preferred_element_type=jnp.float32)
                           + bout_ref[...])


def _pack_layer_params(layer_params, head):
    """Stack per-layer params with a leading layer axis.

    Layout: QKV fused kind-major/head-major into (EP, 3*H*DKP); wf head-major
    rows into (H*DKP, EP); w1/w2 padded to (EP, EP).  All pads are zeros, the
    1/sqrt(dk) scale is folded into wq/bq (in f32), LN gamma/beta are zero in
    the pad columns.  Matmul weights are cast to bf16; biases/LN params stay f32.
    """
    inv_sqrt_dk = 1.0 / math.sqrt(DK)

    def pad_e_cols(a):                       # (1, EMBED) -> (1, EP)
        return jnp.pad(a, ((0, 0), (0, EP - EMBED)))

    wqkv, bqkv, wf, bf, w1, b1, w2, b2, g0, be0, g1, be1 = ([] for _ in range(12))
    for p in layer_params:
        wcols, bcols = [], []
        for (w, bvec, scale) in ((p["wq"], p["bq"], inv_sqrt_dk),
                                 (p["wk"], p["bk"], 1.0),
                                 (p["wv"], p["bv"], 1.0)):
            for h in range(head):
                wblk = w[:, h * DK:(h + 1) * DK] * scale           # (EMBED, DK)
                bblk = bvec[:, h * DK:(h + 1) * DK] * scale        # (1, DK)
                wcols.append(jnp.pad(wblk, ((0, EP - EMBED), (0, DKP - DK))))
                bcols.append(jnp.pad(bblk, ((0, 0), (0, DKP - DK))))
        wqkv.append(jnp.concatenate(wcols, axis=1))                # (EP, 3*H*DKP)
        bqkv.append(jnp.concatenate(bcols, axis=1))                # (1, 3*H*DKP)

        wf_rows = [jnp.pad(p["wf"][h * DK:(h + 1) * DK, :],
                           ((0, DKP - DK), (0, EP - EMBED)))
                   for h in range(head)]
        wf.append(jnp.concatenate(wf_rows, axis=0))                # (H*DKP, EP)
        bf.append(pad_e_cols(p["bf"]))

        w1.append(jnp.pad(p["w1"], ((0, EP - EMBED), (0, EP - EMBED))))
        b1.append(pad_e_cols(p["b1"]))
        w2.append(jnp.pad(p["w2"], ((0, EP - EMBED), (0, EP - EMBED))))
        b2.append(pad_e_cols(p["b2"]))

        g0.append(pad_e_cols(p["g0"]))      # zero-padded gamma -> pad cols stay 0
        be0.append(pad_e_cols(p["be0"]))
        g1.append(pad_e_cols(p["g1"]))
        be1.append(pad_e_cols(p["be1"]))

    stk = lambda xs, dt: jnp.stack(xs, axis=0).astype(dt)
    return (stk(wqkv, jnp.bfloat16), stk(bqkv, jnp.float32),
            stk(wf, jnp.bfloat16), stk(bf, jnp.float32),
            stk(w1, jnp.bfloat16), stk(b1, jnp.float32),
            stk(w2, jnp.bfloat16), stk(b2, jnp.float32),
            stk(g0, jnp.float32), stk(be0, jnp.float32),
            stk(g1, jnp.float32), stk(be1, jnp.float32))


def trm_forward(tokens, embed_mat, pos_mat, att_mat, layer_params, out_w, out_b, head):
    """Equivalent of Trm.forward(y). tokens: (B, S) int32."""
    B, S = tokens.shape
    E = embed_mat.shape[1]
    V = out_w.shape[1]
    VP = ((V + 127) // 128) * 128
    stack = len(layer_params)

    # cheap glue in XLA: embedding gather + positional add (padded to EP lanes)
    # and the layer-invariant combined additive attention mask {0, -1e30}.
    y0 = (embed_mat[tokens] + pos_mat).reshape(B * S, E).astype(jnp.float32)
    y0 = jnp.pad(y0, ((0, 0), (0, EP - E)))
    att_b = jnp.broadcast_to(jnp.asarray(att_mat, bool).reshape(1, head, S, S),
                             (B, head, S, S))
    pad_b = (tokens == 0)[:, None, None, :]                           # (B,1,1,S)
    m_bool = jnp.logical_or(att_b, pad_b)                             # (B,H,S,S)
    add_mask = jnp.where(m_bool, jnp.float32(NEG_INF),
                         jnp.float32(0.0)).reshape(B * head, S, S)

    packed = _pack_layer_params(layer_params, head)
    wout = jnp.pad(out_w, ((0, EP - E), (0, VP - V))).astype(jnp.bfloat16)
    bout = jnp.pad(out_b, ((0, 0), (0, VP - V))).astype(jnp.float32)

    def full_spec(a):
        return pl.BlockSpec(a.shape, lambda l, _n=a.ndim: (0,) * _n)

    def per_layer_spec(a):
        return pl.BlockSpec((1,) + a.shape[1:],
                            lambda l, _n=a.ndim: (l,) + (0,) * (_n - 1))

    in_specs = ([full_spec(y0), full_spec(add_mask)]
                + [per_layer_spec(a) for a in packed]
                + [full_spec(wout), full_spec(bout)])

    logits = pl.pallas_call(
        functools.partial(stack_kernel, B, S, head),
        out_shape=jax.ShapeDtypeStruct((B * S, VP), jnp.float32),
        grid=(stack,),
        in_specs=in_specs,
        out_specs=pl.BlockSpec((B * S, VP), lambda l: (0, 0)),
        scratch_shapes=[pltpu.VMEM((B * S, EP), jnp.float32)],   # activation carry
        compiler_params=pltpu.CompilerParams(
            dimension_semantics=("arbitrary",)),
    )(y0, add_mask, *packed, wout, bout)

    return logits[:, :V].reshape(B, S, V)


# ----------------------- pure-JAX f32 reference (for checking) -----------------------
def _ref_layer(y, m_bool, p, head):
    B, S, E = y.shape
    lin = lambda x, w, b: x @ w + b
    q = lin(y, p["wq"], p["bq"]).reshape(B, S, head, DK).transpose(0, 2, 1, 3)
    k = lin(y, p["wk"], p["bk"]).reshape(B, S, head, DK).transpose(0, 2, 1, 3)
    v = lin(y, p["wv"], p["bv"]).reshape(B, S, head, DK).transpose(0, 2, 1, 3)
    d = jnp.einsum("bhqd,bhkd->bhqk", q, k) / math.sqrt(DK)
    d = jnp.where(m_bool, -jnp.inf, d)
    a = jax.nn.softmax(d, axis=-1)
    c = jnp.einsum("bhqk,bhkd->bhqd", a, v).transpose(0, 2, 1, 3).reshape(B, S, head * DK)
    att = lin(c, p["wf"], p["bf"])
    def ln(x, g, b):
        mu = x.mean(-1, keepdims=True)
        var = ((x - mu) ** 2).mean(-1, keepdims=True)
        return (x - mu) / jnp.sqrt(var + EPS) * g + b
    x = ln(y + att, p["g0"], p["be0"])
    ffn = lin(jax.nn.relu(lin(x, p["w1"], p["b1"])), p["w2"], p["b2"])
    return ln(x + ffn, p["g1"], p["be1"])


def _ref_forward(tokens, embed_mat, pos_mat, att_mat, layer_params, out_w, out_b, head):
    B, S = tokens.shape
    y = embed_mat[tokens] + pos_mat
    pad = jnp.broadcast_to((tokens == 0)[:, None, None, :], (B, head, S, S))
    m_bool = jnp.logical_or(jnp.broadcast_to(att_mat, (B, head, S, S)), pad)
    for p in layer_params:
        y = _ref_layer(y, m_bool, p, head)
    return y @ out_w + out_b


# ----------------------------------- main -----------------------------------
def _init_layer(key, head):
    ks = jax.random.split(key, 12)
    lin = lambda k, din, dout, s=0.05: jax.random.normal(k, (din, dout), jnp.float32) * s
    vec = lambda k, d, s=0.02: jax.random.normal(k, (1, d), jnp.float32) * s
    return dict(
        wq=lin(ks[0], EMBED, DK * head), bq=vec(ks[1], DK * head),
        wk=lin(ks[2], EMBED, DK * head), bk=vec(ks[3], DK * head),
        wv=lin(ks[4], EMBED, DK * head), bv=vec(ks[5], DK * head),
        wf=lin(ks[6], DK * head, EMBED), bf=vec(ks[7], EMBED),
        w1=lin(ks[8], EMBED, EMBED),     b1=vec(ks[9], EMBED),
        w2=lin(ks[10], EMBED, EMBED),    b2=vec(ks[11], EMBED),
        g0=jnp.ones((1, EMBED), jnp.float32), be0=jnp.zeros((1, EMBED), jnp.float32),
        g1=jnp.ones((1, EMBED), jnp.float32), be1=jnp.zeros((1, EMBED), jnp.float32),
    )


if __name__ == "__main__":
    B, S, VOCAB, HEAD, STACK = 2, 8, 50, 2, 2

    key = jax.random.PRNGKey(0)
    k_embed, k_pos, k_tok, k_out_w, k_out_b, k_layers = jax.random.split(key, 6)

    embed_mat = jax.random.normal(k_embed, (VOCAB, EMBED), jnp.float32) * 0.1
    pos_mat = jax.random.normal(k_pos, (1, S, EMBED), jnp.float32) * 0.1
    # causal (look-ahead) mask, shape (1, head, S, S), True == masked
    att_mat = jnp.broadcast_to(jnp.triu(jnp.ones((S, S), bool), k=1),
                               (1, HEAD, S, S))
    # tokens in [1, VOCAB) so no query row is fully masked
    tokens = jax.random.randint(k_tok, (B, S), 1, VOCAB, dtype=jnp.int32)

    layer_params = [_init_layer(k, HEAD)
                    for k in jax.random.split(k_layers, STACK)]
    out_w = jax.random.normal(k_out_w, (EMBED, VOCAB), jnp.float32) * 0.05
    out_b = jax.random.normal(k_out_b, (1, VOCAB), jnp.float32) * 0.02

    out = trm_forward(tokens, embed_mat, pos_mat, att_mat,
                      layer_params, out_w, out_b, HEAD)
    out = jax.block_until_ready(out)

    ref = _ref_forward(tokens, embed_mat, pos_mat, att_mat,
                       layer_params, out_w, out_b, HEAD)
    # tolerance loosened vs. the f32 reference because the kernel deliberately
    # feeds the MXU bfloat16 operands (f32 accumulation) per the perf review.
    np.testing.assert_allclose(np.asarray(out), np.asarray(ref),
                               rtol=5e-2, atol=5e-2)

    print("KERNEL_OK")
</pallas_src>

<mosaic_0001>
module attributes {stable_mosaic.version = 11 : i64} {
  func.func @stack_kernel(%arg0: i32, %arg1: memref<16x256xf32, #tpu.memory_space<vmem>>, %arg2: memref<4x8x8xf32, #tpu.memory_space<vmem>>, %arg3: memref<1x256x1536xbf16, #tpu.memory_space<vmem>>, %arg4: memref<1x1x1536xf32, #tpu.memory_space<vmem>>, %arg5: memref<1x512x256xbf16, #tpu.memory_space<vmem>>, %arg6: memref<1x1x256xf32, #tpu.memory_space<vmem>>, %arg7: memref<1x256x256xbf16, #tpu.memory_space<vmem>>, %arg8: memref<1x1x256xf32, #tpu.memory_space<vmem>>, %arg9: memref<1x256x256xbf16, #tpu.memory_space<vmem>>, %arg10: memref<1x1x256xf32, #tpu.memory_space<vmem>>, %arg11: memref<1x1x256xf32, #tpu.memory_space<vmem>>, %arg12: memref<1x1x256xf32, #tpu.memory_space<vmem>>, %arg13: memref<1x1x256xf32, #tpu.memory_space<vmem>>, %arg14: memref<1x1x256xf32, #tpu.memory_space<vmem>>, %arg15: memref<256x128xbf16, #tpu.memory_space<vmem>>, %arg16: memref<1x128xf32, #tpu.memory_space<vmem>>, %arg17: memref<16x128xf32, #tpu.memory_space<vmem>>, %arg18: memref<16x256xf32, #tpu.memory_space<vmem>>) attributes {dimension_semantics = [#tpu.dimension_semantics<arbitrary>], iteration_bounds = array<i64: 2>, scalar_prefetch = 0 : i64, scratch_operands = 1 : i64, tpu.core_type = #tpu.core_type<tc>, window_params = [{pipeline_mode = #tpu.pipeline_mode<synchronous>, transform_indices = @transform_0, window_bounds = array<i64: 16, 256>}, {pipeline_mode = #tpu.pipeline_mode<synchronous>, transform_indices = @transform_1, window_bounds = array<i64: 4, 8, 8>}, {transform_indices = @transform_2, window_bounds = array<i64: 1, 256, 1536>}, {transform_indices = @transform_3, window_bounds = array<i64: 1, 1, 1536>}, {transform_indices = @transform_4, window_bounds = array<i64: 1, 512, 256>}, {transform_indices = @transform_5, window_bounds = array<i64: 1, 1, 256>}, {transform_indices = @transform_6, window_bounds = array<i64: 1, 256, 256>}, {transform_indices = @transform_7, window_bounds = array<i64: 1, 1, 256>}, {transform_indices = @transform_8, window_bounds = array<i64: 1, 256, 256>}, {transform_indices = @transform_9, window_bounds = array<i64: 1, 1, 256>}, {transform_indices = @transform_10, window_bounds = array<i64: 1, 1, 256>}, {transform_indices = @transform_11, window_bounds = array<i64: 1, 1, 256>}, {transform_indices = @transform_12, window_bounds = array<i64: 1, 1, 256>}, {transform_indices = @transform_13, window_bounds = array<i64: 1, 1, 256>}, {pipeline_mode = #tpu.pipeline_mode<synchronous>, transform_indices = @transform_14, window_bounds = array<i64: 256, 128>}, {pipeline_mode = #tpu.pipeline_mode<synchronous>, transform_indices = @transform_15, window_bounds = array<i64: 1, 128>}, {pipeline_mode = #tpu.pipeline_mode<synchronous>, transform_indices = @transform_16, window_bounds = array<i64: 16, 128>}]} {
    %c0_i32 = arith.constant 0 : i32
    %0 = arith.cmpi eq, %arg0, %c0_i32 : i32
    %1 = arith.extui %0 : i1 to i32
    %c0_i32_0 = arith.constant 0 : i32
    %2 = arith.cmpi ne, %1, %c0_i32_0 : i32
    scf.if %2 {
      %c0_80 = arith.constant 0 : index
      %c0_81 = arith.constant 0 : index
      %176 = vector.load %arg1[%c0_80, %c0_81] : memref<16x256xf32, #tpu.memory_space<vmem>>, vector<16x256xf32>
      %c0_82 = arith.constant 0 : index
      %c0_83 = arith.constant 0 : index
      %177 = vector.load %arg18[%c0_82, %c0_83] : memref<16x256xf32, #tpu.memory_space<vmem>>, vector<16x256xf32>
      tpu.vector_store %arg18[%c0_82, %c0_83], %176 {strides = array<i32>} : memref<16x256xf32, #tpu.memory_space<vmem>>, vector<16x256xf32>,
    } else {
    }
    %c0 = arith.constant 0 : index
    %c0_1 = arith.constant 0 : index
    %3 = vector.load %arg18[%c0, %c0_1] : memref<16x256xf32, #tpu.memory_space<vmem>>, vector<16x256xf32>
    %4 = arith.truncf %3 : vector<16x256xf32> to vector<16x256xbf16>
    %c0_2 = arith.constant 0 : index
    %c0_3 = arith.constant 0 : index
    %c0_4 = arith.constant 0 : index
    %5 = vector.load %arg3[%c0_2, %c0_3, %c0_4] : memref<1x256x1536xbf16, #tpu.memory_space<vmem>>, vector<1x256x1536xbf16>
    %6 = vector.shape_cast %5 : vector<1x256x1536xbf16> to vector<256x1536xbf16>
    %cst = arith.constant dense<0.000000e+00> : vector<16x1536xf32>
    %7 = tpu.matmul %4, %6, %cst {dimension_numbers = #tpu.dot_dimension_numbers<[1], [0], [0], [1], [0, 0, 1, 1], [], []>} : vector<16x256xbf16>, vector<256x1536xbf16>, vector<16x1536xf32> -> vector<16x1536xf32>
    %c0_5 = arith.constant 0 : index
    %c0_6 = arith.constant 0 : index
    %c0_7 = arith.constant 0 : index
    %8 = vector.load %arg4[%c0_5, %c0_6, %c0_7] : memref<1x1x1536xf32, #tpu.memory_space<vmem>>, vector<1x1x1536xf32>
    %9 = vector.shape_cast %8 : vector<1x1x1536xf32> to vector<1x1536xf32>
    %10 = vector.broadcast %9 : vector<1x1536xf32> to vector<16x1536xf32>
    %11 = arith.addf %7, %10 : vector<16x1536xf32>
    %12 = arith.truncf %11 : vector<16x1536xf32> to vector<16x1536xbf16>
    %13 = vector.extract_strided_slice %12 {offsets = [0, 0], sizes = [8, 256], strides = [1, 1]} : vector<16x1536xbf16> to vector<8x256xbf16>
    %14 = vector.extract_strided_slice %12 {offsets = [0, 512], sizes = [8, 256], strides = [1, 1]} : vector<16x1536xbf16> to vector<8x256xbf16>
    %15 = vector.extract_strided_slice %12 {offsets = [0, 1024], sizes = [8, 256], strides = [1, 1]} : vector<16x1536xbf16> to vector<8x256xbf16>
    %cst_8 = arith.constant dense<0.000000e+00> : vector<8x8xf32>
    %16 = tpu.matmul %13, %14, %cst_8 {dimension_numbers = #tpu.dot_dimension_numbers<[1], [1], [0], [0], [0, 0, 1, 0], [], []>} : vector<8x256xbf16>, vector<8x256xbf16>, vector<8x8xf32> -> vector<8x8xf32>
    %c0_9 = arith.constant 0 : index
    %c0_10 = arith.constant 0 : index
    %c0_11 = arith.constant 0 : index
    %17 = vector.load %arg2[%c0_9, %c0_10, %c0_11] : memref<4x8x8xf32, #tpu.memory_space<vmem>>, vector<1x8x8xf32>
    %18 = vector.shape_cast %17 : vector<1x8x8xf32> to vector<8x8xf32>
    %19 = arith.addf %16, %18 : vector<8x8xf32>
    %cst_12 = arith.constant dense<0xFF800000> : vector<8xf32>
    %20 = vector.multi_reduction <maximumf>, %19, %cst_12 [1] : vector<8x8xf32> to vector<8xf32>
    %21 = vector.shape_cast %20 : vector<8xf32> to vector<8x1xf32>
    %22 = vector.broadcast %21 : vector<8x1xf32> to vector<8x8xf32>
    %23 = arith.subf %19, %22 : vector<8x8xf32>
    %24 = math.exp %23 : vector<8x8xf32>
    %cst_13 = arith.constant dense<0.000000e+00> : vector<8xf32>
    %25 = vector.multi_reduction <add>, %24, %cst_13 [1] : vector<8x8xf32> to vector<8xf32>
    %26 = vector.shape_cast %25 : vector<8xf32> to vector<8x1xf32>
    %27 = tpu.reciprocal %26 {approx = true} : vector<8x1xf32> -> vector<8x1xf32>
    %28 = vector.broadcast %27 : vector<8x1xf32> to vector<8x8xf32>
    %29 = arith.mulf %24, %28 : vector<8x8xf32>
    %30 = arith.truncf %29 : vector<8x8xf32> to vector<8x8xbf16>
    %cst_14 = arith.constant dense<0.000000e+00> : vector<8x256xf32>
    %31 = tpu.matmul %30, %15, %cst_14 {dimension_numbers = #tpu.dot_dimension_numbers<[1], [0], [0], [1], [0, 0, 1, 1], [], []>} : vector<8x8xbf16>, vector<8x256xbf16>, vector<8x256xf32> -> vector<8x256xf32>
    %32 = vector.extract_strided_slice %12 {offsets = [0, 256], sizes = [8, 256], strides = [1, 1]} : vector<16x1536xbf16> to vector<8x256xbf16>
    %33 = vector.extract_strided_slice %12 {offsets = [0, 768], sizes = [8, 256], strides = [1, 1]} : vector<16x1536xbf16> to vector<8x256xbf16>
    %34 = vector.extract_strided_slice %12 {offsets = [0, 1280], sizes = [8, 256], strides = [1, 1]} : vector<16x1536xbf16> to vector<8x256xbf16>
    %cst_15 = arith.constant dense<0.000000e+00> : vector<8x8xf32>
    %35 = tpu.matmul %32, %33, %cst_15 {dimension_numbers = #tpu.dot_dimension_numbers<[1], [1], [0], [0], [0, 0, 1, 0], [], []>} : vector<8x256xbf16>, vector<8x256xbf16>, vector<8x8xf32> -> vector<8x8xf32>
    %c1 = arith.constant 1 : index
    %c0_16 = arith.constant 0 : index
    %c0_17 = arith.constant 0 : index
    %36 = vector.load %arg2[%c1, %c0_16, %c0_17] : memref<4x8x8xf32, #tpu.memory_space<vmem>>, vector<1x8x8xf32>
    %37 = vector.shape_cast %36 : vector<1x8x8xf32> to vector<8x8xf32>
    %38 = arith.addf %35, %37 : vector<8x8xf32>
    %cst_18 = arith.constant dense<0xFF800000> : vector<8xf32>
    %39 = vector.multi_reduction <maximumf>, %38, %cst_18 [1] : vector<8x8xf32> to vector<8xf32>
    %40 = vector.shape_cast %39 : vector<8xf32> to vector<8x1xf32>
    %41 = vector.broadcast %40 : vector<8x1xf32> to vector<8x8xf32>
    %42 = arith.subf %38, %41 : vector<8x8xf32>
    %43 = math.exp %42 : vector<8x8xf32>
    %cst_19 = arith.constant dense<0.000000e+00> : vector<8xf32>
    %44 = vector.multi_reduction <add>, %43, %cst_19 [1] : vector<8x8xf32> to vector<8xf32>
    %45 = vector.shape_cast %44 : vector<8xf32> to vector<8x1xf32>
    %46 = tpu.reciprocal %45 {approx = true} : vector<8x1xf32> -> vector<8x1xf32>
    %47 = vector.broadcast %46 : vector<8x1xf32> to vector<8x8xf32>
    %48 = arith.mulf %43, %47 : vector<8x8xf32>
    %49 = arith.truncf %48 : vector<8x8xf32> to vector<8x8xbf16>
    %cst_20 = arith.constant dense<0.000000e+00> : vector<8x256xf32>
    %50 = tpu.matmul %49, %34, %cst_20 {dimension_numbers = #tpu.dot_dimension_numbers<[1], [0], [0], [1], [0, 0, 1, 1], [], []>} : vector<8x8xbf16>, vector<8x256xbf16>, vector<8x256xf32> -> vector<8x256xf32>
    %51 = tpu.concatenate %31, %50 in 1 : vector<8x256xf32>, vector<8x256xf32> -> vector<8x512xf32>
    %52 = vector.extract_strided_slice %12 {offsets = [8, 0], sizes = [8, 256], strides = [1, 1]} : vector<16x1536xbf16> to vector<8x256xbf16>
    %53 = vector.extract_strided_slice %12 {offsets = [8, 512], sizes = [8, 256], strides = [1, 1]} : vector<16x1536xbf16> to vector<8x256xbf16>
    %54 = vector.extract_strided_slice %12 {offsets = [8, 1024], sizes = [8, 256], strides = [1, 1]} : vector<16x1536xbf16> to vector<8x256xbf16>
    %cst_21 = arith.constant dense<0.000000e+00> : vector<8x8xf32>
    %55 = tpu.matmul %52, %53, %cst_21 {dimension_numbers = #tpu.dot_dimension_numbers<[1], [1], [0], [0], [0, 0, 1, 0], [], []>} : vector<8x256xbf16>, vector<8x256xbf16>, vector<8x8xf32> -> vector<8x8xf32>
    %c2 = arith.constant 2 : index
    %c0_22 = arith.constant 0 : index
    %c0_23 = arith.constant 0 : index
    %56 = vector.load %arg2[%c2, %c0_22, %c0_23] : memref<4x8x8xf32, #tpu.memory_space<vmem>>, vector<1x8x8xf32>
    %57 = vector.shape_cast %56 : vector<1x8x8xf32> to vector<8x8xf32>
    %58 = arith.addf %55, %57 : vector<8x8xf32>
    %cst_24 = arith.constant dense<0xFF800000> : vector<8xf32>
    %59 = vector.multi_reduction <maximumf>, %58, %cst_24 [1] : vector<8x8xf32> to vector<8xf32>
    %60 = vector.shape_cast %59 : vector<8xf32> to vector<8x1xf32>
    %61 = vector.broadcast %60 : vector<8x1xf32> to vector<8x8xf32>
    %62 = arith.subf %58, %61 : vector<8x8xf32>
    %63 = math.exp %62 : vector<8x8xf32>
    %cst_25 = arith.constant dense<0.000000e+00> : vector<8xf32>
    %64 = vector.multi_reduction <add>, %63, %cst_25 [1] : vector<8x8xf32> to vector<8xf32>
    %65 = vector.shape_cast %64 : vector<8xf32> to vector<8x1xf32>
    %66 = tpu.reciprocal %65 {approx = true} : vector<8x1xf32> -> vector<8x1xf32>
    %67 = vector.broadcast %66 : vector<8x1xf32> to vector<8x8xf32>
    %68 = arith.mulf %63, %67 : vector<8x8xf32>
    %69 = arith.truncf %68 : vector<8x8xf32> to vector<8x8xbf16>
    %cst_26 = arith.constant dense<0.000000e+00> : vector<8x256xf32>
    %70 = tpu.matmul %69, %54, %cst_26 {dimension_numbers = #tpu.dot_dimension_numbers<[1], [0], [0], [1], [0, 0, 1, 1], [], []>} : vector<8x8xbf16>, vector<8x256xbf16>, vector<8x256xf32> -> vector<8x256xf32>
    %71 = vector.extract_strided_slice %12 {offsets = [8, 256], sizes = [8, 256], strides = [1, 1]} : vector<16x1536xbf16> to vector<8x256xbf16>
    %72 = vector.extract_strided_slice %12 {offsets = [8, 768], sizes = [8, 256], strides = [1, 1]} : vector<16x1536xbf16> to vector<8x256xbf16>
    %73 = vector.extract_strided_slice %12 {offsets = [8, 1280], sizes = [8, 256], strides = [1, 1]} : vector<16x1536xbf16> to vector<8x256xbf16>
    %cst_27 = arith.constant dense<0.000000e+00> : vector<8x8xf32>
    %74 = tpu.matmul %71, %72, %cst_27 {dimension_numbers = #tpu.dot_dimension_numbers<[1], [1], [0], [0], [0, 0, 1, 0], [], []>} : vector<8x256xbf16>, vector<8x256xbf16>, vector<8x8xf32> -> vector<8x8xf32>
    %c3 = arith.constant 3 : index
    %c0_28 = arith.constant 0 : index
    %c0_29 = arith.constant 0 : index
    %75 = vector.load %arg2[%c3, %c0_28, %c0_29] : memref<4x8x8xf32, #tpu.memory_space<vmem>>, vector<1x8x8xf32>
    %76 = vector.shape_cast %75 : vector<1x8x8xf32> to vector<8x8xf32>
    %77 = arith.addf %74, %76 : vector<8x8xf32>
    %cst_30 = arith.constant dense<0xFF800000> : vector<8xf32>
    %78 = vector.multi_reduction <maximumf>, %77, %cst_30 [1] : vector<8x8xf32> to vector<8xf32>
    %79 = vector.shape_cast %78 : vector<8xf32> to vector<8x1xf32>
    %80 = vector.broadcast %79 : vector<8x1xf32> to vector<8x8xf32>
    %81 = arith.subf %77, %80 : vector<8x8xf32>
    %82 = math.exp %81 : vector<8x8xf32>
    %cst_31 = arith.constant dense<0.000000e+00> : vector<8xf32>
    %83 = vector.multi_reduction <add>, %82, %cst_31 [1] : vector<8x8xf32> to vector<8xf32>
    %84 = vector.shape_cast %83 : vector<8xf32> to vector<8x1xf32>
    %85 = tpu.reciprocal %84 {approx = true} : vector<8x1xf32> -> vector<8x1xf32>
    %86 = vector.broadcast %85 : vector<8x1xf32> to vector<8x8xf32>
    %87 = arith.mulf %82, %86 : vector<8x8xf32>
    %88 = arith.truncf %87 : vector<8x8xf32> to vector<8x8xbf16>
    %cst_32 = arith.constant dense<0.000000e+00> : vector<8x256xf32>
    %89 = tpu.matmul %88, %73, %cst_32 {dimension_numbers = #tpu.dot_dimension_numbers<[1], [0], [0], [1], [0, 0, 1, 1], [], []>} : vector<8x8xbf16>, vector<8x256xbf16>, vector<8x256xf32> -> vector<8x256xf32>
    %90 = tpu.concatenate %70, %89 in 1 : vector<8x256xf32>, vector<8x256xf32> -> vector<8x512xf32>
    %91 = tpu.concatenate %51, %90 in 0 : vector<8x512xf32>, vector<8x512xf32> -> vector<16x512xf32>
    %92 = arith.truncf %91 : vector<16x512xf32> to vector<16x512xbf16>
    %c0_33 = arith.constant 0 : index
    %c0_34 = arith.constant 0 : index
    %c0_35 = arith.constant 0 : index
    %93 = vector.load %arg5[%c0_33, %c0_34, %c0_35] : memref<1x512x256xbf16, #tpu.memory_space<vmem>>, vector<1x512x256xbf16>
    %94 = vector.shape_cast %93 : vector<1x512x256xbf16> to vector<512x256xbf16>
    %cst_36 = arith.constant dense<0.000000e+00> : vector<16x256xf32>
    %95 = tpu.matmul %92, %94, %cst_36 {dimension_numbers = #tpu.dot_dimension_numbers<[1], [0], [0], [1], [0, 0, 1, 1], [], []>} : vector<16x512xbf16>, vector<512x256xbf16>, vector<16x256xf32> -> vector<16x256xf32>
    %c0_37 = arith.constant 0 : index
    %c0_38 = arith.constant 0 : index
    %c0_39 = arith.constant 0 : index
    %96 = vector.load %arg6[%c0_37, %c0_38, %c0_39] : memref<1x1x256xf32, #tpu.memory_space<vmem>>, vector<1x1x256xf32>
    %97 = vector.shape_cast %96 : vector<1x1x256xf32> to vector<1x256xf32>
    %98 = vector.broadcast %97 : vector<1x256xf32> to vector<16x256xf32>
    %99 = arith.addf %95, %98 : vector<16x256xf32>
    %100 = arith.addf %3, %99 : vector<16x256xf32>
    %c0_40 = arith.constant 0 : index
    %c0_41 = arith.constant 0 : index
    %c0_42 = arith.constant 0 : index
    %101 = vector.load %arg11[%c0_40, %c0_41, %c0_42] : memref<1x1x256xf32, #tpu.memory_space<vmem>>, vector<1x1x256xf32>
    %102 = vector.shape_cast %101 : vector<1x1x256xf32> to vector<1x256xf32>
    %c0_43 = arith.constant 0 : index
    %c0_44 = arith.constant 0 : index
    %c0_45 = arith.constant 0 : index
    %103 = vector.load %arg12[%c0_43, %c0_44, %c0_45] : memref<1x1x256xf32, #tpu.memory_space<vmem>>, vector<1x1x256xf32>
    %104 = vector.shape_cast %103 : vector<1x1x256xf32> to vector<1x256xf32>
    %cst_46 = arith.constant dense<0.000000e+00> : vector<16xf32>
    %105 = vector.multi_reduction <add>, %100, %cst_46 [1] : vector<16x256xf32> to vector<16xf32>
    %106 = vector.shape_cast %105 : vector<16xf32> to vector<16x1xf32>
    %cst_47 = arith.constant 5.000000e-03 : f32
    %107 = vector.broadcast %cst_47 : f32 to vector<16x1xf32>
    %108 = arith.mulf %106, %107 : vector<16x1xf32>
    %109 = arith.mulf %100, %100 : vector<16x256xf32>
    %cst_48 = arith.constant dense<0.000000e+00> : vector<16xf32>
    %110 = vector.multi_reduction <add>, %109, %cst_48 [1] : vector<16x256xf32> to vector<16xf32>
    %111 = vector.shape_cast %110 : vector<16xf32> to vector<16x1xf32>
    %cst_49 = arith.constant 5.000000e-03 : f32
    %112 = vector.broadcast %cst_49 : f32 to vector<16x1xf32>
    %113 = arith.mulf %111, %112 : vector<16x1xf32>
    %114 = arith.mulf %108, %108 : vector<16x1xf32>
    %115 = arith.subf %113, %114 : vector<16x1xf32>
    %116 = vector.broadcast %108 : vector<16x1xf32> to vector<16x256xf32>
    %117 = arith.subf %100, %116 : vector<16x256xf32>
    %cst_50 = arith.constant 9.99999974E-6 : f32
    %118 = vector.broadcast %cst_50 : f32 to vector<16x1xf32>
    %119 = arith.addf %115, %118 : vector<16x1xf32>
    %120 = math.rsqrt %119 : vector<16x1xf32>
    %121 = vector.broadcast %120 : vector<16x1xf32> to vector<16x256xf32>
    %122 = arith.mulf %117, %121 : vector<16x256xf32>
    %123 = vector.broadcast %102 : vector<1x256xf32> to vector<16x256xf32>
    %124 = arith.mulf %122, %123 : vector<16x256xf32>
    %125 = vector.broadcast %104 : vector<1x256xf32> to vector<16x256xf32>
    %126 = arith.addf %124, %125 : vector<16x256xf32>
    %127 = arith.truncf %126 : vector<16x256xf32> to vector<16x256xbf16>
    %c0_51 = arith.constant 0 : index
    %c0_52 = arith.constant 0 : index
    %c0_53 = arith.constant 0 : index
    %128 = vector.load %arg7[%c0_51, %c0_52, %c0_53] : memref<1x256x256xbf16, #tpu.memory_space<vmem>>, vector<1x256x256xbf16>
    %129 = vector.shape_cast %128 : vector<1x256x256xbf16> to vector<256x256xbf16>
    %cst_54 = arith.constant dense<0.000000e+00> : vector<16x256xf32>
    %130 = tpu.matmul %127, %129, %cst_54 {dimension_numbers = #tpu.dot_dimension_numbers<[1], [0], [0], [1], [0, 0, 1, 1], [], []>} : vector<16x256xbf16>, vector<256x256xbf16>, vector<16x256xf32> -> vector<16x256xf32>
    %c0_55 = arith.constant 0 : index
    %c0_56 = arith.constant 0 : index
    %c0_57 = arith.constant 0 : index
    %131 = vector.load %arg8[%c0_55, %c0_56, %c0_57] : memref<1x1x256xf32, #tpu.memory_space<vmem>>, vector<1x1x256xf32>
    %132 = vector.shape_cast %131 : vector<1x1x256xf32> to vector<1x256xf32>
    %133 = vector.broadcast %132 : vector<1x256xf32> to vector<16x256xf32>
    %134 = arith.addf %130, %133 : vector<16x256xf32>
    %cst_58 = arith.constant 0.000000e+00 : f32
    %135 = vector.broadcast %cst_58 : f32 to vector<16x256xf32>
    %136 = arith.maximumf %134, %135 : vector<16x256xf32>
    %137 = arith.truncf %136 : vector<16x256xf32> to vector<16x256xbf16>
    %c0_59 = arith.constant 0 : index
    %c0_60 = arith.constant 0 : index
    %c0_61 = arith.constant 0 : index
    %138 = vector.load %arg9[%c0_59, %c0_60, %c0_61] : memref<1x256x256xbf16, #tpu.memory_space<vmem>>, vector<1x256x256xbf16>
    %139 = vector.shape_cast %138 : vector<1x256x256xbf16> to vector<256x256xbf16>
    %cst_62 = arith.constant dense<0.000000e+00> : vector<16x256xf32>
    %140 = tpu.matmul %137, %139, %cst_62 {dimension_numbers = #tpu.dot_dimension_numbers<[1], [0], [0], [1], [0, 0, 1, 1], [], []>} : vector<16x256xbf16>, vector<256x256xbf16>, vector<16x256xf32> -> vector<16x256xf32>
    %c0_63 = arith.constant 0 : index
    %c0_64 = arith.constant 0 : index
    %c0_65 = arith.constant 0 : index
    %141 = vector.load %arg10[%c0_63, %c0_64, %c0_65] : memref<1x1x256xf32, #tpu.memory_space<vmem>>, vector<1x1x256xf32>
    %142 = vector.shape_cast %141 : vector<1x1x256xf32> to vector<1x256xf32>
    %143 = vector.broadcast %142 : vector<1x256xf32> to vector<16x256xf32>
    %144 = arith.addf %140, %143 : vector<16x256xf32>
    %145 = arith.addf %126, %144 : vector<16x256xf32>
    %c0_66 = arith.constant 0 : index
    %c0_67 = arith.constant 0 : index
    %c0_68 = arith.constant 0 : index
    %146 = vector.load %arg13[%c0_66, %c0_67, %c0_68] : memref<1x1x256xf32, #tpu.memory_space<vmem>>, vector<1x1x256xf32>
    %147 = vector.shape_cast %146 : vector<1x1x256xf32> to vector<1x256xf32>
    %c0_69 = arith.constant 0 : index
    %c0_70 = arith.constant 0 : index
    %c0_71 = arith.constant 0 : index
    %148 = vector.load %arg14[%c0_69, %c0_70, %c0_71] : memref<1x1x256xf32, #tpu.memory_space<vmem>>, vector<1x1x256xf32>
    %149 = vector.shape_cast %148 : vector<1x1x256xf32> to vector<1x256xf32>
    %cst_72 = arith.constant dense<0.000000e+00> : vector<16xf32>
    %150 = vector.multi_reduction <add>, %145, %cst_72 [1] : vector<16x256xf32> to vector<16xf32>
    %151 = vector.shape_cast %150 : vector<16xf32> to vector<16x1xf32>
    %cst_73 = arith.constant 5.000000e-03 : f32
    %152 = vector.broadcast %cst_73 : f32 to vector<16x1xf32>
    %153 = arith.mulf %151, %152 : vector<16x1xf32>
    %154 = arith.mulf %145, %145 : vector<16x256xf32>
    %cst_74 = arith.constant dense<0.000000e+00> : vector<16xf32>
    %155 = vector.multi_reduction <add>, %154, %cst_74 [1] : vector<16x256xf32> to vector<16xf32>
    %156 = vector.shape_cast %155 : vector<16xf32> to vector<16x1xf32>
    %cst_75 = arith.constant 5.000000e-03 : f32
    %157 = vector.broadcast %cst_75 : f32 to vector<16x1xf32>
    %158 = arith.mulf %156, %157 : vector<16x1xf32>
    %159 = arith.mulf %153, %153 : vector<16x1xf32>
    %160 = arith.subf %158, %159 : vector<16x1xf32>
    %161 = vector.broadcast %153 : vector<16x1xf32> to vector<16x256xf32>
    %162 = arith.subf %145, %161 : vector<16x256xf32>
    %cst_76 = arith.constant 9.99999974E-6 : f32
    %163 = vector.broadcast %cst_76 : f32 to vector<16x1xf32>
    %164 = arith.addf %160, %163 : vector<16x1xf32>
    %165 = math.rsqrt %164 : vector<16x1xf32>
    %166 = vector.broadcast %165 : vector<16x1xf32> to vector<16x256xf32>
    %167 = arith.mulf %162, %166 : vector<16x256xf32>
    %168 = vector.broadcast %147 : vector<1x256xf32> to vector<16x256xf32>
    %169 = arith.mulf %167, %168 : vector<16x256xf32>
    %170 = vector.broadcast %149 : vector<1x256xf32> to vector<16x256xf32>
    %171 = arith.addf %169, %170 : vector<16x256xf32>
    %c0_77 = arith.constant 0 : index
    %c0_78 = arith.constant 0 : index
    %172 = vector.load %arg18[%c0_77, %c0_78] : memref<16x256xf32, #tpu.memory_space<vmem>>, vector<16x256xf32>
    tpu.vector_store %arg18[%c0_77, %c0_78], %171 {strides = array<i32>} : memref<16x256xf32, #tpu.memory_space<vmem>>, vector<16x256xf32>,
    %c1_i32 = arith.constant 1 : i32
    %173 = arith.cmpi eq, %arg0, %c1_i32 : i32
    %174 = arith.extui %173 : i1 to i32
    %c0_i32_79 = arith.constant 0 : i32
    %175 = arith.cmpi ne, %174, %c0_i32_79 : i32
    scf.if %175 {
      %176 = arith.truncf %171 : vector<16x256xf32> to vector<16x256xbf16>
      %c0_80 = arith.constant 0 : index
      %c0_81 = arith.constant 0 : index
      %177 = vector.load %arg15[%c0_80, %c0_81] : memref<256x128xbf16, #tpu.memory_space<vmem>>, vector<256x128xbf16>
      %cst_82 = arith.constant dense<0.000000e+00> : vector<16x128xf32>
      %178 = tpu.matmul %176, %177, %cst_82 {dimension_numbers = #tpu.dot_dimension_numbers<[1], [0], [0], [1], [0, 0, 1, 1], [], []>} : vector<16x256xbf16>, vector<256x128xbf16>, vector<16x128xf32> -> vector<16x128xf32>
      %c0_83 = arith.constant 0 : index
      %c0_84 = arith.constant 0 : index
      %179 = vector.load %arg16[%c0_83, %c0_84] : memref<1x128xf32, #tpu.memory_space<vmem>>, vector<1x128xf32>
      %180 = vector.broadcast %179 : vector<1x128xf32> to vector<16x128xf32>
      %181 = arith.addf %178, %180 : vector<16x128xf32>
      %c0_85 = arith.constant 0 : index
      %c0_86 = arith.constant 0 : index
      %182 = vector.load %arg17[%c0_85, %c0_86] : memref<16x128xf32, #tpu.memory_space<vmem>>, vector<16x128xf32>
      tpu.vector_store %arg17[%c0_85, %c0_86], %181 {strides = array<i32>} : memref<16x128xf32, #tpu.memory_space<vmem>>, vector<16x128xf32>,
    } else {
    }
    return
  }
  func.func @transform_0(%arg0: i32) -> (i32, i32) {
    %c0_i32 = arith.constant 0 : i32
    %c0_i32_0 = arith.constant 0 : i32
    %c0_i32_1 = arith.constant 0 : i32
    return %c0_i32, %c0_i32_0 : i32, i32
  }
  func.func @transform_1(%arg0: i32) -> (i32, i32, i32) {
    %c0_i32 = arith.constant 0 : i32
    %c0_i32_0 = arith.constant 0 : i32
    %c0_i32_1 = arith.constant 0 : i32
    %c0_i32_2 = arith.constant 0 : i32
    return %c0_i32, %c0_i32_0, %c0_i32_1 : i32, i32, i32
  }
  func.func @transform_2(%arg0: i32) -> (i32, i32, i32) {
    %c0_i32 = arith.constant 0 : i32
    %c0_i32_0 = arith.constant 0 : i32
    %c0_i32_1 = arith.constant 0 : i32
    return %arg0, %c0_i32, %c0_i32_0 : i32, i32, i32
  }
  func.func @transform_3(%arg0: i32) -> (i32, i32, i32) {
    %c0_i32 = arith.constant 0 : i32
    %c0_i32_0 = arith.constant 0 : i32
    %c0_i32_1 = arith.constant 0 : i32
    return %arg0, %c0_i32, %c0_i32_0 : i32, i32, i32
  }
  func.func @transform_4(%arg0: i32) -> (i32, i32, i32) {
    %c0_i32 = arith.constant 0 : i32
    %c0_i32_0 = arith.constant 0 : i32
    %c0_i32_1 = arith.constant 0 : i32
    return %arg0, %c0_i32, %c0_i32_0 : i32, i32, i32
  }
  func.func @transform_5(%arg0: i32) -> (i32, i32, i32) {
    %c0_i32 = arith.constant 0 : i32
    %c0_i32_0 = arith.constant 0 : i32
    %c0_i32_1 = arith.constant 0 : i32
    return %arg0, %c0_i32, %c0_i32_0 : i32, i32, i32
  }
  func.func @transform_6(%arg0: i32) -> (i32, i32, i32) {
    %c0_i32 = arith.constant 0 : i32
    %c0_i32_0 = arith.constant 0 : i32
    %c0_i32_1 = arith.constant 0 : i32
    return %arg0, %c0_i32, %c0_i32_0 : i32, i32, i32
  }
  func.func @transform_7(%arg0: i32) -> (i32, i32, i32) {
    %c0_i32 = arith.constant 0 : i32
    %c0_i32_0 = arith.constant 0 : i32
    %c0_i32_1 = arith.constant 0 : i32
    return %arg0, %c0_i32, %c0_i32_0 : i32, i32, i32
  }
  func.func @transform_8(%arg0: i32) -> (i32, i32, i32) {
    %c0_i32 = arith.constant 0 : i32
    %c0_i32_0 = arith.constant 0 : i32
    %c0_i32_1 = arith.constant 0 : i32
    return %arg0, %c0_i32, %c0_i32_0 : i32, i32, i32
  }
  func.func @transform_9(%arg0: i32) -> (i32, i32, i32) {
    %c0_i32 = arith.constant 0 : i32
    %c0_i32_0 = arith.constant 0 : i32
    %c0_i32_1 = arith.constant 0 : i32
    return %arg0, %c0_i32, %c0_i32_0 : i32, i32, i32
  }
  func.func @transform_10(%arg0: i32) -> (i32, i32, i32) {
    %c0_i32 = arith.constant 0 : i32
    %c0_i32_0 = arith.constant 0 : i32
    %c0_i32_1 = arith.constant 0 : i32
    return %arg0, %c0_i32, %c0_i32_0 : i32, i32, i32
  }
  func.func @transform_11(%arg0: i32) -> (i32, i32, i32) {
    %c0_i32 = arith.constant 0 : i32
    %c0_i32_0 = arith.constant 0 : i32
    %c0_i32_1 = arith.constant 0 : i32
    return %arg0, %c0_i32, %c0_i32_0 : i32, i32, i32
  }
  func.func @transform_12(%arg0: i32) -> (i32, i32, i32) {
    %c0_i32 = arith.constant 0 : i32
    %c0_i32_0 = arith.constant 0 : i32
    %c0_i32_1 = arith.constant 0 : i32
    return %arg0, %c0_i32, %c0_i32_0 : i32, i32, i32
  }
  func.func @transform_13(%arg0: i32) -> (i32, i32, i32) {
    %c0_i32 = arith.constant 0 : i32
    %c0_i32_0 = arith.constant 0 : i32
    %c0_i32_1 = arith.constant 0 : i32
    return %arg0, %c0_i32, %c0_i32_0 : i32, i32, i32
  }
  func.func @transform_14(%arg0: i32) -> (i32, i32) {
    %c0_i32 = arith.constant 0 : i32
    %c0_i32_0 = arith.constant 0 : i32
    %c0_i32_1 = arith.constant 0 : i32
    return %c0_i32, %c0_i32_0 : i32, i32
  }
  func.func @transform_15(%arg0: i32) -> (i32, i32) {
    %c0_i32 = arith.constant 0 : i32
    %c0_i32_0 = arith.constant 0 : i32
    %c0_i32_1 = arith.constant 0 : i32
    return %c0_i32, %c0_i32_0 : i32, i32
  }
  func.func @transform_16(%arg0: i32) -> (i32, i32) {
    %c0_i32 = arith.constant 0 : i32
    %c0_i32_0 = arith.constant 0 : i32
    %c0_i32_1 = arith.constant 0 : i32
    return %c0_i32, %c0_i32_0 : i32, i32
  }
}

</mosaic_0001>

<llo_original>
// kernel: tpu_custom_call.1
$region0: #{tpu_custom_call.1}
  #allocation0 [shape = 'u32[]', space=smem, size = 0x4, offset = 0x4, fixed_abs, tag = 'smem constant byte address 0x4 - core index']
  #allocation1 [shape = 'u32[144,128]{1,0:T(1,128)}', space=vmem, size = 0x12000, scoped, tag = 'internal scratch']
  #allocation2 [shape = 'f32[16,256]{1,0:T(8,128)}', space=vmem, size = 0x4000, scoped, tag = 'scratch operand']
  %s0 = inlined_call_operand.hbm [shape: f32[16,256], index: 0, kind: input, shape index: {}]
  %s1 = inlined_call_operand.hbm [shape: f32[4,8,8], index: 1, kind: input, shape index: {}]
  %s2 = inlined_call_operand.hbm [shape: bf16[2,256,1536], index: 2, kind: input, shape index: {}]
  %s3 = inlined_call_operand.hbm [shape: f32[2,1,1536], index: 3, kind: input, shape index: {}]
  %s4 = inlined_call_operand.hbm [shape: bf16[2,512,256], index: 4, kind: input, shape index: {}]
  %s5 = inlined_call_operand.hbm [shape: f32[2,1,256], index: 5, kind: input, shape index: {}]
  %s6 = inlined_call_operand.hbm [shape: bf16[2,256,256], index: 6, kind: input, shape index: {}]
  %s7 = inlined_call_operand.hbm [shape: f32[2,1,256], index: 7, kind: input, shape index: {}]
  %s8 = inlined_call_operand.hbm [shape: bf16[2,256,256], index: 8, kind: input, shape index: {}]
  %s9 = inlined_call_operand.hbm [shape: f32[2,1,256], index: 9, kind: input, shape index: {}]
  %s10 = inlined_call_operand.hbm [shape: f32[2,1,256], index: 10, kind: input, shape index: {}]
  %s11 = inlined_call_operand.hbm [shape: f32[2,1,256], index: 11, kind: input, shape index: {}]
  %s12 = inlined_call_operand.hbm [shape: f32[2,1,256], index: 12, kind: input, shape index: {}]
  %s13 = inlined_call_operand.hbm [shape: f32[2,1,256], index: 13, kind: input, shape index: {}]
  %s14 = inlined_call_operand.hbm [shape: bf16[256,128], index: 14, kind: input, shape index: {}]
  %s15 = inlined_call_operand.hbm [shape: f32[1,128], index: 15, kind: input, shape index: {}]
  %s16 = inlined_call_operand.hbm [shape: f32[16,128], index: 16, kind: output, shape index: {}]
  %s17 = sld [smem:[#allocation0]]
  $region169: #{tpu_custom_call.1} parent=0
    _
  %s19 = ssub.s32 1, %s17
  %s20 = scalar_select 0, %s19, %s17
  $region1: #{tpu_custom_call.1} parent=0
    #allocation3 [shape = 'u8[16384]{0}', space=vmem, size = 0x4000, scoped, tag = 'input window, operand 0, single buffered']
    #allocation4 [shape = 's32[2]{0}', space=sflag, size = 0x8, scoped, tag = 'scoped memory for tpu_custom_call.1']
    #allocation5 [shape = 's32[2]{0}', space=sflag, size = 0x8, scoped, tag = 'scoped memory for tpu_custom_call.1']
    #allocation6 [shape = 'u8[16384]{0}', space=vmem, size = 0x4000, scoped, tag = 'input window, operand 1, single buffered']
    #allocation7 [shape = 's32[1]{0}', space=sflag, size = 0x4, scoped, tag = 'scoped memory for tpu_custom_call.1']
    #allocation8 [shape = 'u8[1572864]{0}', space=vmem, size = 0x180000, scoped, tag = 'input window, operand 2']
    #allocation9 [shape = 'u8[12288]{0}', space=vmem, size = 0x3000, scoped, tag = 'input window, operand 3']
    #allocation10 [shape = 'u8[524288]{0}', space=vmem, size = 0x80000, scoped, tag = 'input window, operand 4']
    #allocation11 [shape = 'u8[2048]{0}', space=vmem, size = 0x800, scoped, tag = 'input window, operand 5']
    #allocation12 [shape = 'u8[262144]{0}', space=vmem, size = 0x40000, scoped, tag = 'input window, operand 6']
    #allocation13 [shape = 'u8[2048]{0}', space=vmem, size = 0x800, scoped, tag = 'input window, operand 7']
    #allocation14 [shape = 'u8[262144]{0}', space=vmem, size = 0x40000, scoped, tag = 'input window, operand 8']
    #allocation15 [shape = 'u8[2048]{0}', space=vmem, size = 0x800, scoped, tag = 'input window, operand 9']
    #allocation16 [shape = 'u8[2048]{0}', space=vmem, size = 0x800, scoped, tag = 'input window, operand 10']
    #allocation17 [shape = 'u8[2048]{0}', space=vmem, size = 0x800, scoped, tag = 'input window, operand 11']
    #allocation18 [shape = 'u8[2048]{0}', space=vmem, size = 0x800, scoped, tag = 'input window, operand 12']
    #allocation19 [shape = 'u8[2048]{0}', space=vmem, size = 0x800, scoped, tag = 'input window, operand 13']
    #allocation20 [shape = 'u8[65536]{0}', space=vmem, size = 0x10000, scoped, tag = 'input window, operand 14, single buffered']
    #allocation21 [shape = 'u8[512]{0}', space=vmem, size = 0x400, scoped, tag = 'input window, operand 15, single buffered']
    #allocation22 [shape = 's32[1]{0}', space=sflag, size = 0x4, scoped, tag = 'scoped memory for tpu_custom_call.1']
    #allocation23 [shape = 'u8[8192]{0}', space=vmem, size = 0x2000, scoped, tag = 'output window, operand 0, single buffered']
    %21 = vsyncpa [#allocation4], 0
    %22 = vsyncpa [#allocation7], 0
    %23 = vsyncpa [#allocation22], 0
    %24 = vsyncpa [#allocation5], 0
    loop: start=0, step=1, limit=4
    $region2: #{tpu_custom_call.1} parent=1 // loop_pre_header
      _
    $region3: #{tpu_custom_call.1} parent=1 // loop_header
      %s26 = sphi 0, %s30
      %p27 = scmp.ge.s32.totalorder %s26, 4
      %s34 = sphi 0, %s34
      %s36 = sphi 0, %s34
      %s37 = sphi 0, %s36
      %s51 = sphi 0, %s37
      %s55 = sphi 0, %s55
      %s57 = sphi 0, %s55
      %s58 = sphi 0, %s57
      %s72 = sphi 0, %s58
      %s78 = sphi 0, %s80
      %s81 = sphi 0, %s78
      %s82 = sphi 0, %s81
      %s98 = sphi 0, %s82
      %s104 = sphi 0, %s106
      %s107 = sphi 0, %s104
      %s108 = sphi 0, %s107
      %s124 = sphi 0, %s108
      %s130 = sphi 0, %s132
      %s133 = sphi 0, %s130
      %s134 = sphi 0, %s133
      %s150 = sphi 0, %s134
      %s156 = sphi 0, %s158
      %s159 = sphi 0, %s156
      %s160 = sphi 0, %s159
      %s176 = sphi 0, %s160
      %s182 = sphi 0, %s184
      %s185 = sphi 0, %s182
      %s186 = sphi 0, %s185
      %s202 = sphi 0, %s186
      %s208 = sphi 0, %s210
      %s211 = sphi 0, %s208
      %s212 = sphi 0, %s211
      %s228 = sphi 0, %s212
      %s234 = sphi 0, %s236
      %s237 = sphi 0, %s234
      %s238 = sphi 0, %s237
      %s254 = sphi 0, %s238
      %s260 = sphi 0, %s262
      %s263 = sphi 0, %s260
      %s264 = sphi 0, %s263
      %s280 = sphi 0, %s264
      %s286 = sphi 0, %s288
      %s289 = sphi 0, %s286
      %s290 = sphi 0, %s289
      %s306 = sphi 0, %s290
      %s312 = sphi 0, %s314
      %s315 = sphi 0, %s312
      %s316 = sphi 0, %s315
      %s332 = sphi 0, %s316
      %s338 = sphi 0, %s340
      %s341 = sphi 0, %s338
      %s342 = sphi 0, %s341
      %s358 = sphi 0, %s342
      %s364 = sphi 0, %s366
      %s367 = sphi 0, %s364
      %s368 = sphi 0, %s367
      %s384 = sphi 0, %s368
      %s388 = sphi 0, %s388
      %s390 = sphi 0, %s388
      %s391 = sphi 0, %s390
      %s405 = sphi 0, %s391
      %s409 = sphi 0, %s409
      %s411 = sphi 0, %s409
      %s412 = sphi 0, %s411
      %s426 = sphi 0, %s412
      %s430 = sphi 0, %s430
      %s432 = sphi 0, %s430
      %s433 = sphi 0, %s432
      %s447 = sphi 0, %s433
    $region4: #{tpu_custom_call.1} parent=1 // loop_header_branch
      %29 = sbr.rel (%p27) target = $region8
    $region5: #{tpu_custom_call.1} parent=1 // loop_body
      %s31 = ssub.s32 %s26, 1
      %s32 = ssub.s32 %s26, 2
      %s33 = sadd.s32 %s26, 1
      %s35 = sadd.s32 %s34, 1
      %p38 = scmp.eq.s32.totalorder %s26, 1
      %p39 = scmp.ne.s32.totalorder %s34, %s36
      %p40 = scmp.eq.s32.totalorder %s26, 0
      %p41 = por %p39, %p40
      %p42 = scmp.ne.s32.totalorder %s34, %s36
      %p43 = scmp.eq.s32.totalorder %s31, 1
      %p44 = por %p42, %p43
      %p45 = scmp.ne.s32.totalorder %s36, %s37
      %p46 = scmp.eq.s32.totalorder %s31, 0
      %p47 = por %p45, %p46
      %p48 = scmp.ne.s32.totalorder %s36, %s37
      %p49 = scmp.eq.s32.totalorder %s32, 1
      %p50 = por %p48, %p49
      %p52 = scmp.ne.s32.totalorder %s37, %s51
      %p53 = scmp.eq.s32.totalorder %s32, 0
      %p54 = por %p52, %p53
      %s56 = sadd.s32 %s55, 1
      %p59 = scmp.eq.s32.totalorder %s26, 1
      %p60 = scmp.ne.s32.totalorder %s55, %s57
      %p61 = scmp.eq.s32.totalorder %s26, 0
      %p62 = por %p60, %p61
      %p63 = scmp.ne.s32.totalorder %s55, %s57
      %p64 = scmp.eq.s32.totalorder %s31, 1
      %p65 = por %p63, %p64
      %p66 = scmp.ne.s32.totalorder %s57, %s58
      %p67 = scmp.eq.s32.totalorder %s31, 0
      %p68 = por %p66, %p67
      %p69 = scmp.ne.s32.totalorder %s57, %s58
      %p70 = scmp.eq.s32.totalorder %s32, 1
      %p71 = por %p69, %p70
      %p73 = scmp.ne.s32.totalorder %s58, %s72
      %p74 = scmp.eq.s32.totalorder %s32, 0
      %p75 = por %p73, %p74
      %s76 = ssub.s32 %s26, %s33
      %p77 = scmp.eq.s32.totalorder %s76, 0
      %s79 = sadd.s32 %s78, 1
      %s80 = scalar_select %p77, %s78, %s79
      %p83 = pneg %p77
      %p84 = scmp.eq.s32.totalorder %s26, 1
      %p85 = por %p83, %p84
      %p86 = scmp.ne.s32.totalorder %s78, %s81
      %p87 = scmp.eq.s32.totalorder %s26, 0
      %p88 = por %p86, %p87
      %p89 = scmp.ne.s32.totalorder %s78, %s81
      %p90 = scmp.eq.s32.totalorder %s31, 1
      %p91 = por %p89, %p90
      %p92 = scmp.ne.s32.totalorder %s81, %s82
      %p93 = scmp.eq.s32.totalorder %s31, 0
      %p94 = por %p92, %p93
      %p95 = scmp.ne.s32.totalorder %s81, %s82
      %p96 = scmp.eq.s32.totalorder %s32, 1
      %p97 = por %p95, %p96
      %p99 = scmp.ne.s32.totalorder %s82, %s98
      %p100 = scmp.eq.s32.totalorder %s32, 0
      %p101 = por %p99, %p100
      %s102 = ssub.s32 %s26, %s33
      %p103 = scmp.eq.s32.totalorder %s102, 0
      %s105 = sadd.s32 %s104, 1
      %s106 = scalar_select %p103, %s104, %s105
      %p109 = pneg %p103
      %p110 = scmp.eq.s32.totalorder %s26, 1
      %p111 = por %p109, %p110
      %p112 = scmp.ne.s32.totalorder %s104, %s107
      %p113 = scmp.eq.s32.totalorder %s26, 0
      %p114 = por %p112, %p113
      %p115 = scmp.ne.s32.totalorder %s104, %s107
      %p116 = scmp.eq.s32.totalorder %s31, 1
      %p117 = por %p115, %p116
      %p118 = scmp.ne.s32.totalorder %s107, %s108
      %p119 = scmp.eq.s32.totalorder %s31, 0
      %p120 = por %p118, %p119
      %p121 = scmp.ne.s32.totalorder %s107, %s108
      %p122 = scmp.eq.s32.totalorder %s32, 1
      %p123 = por %p121, %p122
      %p125 = scmp.ne.s32.totalorder %s108, %s124
      %p126 = scmp.eq.s32.totalorder %s32, 0
      %p127 = por %p125, %p126
      %s128 = ssub.s32 %s26, %s33
      %p129 = scmp.eq.s32.totalorder %s128, 0
      %s131 = sadd.s32 %s130, 1
      %s132 = scalar_select %p129, %s130, %s131
      %p135 = pneg %p129
      %p136 = scmp.eq.s32.totalorder %s26, 1
      %p137 = por %p135, %p136
      %p138 = scmp.ne.s32.totalorder %s130, %s133
      %p139 = scmp.eq.s32.totalorder %s26, 0
      %p140 = por %p138, %p139
      %p141 = scmp.ne.s32.totalorder %s130, %s133
      %p142 = scmp.eq.s32.totalorder %s31, 1
      %p143 = por %p141, %p142
      %p144 = scmp.ne.s32.totalorder %s133, %s134
      %p145 = scmp.eq.s32.totalorder %s31, 0
      %p146 = por %p144, %p145
      %p147 = scmp.ne.s32.totalorder %s133, %s134
      %p148 = scmp.eq.s32.totalorder %s32, 1
      %p149 = por %p147, %p148
      %p151 = scmp.ne.s32.totalorder %s134, %s150
      %p152 = scmp.eq.s32.totalorder %s32, 0
      %p153 = por %p151, %p152
      %s154 = ssub.s32 %s26, %s33
      %p155 = scmp.eq.s32.totalorder %s154, 0
      %s157 = sadd.s32 %s156, 1
      %s158 = scalar_select %p155, %s156, %s157
      %p161 = pneg %p155
      %p162 = scmp.eq.s32.totalorder %s26, 1
      %p163 = por %p161, %p162
      %p164 = scmp.ne.s32.totalorder %s156, %s159
      %p165 = scmp.eq.s32.totalorder %s26, 0
      %p166 = por %p164, %p165
      %p167 = scmp.ne.s32.totalorder %s156, %s159
      %p168 = scmp.eq.s32.totalorder %s31, 1
      %p169 = por %p167, %p168
      %p170 = scmp.ne.s32.totalorder %s159, %s160
      %p171 = scmp.eq.s32.totalorder %s31, 0
      %p172 = por %p170, %p171
      %p173 = scmp.ne.s32.totalorder %s159, %s160
      %p174 = scmp.eq.s32.totalorder %s32, 1
      %p175 = por %p173, %p174
      %p177 = scmp.ne.s32.totalorder %s160, %s176
      %p178 = scmp.eq.s32.totalorder %s32, 0
      %p179 = por %p177, %p178
      %s180 = ssub.s32 %s26, %s33
      %p181 = scmp.eq.s32.totalorder %s180, 0
      %s183 = sadd.s32 %s182, 1
      %s184 = scalar_select %p181, %s182, %s183
      %p187 = pneg %p181
      %p188 = scmp.eq.s32.totalorder %s26, 1
      %p189 = por %p187, %p188
      %p190 = scmp.ne.s32.totalorder %s182, %s185
      %p191 = scmp.eq.s32.totalorder %s26, 0
      %p192 = por %p190, %p191
      %p193 = scmp.ne.s32.totalorder %s182, %s185
      %p194 = scmp.eq.s32.totalorder %s31, 1
      %p195 = por %p193, %p194
      %p196 = scmp.ne.s32.totalorder %s185, %s186
      %p197 = scmp.eq.s32.totalorder %s31, 0
      %p198 = por %p196, %p197
      %p199 = scmp.ne.s32.totalorder %s185, %s186
      %p200 = scmp.eq.s32.totalorder %s32, 1
      %p201 = por %p199, %p200
      %p203 = scmp.ne.s32.totalorder %s186, %s202
      %p204 = scmp.eq.s32.totalorder %s32, 0
      %p205 = por %p203, %p204
      %s206 = ssub.s32 %s26, %s33
      %p207 = scmp.eq.s32.totalorder %s206, 0
      %s209 = sadd.s32 %s208, 1
      %s210 = scalar_select %p207, %s208, %s209
      %p213 = pneg %p207
      %p214 = scmp.eq.s32.totalorder %s26, 1
      %p215 = por %p213, %p214
      %p216 = scmp.ne.s32.totalorder %s208, %s211
      %p217 = scmp.eq.s32.totalorder %s26, 0
      %p218 = por %p216, %p217
      %p219 = scmp.ne.s32.totalorder %s208, %s211
      %p220 = scmp.eq.s32.totalorder %s31, 1
      %p221 = por %p219, %p220
      %p222 = scmp.ne.s32.totalorder %s211, %s212
      %p223 = scmp.eq.s32.totalorder %s31, 0
      %p224 = por %p222, %p223
      %p225 = scmp.ne.s32.totalorder %s211, %s212
      %p226 = scmp.eq.s32.totalorder %s32, 1
      %p227 = por %p225, %p226
      %p229 = scmp.ne.s32.totalorder %s212, %s228
      %p230 = scmp.eq.s32.totalorder %s32, 0
      %p231 = por %p229, %p230
      %s232 = ssub.s32 %s26, %s33
      %p233 = scmp.eq.s32.totalorder %s232, 0
      %s235 = sadd.s32 %s234, 1
      %s236 = scalar_select %p233, %s234, %s235
      %p239 = pneg %p233
      %p240 = scmp.eq.s32.totalorder %s26, 1
      %p241 = por %p239, %p240
      %p242 = scmp.ne.s32.totalorder %s234, %s237
      %p243 = scmp.eq.s32.totalorder %s26, 0
      %p244 = por %p242, %p243
      %p245 = scmp.ne.s32.totalorder %s234, %s237
      %p246 = scmp.eq.s32.totalorder %s31, 1
      %p247 = por %p245, %p246
      %p248 = scmp.ne.s32.totalorder %s237, %s238
      %p249 = scmp.eq.s32.totalorder %s31, 0
      %p250 = por %p248, %p249
      %p251 = scmp.ne.s32.totalorder %s237, %s238
      %p252 = scmp.eq.s32.totalorder %s32, 1
      %p253 = por %p251, %p252
      %p255 = scmp.ne.s32.totalorder %s238, %s254
      %p256 = scmp.eq.s32.totalorder %s32, 0
      %p257 = por %p255, %p256
      %s258 = ssub.s32 %s26, %s33
      %p259 = scmp.eq.s32.totalorder %s258, 0
      %s261 = sadd.s32 %s260, 1
      %s262 = scalar_select %p259, %s260, %s261
      %p265 = pneg %p259
      %p266 = scmp.eq.s32.totalorder %s26, 1
      %p267 = por %p265, %p266
      %p268 = scmp.ne.s32.totalorder %s260, %s263
      %p269 = scmp.eq.s32.totalorder %s26, 0
      %p270 = por %p268, %p269
      %p271 = scmp.ne.s32.totalorder %s260, %s263
      %p272 = scmp.eq.s32.totalorder %s31, 1
      %p273 = por %p271, %p272
      %p274 = scmp.ne.s32.totalorder %s263, %s264
      %p275 = scmp.eq.s32.totalorder %s31, 0
      %p276 = por %p274, %p275
      %p277 = scmp.ne.s32.totalorder %s263, %s264
      %p278 = scmp.eq.s32.totalorder %s32, 1
      %p279 = por %p277, %p278
      %p281 = scmp.ne.s32.totalorder %s264, %s280
      %p282 = scmp.eq.s32.totalorder %s32, 0
      %p283 = por %p281, %p282
      %s284 = ssub.s32 %s26, %s33
      %p285 = scmp.eq.s32.totalorder %s284, 0
      %s287 = sadd.s32 %s286, 1
      %s288 = scalar_select %p285, %s286, %s287
      %p291 = pneg %p285
      %p292 = scmp.eq.s32.totalorder %s26, 1
      %p293 = por %p291, %p292
      %p294 = scmp.ne.s32.totalorder %s286, %s289
      %p295 = scmp.eq.s32.totalorder %s26, 0
      %p296 = por %p294, %p295
      %p297 = scmp.ne.s32.totalorder %s286, %s289
      %p298 = scmp.eq.s32.totalorder %s31, 1
      %p299 = por %p297, %p298
      %p300 = scmp.ne.s32.totalorder %s289, %s290
      %p301 = scmp.eq.s32.totalorder %s31, 0
      %p302 = por %p300, %p301
      %p303 = scmp.ne.s32.totalorder %s289, %s290
      %p304 = scmp.eq.s32.totalorder %s32, 1
      %p305 = por %p303, %p304
      %p307 = scmp.ne.s32.totalorder %s290, %s306
      %p308 = scmp.eq.s32.totalorder %s32, 0
      %p309 = por %p307, %p308
      %s310 = ssub.s32 %s26, %s33
      %p311 = scmp.eq.s32.totalorder %s310, 0
      %s313 = sadd.s32 %s312, 1
      %s314 = scalar_select %p311, %s312, %s313
      %p317 = pneg %p311
      %p318 = scmp.eq.s32.totalorder %s26, 1
      %p319 = por %p317, %p318
      %p320 = scmp.ne.s32.totalorder %s312, %s315
      %p321 = scmp.eq.s32.totalorder %s26, 0
      %p322 = por %p320, %p321
      %p323 = scmp.ne.s32.totalorder %s312, %s315
      %p324 = scmp.eq.s32.totalorder %s31, 1
      %p325 = por %p323, %p324
      %p326 = scmp.ne.s32.totalorder %s315, %s316
      %p327 = scmp.eq.s32.totalorder %s31, 0
      %p328 = por %p326, %p327
      %p329 = scmp.ne.s32.totalorder %s315, %s316
      %p330 = scmp.eq.s32.totalorder %s32, 1
      %p331 = por %p329, %p330
      %p333 = scmp.ne.s32.totalorder %s316, %s332
      %p334 = scmp.eq.s32.totalorder %s32, 0
      %p335 = por %p333, %p334
      %s336 = ssub.s32 %s26, %s33
      %p337 = scmp.eq.s32.totalorder %s336, 0
      %s339 = sadd.s32 %s338, 1
      %s340 = scalar_select %p337, %s338, %s339
      %p343 = pneg %p337
      %p344 = scmp.eq.s32.totalorder %s26, 1
      %p345 = por %p343, %p344
      %p346 = scmp.ne.s32.totalorder %s338, %s341
      %p347 = scmp.eq.s32.totalorder %s26, 0
      %p348 = por %p346, %p347
      %p349 = scmp.ne.s32.totalorder %s338, %s341
      %p350 = scmp.eq.s32.totalorder %s31, 1
      %p351 = por %p349, %p350
      %p352 = scmp.ne.s32.totalorder %s341, %s342
      %p353 = scmp.eq.s32.totalorder %s31, 0
      %p354 = por %p352, %p353
      %p355 = scmp.ne.s32.totalorder %s341, %s342
      %p356 = scmp.eq.s32.totalorder %s32, 1
      %p357 = por %p355, %p356
      %p359 = scmp.ne.s32.totalorder %s342, %s358
      %p360 = scmp.eq.s32.totalorder %s32, 0
      %p361 = por %p359, %p360
      %s362 = ssub.s32 %s26, %s33
      %p363 = scmp.eq.s32.totalorder %s362, 0
      %s365 = sadd.s32 %s364, 1
      %s366 = scalar_select %p363, %s364, %s365
      %p369 = pneg %p363
      %p370 = scmp.eq.s32.totalorder %s26, 1
      %p371 = por %p369, %p370
      %p372 = scmp.ne.s32.totalorder %s364, %s367
      %p373 = scmp.eq.s32.totalorder %s26, 0
      %p374 = por %p372, %p373
      %p375 = scmp.ne.s32.totalorder %s364, %s367
      %p376 = scmp.eq.s32.totalorder %s31, 1
      %p377 = por %p375, %p376
      %p378 = scmp.ne.s32.totalorder %s367, %s368
      %p379 = scmp.eq.s32.totalorder %s31, 0
      %p380 = por %p378, %p379
      %p381 = scmp.ne.s32.totalorder %s367, %s368
      %p382 = scmp.eq.s32.totalorder %s32, 1
      %p383 = por %p381, %p382
      %p385 = scmp.ne.s32.totalorder %s368, %s384
      %p386 = scmp.eq.s32.totalorder %s32, 0
      %p387 = por %p385, %p386
      %s389 = sadd.s32 %s388, 1
      %p392 = scmp.eq.s32.totalorder %s26, 1
      %p393 = scmp.ne.s32.totalorder %s388, %s390
      %p394 = scmp.eq.s32.totalorder %s26, 0
      %p395 = por %p393, %p394
      %p396 = scmp.ne.s32.totalorder %s388, %s390
      %p397 = scmp.eq.s32.totalorder %s31, 1
      %p398 = por %p396, %p397
      %p399 = scmp.ne.s32.totalorder %s390, %s391
      %p400 = scmp.eq.s32.totalorder %s31, 0
      %p401 = por %p399, %p400
      %p402 = scmp.ne.s32.totalorder %s390, %s391
      %p403 = scmp.eq.s32.totalorder %s32, 1
      %p404 = por %p402, %p403
      %p406 = scmp.ne.s32.totalorder %s391, %s405
      %p407 = scmp.eq.s32.totalorder %s32, 0
      %p408 = por %p406, %p407
      %s410 = sadd.s32 %s409, 1
      %p413 = scmp.eq.s32.totalorder %s26, 1
      %p414 = scmp.ne.s32.totalorder %s409, %s411
      %p415 = scmp.eq.s32.totalorder %s26, 0
      %p416 = por %p414, %p415
      %p417 = scmp.ne.s32.totalorder %s409, %s411
      %p418 = scmp.eq.s32.totalorder %s31, 1
      %p419 = por %p417, %p418
      %p420 = scmp.ne.s32.totalorder %s411, %s412
      %p421 = scmp.eq.s32.totalorder %s31, 0
      %p422 = por %p420, %p421
      %p423 = scmp.ne.s32.totalorder %s411, %s412
      %p424 = scmp.eq.s32.totalorder %s32, 1
      %p425 = por %p423, %p424
      %p427 = scmp.ne.s32.totalorder %s412, %s426
      %p428 = scmp.eq.s32.totalorder %s32, 0
      %p429 = por %p427, %p428
      %s431 = sadd.s32 %s430, 1
      %p434 = scmp.eq.s32.totalorder %s26, 1
      %p435 = scmp.ne.s32.totalorder %s430, %s432
      %p436 = scmp.eq.s32.totalorder %s26, 0
      %p437 = por %p435, %p436
      %p438 = scmp.ne.s32.totalorder %s430, %s432
      %p439 = scmp.eq.s32.totalorder %s31, 1
      %p440 = por %p438, %p439
      %p441 = scmp.ne.s32.totalorder %s432, %s433
      %p442 = scmp.eq.s32.totalorder %s31, 0
      %p443 = por %p441, %p442
      %p444 = scmp.ne.s32.totalorder %s432, %s433
      %p445 = scmp.eq.s32.totalorder %s32, 1
      %p446 = por %p444, %p445
      %p448 = scmp.ne.s32.totalorder %s433, %s447
      %p449 = scmp.eq.s32.totalorder %s32, 0
      %p450 = por %p448, %p449
      %p451 = scmp.le.s32.totalorder 1, %s26
      %p452 = scmp.lt.s32.totalorder %s26, 3
      %p453 = pnand %p451, %p452
      %p454 = pneg %p453
      // Predicated region
      $region9: #{tpu_custom_call.1} parent=5 // pred_check
        _
      $region10: #{tpu_custom_call.1} parent=5 // pred_check_branch
        %456 = sbr.rel (%p453) target = $region12
      $region11: #{tpu_custom_call.1} parent=5 // pred_region
        %s457 = ssub.s32 %s26, 1
        // Predicated region
        $region13: #{tpu_custom_call.1} parent=11 // pred_check
          %p458 = pneg %p47
        $region14: #{tpu_custom_call.1} parent=11 // pred_check_branch
          %460 = sbr.rel (%p458) target = $region16
        $region15: #{tpu_custom_call.1} parent=11 // pred_region
          %s462 = ssub.s32 512, 512
          %463 = vsyncadd [#allocation4], %s462
          %s464 = sshll.u32 [#allocation3], 4
          %s465 = int_to_ptr.vmem [resolvable:$true] %s464
          %470 = dma.hbm_to_vmem [thread:$0]  %s0, 512, %s465, [#allocation4], 256, 256, 16
        $region16: #{tpu_custom_call.1} parent=11 // pred_fallthru
          _
        // Predicated region
        $region17: #{tpu_custom_call.1} parent=11 // pred_check
          %p471 = pneg %p68
        $region18: #{tpu_custom_call.1} parent=11 // pred_check_branch
          %473 = sbr.rel (%p471) target = $region20
        $region19: #{tpu_custom_call.1} parent=11 // pred_region
          %s475 = ssub.s32 512, 512
          %476 = vsyncadd [#allocation7], %s475
          %s477 = sshll.u32 [#allocation6], 4
          %s478 = int_to_ptr.vmem [resolvable:$true] %s477
          %483 = dma.hbm_to_vmem [thread:$0]  %s1, 512, %s478, [#allocation7], 128, 128, 8
        $region20: #{tpu_custom_call.1} parent=11 // pred_fallthru
          _
        // Predicated region
        $region21: #{tpu_custom_call.1} parent=11 // pred_check
          %p484 = pneg %p401
        $region22: #{tpu_custom_call.1} parent=11 // pred_check_branch
          %486 = sbr.rel (%p484) target = $region24
        $region23: #{tpu_custom_call.1} parent=11 // pred_region
          %s488 = ssub.s32 2048, 2048
          %489 = vsyncadd [#allocation7], %s488
          %s490 = sshll.u32 [#allocation20], 4
          %s491 = int_to_ptr.vmem [resolvable:$true] %s490
          %496 = dma.hbm_to_vmem [thread:$0]  %s14, 2048, %s491, [#allocation7], 64, 64, 4
        $region24: #{tpu_custom_call.1} parent=11 // pred_fallthru
          _
        // Predicated region
        $region25: #{tpu_custom_call.1} parent=11 // pred_check
          %p497 = pneg %p422
        $region26: #{tpu_custom_call.1} parent=11 // pred_check_branch
          %499 = sbr.rel (%p497) target = $region28
        $region27: #{tpu_custom_call.1} parent=11 // pred_region
          %s501 = ssub.s32 16, 16
          %502 = vsyncadd [#allocation22], %s501
          %s504 = sshll.u32 [#allocation21], 4
          %s505 = int_to_ptr.vmem [resolvable:$true] %s504
          %507 = dma.hbm_to_vmem [thread:$0]  %s15, 16, %s505, [#allocation22]
        $region28: #{tpu_custom_call.1} parent=11 // pred_fallthru
          _
      $region12: #{tpu_custom_call.1} parent=5 // pred_fallthru
        _
      %p508 = scmp.lt.s32.totalorder %s26, 2
      // Predicated region
      $region29: #{tpu_custom_call.1} parent=5 // pred_check
        %p509 = pneg %p508
      $region30: #{tpu_custom_call.1} parent=5 // pred_check_branch
        %511 = sbr.rel (%p509) target = $region32
      $region31: #{tpu_custom_call.1} parent=5 // pred_region
        // Predicated region
        $region33: #{tpu_custom_call.1} parent=31 // pred_check
          %p512 = pneg %p88
        $region34: #{tpu_custom_call.1} parent=31 // pred_check_branch
          %514 = sbr.rel (%p512) target = $region36
        $region35: #{tpu_custom_call.1} parent=31 // pred_region
          %s515 = sand.u32 %s26, 1
          %s516 = scalar_lea.sflag [#allocation4], %s515
          %s517 = sand.u32 %s78, 1
          %s518 = smul.addr %s517, 1536
          %s519 = scalar_lea.vmem [#allocation8], %s518
          %s521 = ssub.s32 24576, 24576
          %522 = vsyncadd %s516, %s521
          %s523 = smul.addr %s26, 384
          %s524 = smul.addr %s523, 64
          %s525 = scalar_lea.hbm %s2, %s524
          %s526 = sshll.u32 %s519, 4
          %s527 = int_to_ptr.vmem [resolvable:$true] %s526
          %532 = dma.hbm_to_vmem [thread:$0]  %s525, 24576, %s527, %s516, 768, 768, 48
        $region36: #{tpu_custom_call.1} parent=31 // pred_fallthru
          _
        // Predicated region
        $region37: #{tpu_custom_call.1} parent=31 // pred_check
          %p533 = pneg %p114
        $region38: #{tpu_custom_call.1} parent=31 // pred_check_branch
          %535 = sbr.rel (%p533) target = $region40
        $region39: #{tpu_custom_call.1} parent=31 // pred_region
          %s536 = sand.u32 %s26, 1
          %s537 = scalar_lea.sflag [#allocation4], %s536
          %s538 = sand.u32 %s104, 1
          %s539 = smul.addr %s538, 12
          %s540 = scalar_lea.vmem [#allocation9], %s539
          %s542 = ssub.s32 192, 192
          %543 = vsyncadd %s537, %s542
          %s544 = smul.addr %s26, 12
          %s545 = smul.addr %s544, 16
          %s546 = scalar_lea.hbm %s3, %s545
          %s548 = sshll.u32 %s540, 4
          %s549 = int_to_ptr.vmem [resolvable:$true] %s548
          %551 = dma.hbm_to_vmem [thread:$0]  %s546, 192, %s549, %s537
        $region40: #{tpu_custom_call.1} parent=31 // pred_fallthru
          _
        // Predicated region
        $region41: #{tpu_custom_call.1} parent=31 // pred_check
          %p552 = pneg %p140
        $region42: #{tpu_custom_call.1} parent=31 // pred_check_branch
          %554 = sbr.rel (%p552) target = $region44
        $region43: #{tpu_custom_call.1} parent=31 // pred_region
          %s555 = sand.u32 %s26, 1
          %s556 = scalar_lea.sflag [#allocation4], %s555
          %s557 = sand.u32 %s130, 1
          %s558 = smul.addr %s557, 512
          %s559 = scalar_lea.vmem [#allocation10], %s558
          %s561 = ssub.s32 8192, 8192
          %562 = vsyncadd %s556, %s561
          %s563 = smul.addr %s26, 128
          %s564 = smul.addr %s563, 64
          %s565 = scalar_lea.hbm %s4, %s564
          %s566 = sshll.u32 %s559, 4
          %s567 = int_to_ptr.vmem [resolvable:$true] %s566
          %572 = dma.hbm_to_vmem [thread:$0]  %s565, 8192, %s567, %s556, 128, 128, 8
        $region44: #{tpu_custom_call.1} parent=31 // pred_fallthru
          _
        // Predicated region
        $region45: #{tpu_custom_call.1} parent=31 // pred_check
          %p573 = pneg %p166
        $region46: #{tpu_custom_call.1} parent=31 // pred_check_branch
          %575 = sbr.rel (%p573) target = $region48
        $region47: #{tpu_custom_call.1} parent=31 // pred_region
          %s576 = sand.u32 %s26, 1
          %s577 = scalar_lea.sflag [#allocation4], %s576
          %s578 = sand.u32 %s156, 1
          %s579 = smul.addr %s578, 2
          %s580 = scalar_lea.vmem [#allocation11], %s579
          %s582 = ssub.s32 32, 32
          %583 = vsyncadd %s577, %s582
          %s584 = smul.addr %s26, 2
          %s585 = smul.addr %s584, 16
          %s586 = scalar_lea.hbm %s5, %s585
          %s588 = sshll.u32 %s580, 4
          %s589 = int_to_ptr.vmem [resolvable:$true] %s588
          %591 = dma.hbm_to_vmem [thread:$0]  %s586, 32, %s589, %s577
        $region48: #{tpu_custom_call.1} parent=31 // pred_fallthru
          _
        // Predicated region
        $region49: #{tpu_custom_call.1} parent=31 // pred_check
          %p592 = pneg %p192
        $region50: #{tpu_custom_call.1} parent=31 // pred_check_branch
          %594 = sbr.rel (%p592) target = $region52
        $region51: #{tpu_custom_call.1} parent=31 // pred_region
          %s595 = sand.u32 %s26, 1
          %s596 = scalar_lea.sflag [#allocation4], %s595
          %s597 = sand.u32 %s182, 1
          %s598 = smul.addr %s597, 256
          %s599 = scalar_lea.vmem [#allocation12], %s598
          %s601 = ssub.s32 4096, 4096
          %602 = vsyncadd %s596, %s601
          %s603 = smul.addr %s26, 64
          %s604 = smul.addr %s603, 64
          %s605 = scalar_lea.hbm %s6, %s604
          %s606 = sshll.u32 %s599, 4
          %s607 = int_to_ptr.vmem [resolvable:$true] %s606
          %612 = dma.hbm_to_vmem [thread:$0]  %s605, 4096, %s607, %s596, 128, 128, 8
        $region52: #{tpu_custom_call.1} parent=31 // pred_fallthru
          _
        // Predicated region
        $region53: #{tpu_custom_call.1} parent=31 // pred_check
          %p613 = pneg %p218
        $region54: #{tpu_custom_call.1} parent=31 // pred_check_branch
          %615 = sbr.rel (%p613) target = $region56
        $region55: #{tpu_custom_call.1} parent=31 // pred_region
          %s616 = sand.u32 %s26, 1
          %s617 = scalar_lea.sflag [#allocation4], %s616
          %s618 = sand.u32 %s208, 1
          %s619 = smul.addr %s618, 2
          %s620 = scalar_lea.vmem [#allocation13], %s619
          %s622 = ssub.s32 32, 32
          %623 = vsyncadd %s617, %s622
          %s624 = smul.addr %s26, 2
          %s625 = smul.addr %s624, 16
          %s626 = scalar_lea.hbm %s7, %s625
          %s628 = sshll.u32 %s620, 4
          %s629 = int_to_ptr.vmem [resolvable:$true] %s628
          %631 = dma.hbm_to_vmem [thread:$0]  %s626, 32, %s629, %s617
        $region56: #{tpu_custom_call.1} parent=31 // pred_fallthru
          _
        // Predicated region
        $region57: #{tpu_custom_call.1} parent=31 // pred_check
          %p632 = pneg %p244
        $region58: #{tpu_custom_call.1} parent=31 // pred_check_branch
          %634 = sbr.rel (%p632) target = $region60
        $region59: #{tpu_custom_call.1} parent=31 // pred_region
          %s635 = sand.u32 %s26, 1
          %s636 = scalar_lea.sflag [#allocation4], %s635
          %s637 = sand.u32 %s234, 1
          %s638 = smul.addr %s637, 256
          %s639 = scalar_lea.vmem [#allocation14], %s638
          %s641 = ssub.s32 4096, 4096
          %642 = vsyncadd %s636, %s641
          %s643 = smul.addr %s26, 64
          %s644 = smul.addr %s643, 64
          %s645 = scalar_lea.hbm %s8, %s644
          %s646 = sshll.u32 %s639, 4
          %s647 = int_to_ptr.vmem [resolvable:$true] %s646
          %652 = dma.hbm_to_vmem [thread:$0]  %s645, 4096, %s647, %s636, 128, 128, 8
        $region60: #{tpu_custom_call.1} parent=31 // pred_fallthru
          _
        // Predicated region
        $region61: #{tpu_custom_call.1} parent=31 // pred_check
          %p653 = pneg %p270
        $region62: #{tpu_custom_call.1} parent=31 // pred_check_branch
          %655 = sbr.rel (%p653) target = $region64
        $region63: #{tpu_custom_call.1} parent=31 // pred_region
          %s656 = sand.u32 %s26, 1
          %s657 = scalar_lea.sflag [#allocation4], %s656
          %s658 = sand.u32 %s260, 1
          %s659 = smul.addr %s658, 2
          %s660 = scalar_lea.vmem [#allocation15], %s659
          %s662 = ssub.s32 32, 32
          %663 = vsyncadd %s657, %s662
          %s664 = smul.addr %s26, 2
          %s665 = smul.addr %s664, 16
          %s666 = scalar_lea.hbm %s9, %s665
          %s668 = sshll.u32 %s660, 4
          %s669 = int_to_ptr.vmem [resolvable:$true] %s668
          %671 = dma.hbm_to_vmem [thread:$0]  %s666, 32, %s669, %s657
        $region64: #{tpu_custom_call.1} parent=31 // pred_fallthru
          _
        // Predicated region
        $region65: #{tpu_custom_call.1} parent=31 // pred_check
          %p672 = pneg %p296
        $region66: #{tpu_custom_call.1} parent=31 // pred_check_branch
          %674 = sbr.rel (%p672) target = $region68
        $region67: #{tpu_custom_call.1} parent=31 // pred_region
          %s675 = sand.u32 %s26, 1
          %s676 = scalar_lea.sflag [#allocation4], %s675
          %s677 = sand.u32 %s286, 1
          %s678 = smul.addr %s677, 2
          %s679 = scalar_lea.vmem [#allocation16], %s678
          %s681 = ssub.s32 32, 32
          %682 = vsyncadd %s676, %s681
          %s683 = smul.addr %s26, 2
          %s684 = smul.addr %s683, 16
          %s685 = scalar_lea.hbm %s10, %s684
          %s687 = sshll.u32 %s679, 4
          %s688 = int_to_ptr.vmem [resolvable:$true] %s687
          %690 = dma.hbm_to_vmem [thread:$0]  %s685, 32, %s688, %s676
        $region68: #{tpu_custom_call.1} parent=31 // pred_fallthru
          _
        // Predicated region
        $region69: #{tpu_custom_call.1} parent=31 // pred_check
          %p691 = pneg %p322
        $region70: #{tpu_custom_call.1} parent=31 // pred_check_branch
          %693 = sbr.rel (%p691) target = $region72
        $region71: #{tpu_custom_call.1} parent=31 // pred_region
          %s694 = sand.u32 %s26, 1
          %s695 = scalar_lea.sflag [#allocation4], %s694
          %s696 = sand.u32 %s312, 1
          %s697 = smul.addr %s696, 2
          %s698 = scalar_lea.vmem [#allocation17], %s697
          %s700 = ssub.s32 32, 32
          %701 = vsyncadd %s695, %s700
          %s702 = smul.addr %s26, 2
          %s703 = smul.addr %s702, 16
          %s704 = scalar_lea.hbm %s11, %s703
          %s706 = sshll.u32 %s698, 4
          %s707 = int_to_ptr.vmem [resolvable:$true] %s706
          %709 = dma.hbm_to_vmem [thread:$0]  %s704, 32, %s707, %s695
        $region72: #{tpu_custom_call.1} parent=31 // pred_fallthru
          _
        // Predicated region
        $region73: #{tpu_custom_call.1} parent=31 // pred_check
          %p710 = pneg %p348
        $region74: #{tpu_custom_call.1} parent=31 // pred_check_branch
          %712 = sbr.rel (%p710) target = $region76
        $region75: #{tpu_custom_call.1} parent=31 // pred_region
          %s713 = sand.u32 %s26, 1
          %s714 = scalar_lea.sflag [#allocation4], %s713
          %s715 = sand.u32 %s338, 1
          %s716 = smul.addr %s715, 2
          %s717 = scalar_lea.vmem [#allocation18], %s716
          %s719 = ssub.s32 32, 32
          %720 = vsyncadd %s714, %s719
          %s721 = smul.addr %s26, 2
          %s722 = smul.addr %s721, 16
          %s723 = scalar_lea.hbm %s12, %s722
          %s725 = sshll.u32 %s717, 4
          %s726 = int_to_ptr.vmem [resolvable:$true] %s725
          %728 = dma.hbm_to_vmem [thread:$0]  %s723, 32, %s726, %s714
        $region76: #{tpu_custom_call.1} parent=31 // pred_fallthru
          _
        // Predicated region
        $region77: #{tpu_custom_call.1} parent=31 // pred_check
          %p729 = pneg %p374
        $region78: #{tpu_custom_call.1} parent=31 // pred_check_branch
          %731 = sbr.rel (%p729) target = $region80
        $region79: #{tpu_custom_call.1} parent=31 // pred_region
          %s732 = sand.u32 %s26, 1
          %s733 = scalar_lea.sflag [#allocation4], %s732
          %s734 = sand.u32 %s364, 1
          %s735 = smul.addr %s734, 2
          %s736 = scalar_lea.vmem [#allocation19], %s735
          %s738 = ssub.s32 32, 32
          %739 = vsyncadd %s733, %s738
          %s740 = smul.addr %s26, 2
          %s741 = smul.addr %s740, 16
          %s742 = scalar_lea.hbm %s13, %s741
          %s744 = sshll.u32 %s736, 4
          %s745 = int_to_ptr.vmem [resolvable:$true] %s744
          %747 = dma.hbm_to_vmem [thread:$0]  %s742, 32, %s745, %s733
        $region80: #{tpu_custom_call.1} parent=31 // pred_fallthru
          _
      $region32: #{tpu_custom_call.1} parent=5 // pred_fallthru
        _
      %p748 = scmp.le.s32.totalorder 1, %s26
      %p749 = scmp.lt.s32.totalorder %s26, 3
      %p750 = pnand %p748, %p749
      %p751 = pneg %p750
      // Predicated region
      $region81: #{tpu_custom_call.1} parent=5 // pred_check
        _
      $region82: #{tpu_custom_call.1} parent=5 // pred_check_branch
        %753 = sbr.rel (%p750) target = $region84
      $region83: #{tpu_custom_call.1} parent=5 // pred_region
        %s754 = ssub.s32 %s26, 1
        // Predicated region
        $region85: #{tpu_custom_call.1} parent=83 // pred_check
          %p755 = pneg %p47
        $region86: #{tpu_custom_call.1} parent=83 // pred_check_branch
          %757 = sbr.rel (%p755) target = $region88
        $region87: #{tpu_custom_call.1} parent=83 // pred_region
          %758 = dma.done [#allocation4], 512
        $region88: #{tpu_custom_call.1} parent=83 // pred_fallthru
          _
        // Predicated region
        $region89: #{tpu_custom_call.1} parent=83 // pred_check
          %p759 = pneg %p68
        $region90: #{tpu_custom_call.1} parent=83 // pred_check_branch
          %761 = sbr.rel (%p759) target = $region92
        $region91: #{tpu_custom_call.1} parent=83 // pred_region
          %762 = dma.done [#allocation7], 512
        $region92: #{tpu_custom_call.1} parent=83 // pred_fallthru
          _
        %s763 = sand.u32 %s31, 1
        %s764 = scalar_lea.sflag [#allocation4], %s763
        %s765 = sand.u32 %s81, 1
        %s766 = smul.addr %s765, 1536
        %s767 = scalar_lea.vmem [#allocation8], %s766
        // Predicated region
        $region93: #{tpu_custom_call.1} parent=83 // pred_check
          %p768 = pneg %p94
        $region94: #{tpu_custom_call.1} parent=83 // pred_check_branch
          %770 = sbr.rel (%p768) target = $region96
        $region95: #{tpu_custom_call.1} parent=83 // pred_region
          %771 = dma.done %s764, 24576
        $region96: #{tpu_custom_call.1} parent=83 // pred_fallthru
          _
        %s772 = sand.u32 %s31, 1
        %s773 = scalar_lea.sflag [#allocation4], %s772
        %s774 = sand.u32 %s107, 1
        %s775 = smul.addr %s774, 12
        %s776 = scalar_lea.vmem [#allocation9], %s775
        // Predicated region
        $region97: #{tpu_custom_call.1} parent=83 // pred_check
          %p777 = pneg %p120
        $region98: #{tpu_custom_call.1} parent=83 // pred_check_branch
          %779 = sbr.rel (%p777) target = $region100
        $region99: #{tpu_custom_call.1} parent=83 // pred_region
          %780 = dma.done %s773, 192
        $region100: #{tpu_custom_call.1} parent=83 // pred_fallthru
          _
        %s781 = sand.u32 %s31, 1
        %s782 = scalar_lea.sflag [#allocation4], %s781
        %s783 = sand.u32 %s133, 1
        %s784 = smul.addr %s783, 512
        %s785 = scalar_lea.vmem [#allocation10], %s784
        // Predicated region
        $region101: #{tpu_custom_call.1} parent=83 // pred_check
          %p786 = pneg %p146
        $region102: #{tpu_custom_call.1} parent=83 // pred_check_branch
          %788 = sbr.rel (%p786) target = $region104
        $region103: #{tpu_custom_call.1} parent=83 // pred_region
          %789 = dma.done %s782, 8192
        $region104: #{tpu_custom_call.1} parent=83 // pred_fallthru
          _
        %s790 = sand.u32 %s31, 1
        %s791 = scalar_lea.sflag [#allocation4], %s790
        %s792 = sand.u32 %s159, 1
        %s793 = smul.addr %s792, 2
        %s794 = scalar_lea.vmem [#allocation11], %s793
        // Predicated region
        $region105: #{tpu_custom_call.1} parent=83 // pred_check
          %p795 = pneg %p172
        $region106: #{tpu_custom_call.1} parent=83 // pred_check_branch
          %797 = sbr.rel (%p795) target = $region108
        $region107: #{tpu_custom_call.1} parent=83 // pred_region
          %798 = dma.done %s791, 32
        $region108: #{tpu_custom_call.1} parent=83 // pred_fallthru
          _
        %s799 = sand.u32 %s31, 1
        %s800 = scalar_lea.sflag [#allocation4], %s799
        %s801 = sand.u32 %s185, 1
        %s802 = smul.addr %s801, 256
        %s803 = scalar_lea.vmem [#allocation12], %s802
        // Predicated region
        $region109: #{tpu_custom_call.1} parent=83 // pred_check
          %p804 = pneg %p198
        $region110: #{tpu_custom_call.1} parent=83 // pred_check_branch
          %806 = sbr.rel (%p804) target = $region112
        $region111: #{tpu_custom_call.1} parent=83 // pred_region
          %807 = dma.done %s800, 4096
        $region112: #{tpu_custom_call.1} parent=83 // pred_fallthru
          _
        %s808 = sand.u32 %s31, 1
        %s809 = scalar_lea.sflag [#allocation4], %s808
        %s810 = sand.u32 %s211, 1
        %s811 = smul.addr %s810, 2
        %s812 = scalar_lea.vmem [#allocation13], %s811
        // Predicated region
        $region113: #{tpu_custom_call.1} parent=83 // pred_check
          %p813 = pneg %p224
        $region114: #{tpu_custom_call.1} parent=83 // pred_check_branch
          %815 = sbr.rel (%p813) target = $region116
        $region115: #{tpu_custom_call.1} parent=83 // pred_region
          %816 = dma.done %s809, 32
        $region116: #{tpu_custom_call.1} parent=83 // pred_fallthru
          _
        %s817 = sand.u32 %s31, 1
        %s818 = scalar_lea.sflag [#allocation4], %s817
        %s819 = sand.u32 %s237, 1
        %s820 = smul.addr %s819, 256
        %s821 = scalar_lea.vmem [#allocation14], %s820
        // Predicated region
        $region117: #{tpu_custom_call.1} parent=83 // pred_check
          %p822 = pneg %p250
        $region118: #{tpu_custom_call.1} parent=83 // pred_check_branch
          %824 = sbr.rel (%p822) target = $region120
        $region119: #{tpu_custom_call.1} parent=83 // pred_region
          %825 = dma.done %s818, 4096
        $region120: #{tpu_custom_call.1} parent=83 // pred_fallthru
          _
        %s826 = sand.u32 %s31, 1
        %s827 = scalar_lea.sflag [#allocation4], %s826
        %s828 = sand.u32 %s263, 1
        %s829 = smul.addr %s828, 2
        %s830 = scalar_lea.vmem [#allocation15], %s829
        // Predicated region
        $region121: #{tpu_custom_call.1} parent=83 // pred_check
          %p831 = pneg %p276
        $region122: #{tpu_custom_call.1} parent=83 // pred_check_branch
          %833 = sbr.rel (%p831) target = $region124
        $region123: #{tpu_custom_call.1} parent=83 // pred_region
          %834 = dma.done %s827, 32
        $region124: #{tpu_custom_call.1} parent=83 // pred_fallthru
          _
        %s835 = sand.u32 %s31, 1
        %s836 = scalar_lea.sflag [#allocation4], %s835
        %s837 = sand.u32 %s289, 1
        %s838 = smul.addr %s837, 2
        %s839 = scalar_lea.vmem [#allocation16], %s838
        // Predicated region
        $region125: #{tpu_custom_call.1} parent=83 // pred_check
          %p840 = pneg %p302
        $region126: #{tpu_custom_call.1} parent=83 // pred_check_branch
          %842 = sbr.rel (%p840) target = $region128
        $region127: #{tpu_custom_call.1} parent=83 // pred_region
          %843 = dma.done %s836, 32
        $region128: #{tpu_custom_call.1} parent=83 // pred_fallthru
          _
        %s844 = sand.u32 %s31, 1
        %s845 = scalar_lea.sflag [#allocation4], %s844
        %s846 = sand.u32 %s315, 1
        %s847 = smul.addr %s846, 2
        %s848 = scalar_lea.vmem [#allocation17], %s847
        // Predicated region
        $region129: #{tpu_custom_call.1} parent=83 // pred_check
          %p849 = pneg %p328
        $region130: #{tpu_custom_call.1} parent=83 // pred_check_branch
          %851 = sbr.rel (%p849) target = $region132
        $region131: #{tpu_custom_call.1} parent=83 // pred_region
          %852 = dma.done %s845, 32
        $region132: #{tpu_custom_call.1} parent=83 // pred_fallthru
          _
        %s853 = sand.u32 %s31, 1
        %s854 = scalar_lea.sflag [#allocation4], %s853
        %s855 = sand.u32 %s341, 1
        %s856 = smul.addr %s855, 2
        %s857 = scalar_lea.vmem [#allocation18], %s856
        // Predicated region
        $region133: #{tpu_custom_call.1} parent=83 // pred_check
          %p858 = pneg %p354
        $region134: #{tpu_custom_call.1} parent=83 // pred_check_branch
          %860 = sbr.rel (%p858) target = $region136
        $region135: #{tpu_custom_call.1} parent=83 // pred_region
          %861 = dma.done %s854, 32
        $region136: #{tpu_custom_call.1} parent=83 // pred_fallthru
          _
        %s862 = sand.u32 %s31, 1
        %s863 = scalar_lea.sflag [#allocation4], %s862
        %s864 = sand.u32 %s367, 1
        %s865 = smul.addr %s864, 2
        %s866 = scalar_lea.vmem [#allocation19], %s865
        // Predicated region
        $region137: #{tpu_custom_call.1} parent=83 // pred_check
          %p867 = pneg %p380
        $region138: #{tpu_custom_call.1} parent=83 // pred_check_branch
          %869 = sbr.rel (%p867) target = $region140
        $region139: #{tpu_custom_call.1} parent=83 // pred_region
          %870 = dma.done %s863, 32
        $region140: #{tpu_custom_call.1} parent=83 // pred_fallthru
          _
        // Predicated region
        $region141: #{tpu_custom_call.1} parent=83 // pred_check
          %p871 = pneg %p401
        $region142: #{tpu_custom_call.1} parent=83 // pred_check_branch
          %873 = sbr.rel (%p871) target = $region144
        $region143: #{tpu_custom_call.1} parent=83 // pred_region
          %874 = dma.done [#allocation7], 2048
        $region144: #{tpu_custom_call.1} parent=83 // pred_fallthru
          _
        // Predicated region
        $region145: #{tpu_custom_call.1} parent=83 // pred_check
          %p875 = pneg %p422
        $region146: #{tpu_custom_call.1} parent=83 // pred_check_branch
          %877 = sbr.rel (%p875) target = $region148
        $region147: #{tpu_custom_call.1} parent=83 // pred_region
          %878 = dma.done [#allocation22], 16
        $region148: #{tpu_custom_call.1} parent=83 // pred_fallthru
          _
        %p879 = pneg %p47
        %p880 = pneg %p44
        %p881 = pneg %p68
        %p882 = pneg %p65
        %s883 = sand.u32 %s31, 1
        %s884 = scalar_lea.sflag [#allocation4], %s883
        %s885 = sand.u32 %s81, 1
        %s886 = smul.addr %s885, 1536
        %s887 = scalar_lea.vmem [#allocation8], %s886
        %p888 = pneg %p94
        %p889 = pneg %p91
        %s890 = sand.u32 %s31, 1
        %s891 = scalar_lea.sflag [#allocation4], %s890
        %s892 = sand.u32 %s107, 1
        %s893 = smul.addr %s892, 12
        %s894 = scalar_lea.vmem [#allocation9], %s893
        %p895 = pneg %p120
        %p896 = pneg %p117
        %s897 = sand.u32 %s31, 1
        %s898 = scalar_lea.sflag [#allocation4], %s897
        %s899 = sand.u32 %s133, 1
        %s900 = smul.addr %s899, 512
        %s901 = scalar_lea.vmem [#allocation10], %s900
        %p902 = pneg %p146
        %p903 = pneg %p143
        %s904 = sand.u32 %s31, 1
        %s905 = scalar_lea.sflag [#allocation4], %s904
        %s906 = sand.u32 %s159, 1
        %s907 = smul.addr %s906, 2
        %s908 = scalar_lea.vmem [#allocation11], %s907
        %p909 = pneg %p172
        %p910 = pneg %p169
        %s911 = sand.u32 %s31, 1
        %s912 = scalar_lea.sflag [#allocation4], %s911
        %s913 = sand.u32 %s185, 1
        %s914 = smul.addr %s913, 256
        %s915 = scalar_lea.vmem [#allocation12], %s914
        %p916 = pneg %p198
        %p917 = pneg %p195
        %s918 = sand.u32 %s31, 1
        %s919 = scalar_lea.sflag [#allocation4], %s918
        %s920 = sand.u32 %s211, 1
        %s921 = smul.addr %s920, 2
        %s922 = scalar_lea.vmem [#allocation13], %s921
        %p923 = pneg %p224
        %p924 = pneg %p221
        %s925 = sand.u32 %s31, 1
        %s926 = scalar_lea.sflag [#allocation4], %s925
        %s927 = sand.u32 %s237, 1
        %s928 = smul.addr %s927, 256
        %s929 = scalar_lea.vmem [#allocation14], %s928
        %p930 = pneg %p250
        %p931 = pneg %p247
        %s932 = sand.u32 %s31, 1
        %s933 = scalar_lea.sflag [#allocation4], %s932
        %s934 = sand.u32 %s263, 1
        %s935 = smul.addr %s934, 2
        %s936 = scalar_lea.vmem [#allocation15], %s935
        %p937 = pneg %p276
        %p938 = pneg %p273
        %s939 = sand.u32 %s31, 1
        %s940 = scalar_lea.sflag [#allocation4], %s939
        %s941 = sand.u32 %s289, 1
        %s942 = smul.addr %s941, 2
        %s943 = scalar_lea.vmem [#allocation16], %s942
        %p944 = pneg %p302
        %p945 = pneg %p299
        %s946 = sand.u32 %s31, 1
        %s947 = scalar_lea.sflag [#allocation4], %s946
        %s948 = sand.u32 %s315, 1
        %s949 = smul.addr %s948, 2
        %s950 = scalar_lea.vmem [#allocation17], %s949
        %p951 = pneg %p328
        %p952 = pneg %p325
        %s953 = sand.u32 %s31, 1
        %s954 = scalar_lea.sflag [#allocation4], %s953
        %s955 = sand.u32 %s341, 1
        %s956 = smul.addr %s955, 2
        %s957 = scalar_lea.vmem [#allocation18], %s956
        %p958 = pneg %p354
        %p959 = pneg %p351
        %s960 = sand.u32 %s31, 1
        %s961 = scalar_lea.sflag [#allocation4], %s960
        %s962 = sand.u32 %s367, 1
        %s963 = smul.addr %s962, 2
        %s964 = scalar_lea.vmem [#allocation19], %s963
        %p965 = pneg %p380
        %p966 = pneg %p377
        %p967 = pneg %p401
        %p968 = pneg %p398
        %p969 = pneg %p422
        %p970 = pneg %p419
        %p971 = pneg %p443
        %p972 = pneg %p440
        %p974 = scmp.eq.s32.totalorder %s31, 0
        // Predicated region
        $region149: #{tpu_custom_call.1} parent=83 // pred_check
          %p975 = pneg %p974
        $region150: #{tpu_custom_call.1} parent=83 // pred_check_branch
          %977 = sbr.rel (%p975) target = $region152
        $region151: #{tpu_custom_call.1} parent=83 // pred_region
          %v978 = vld [vmem:[#allocation3] sm:$0xff]
          %v979 = vld [vmem:[#allocation3 + $0x8] sm:$0xff]
          %v980 = vld [vmem:[#allocation3 + $0x10] sm:$0xff]
          %v981 = vld [vmem:[#allocation3 + $0x18] sm:$0xff]
          %982 = vst [vmem:[#allocation2] sm:$0xff] %v978
          %983 = vst [vmem:[#allocation2 + $0x8] sm:$0xff] %v979
          %984 = vst [vmem:[#allocation2 + $0x10] sm:$0xff] %v980
          %985 = vst [vmem:[#allocation2 + $0x18] sm:$0xff] %v981
        $region152: #{tpu_custom_call.1} parent=83 // pred_fallthru
          _
        %v986 = vld [vmem:[#allocation2] sm:$0xff]
        %v987 = vld [vmem:[#allocation2 + $0x8] sm:$0xff]
        %v988 = vld [vmem:[#allocation2 + $0x10] sm:$0xff]
        %v989 = vld [vmem:[#allocation2 + $0x18] sm:$0xff]
        %v990 = vpack.c.bf16 %v988, %v986
        %v991 = vpack.c.bf16 %v989, %v987
        %v992 = vld [vmem:[%s767] sm:$0xff]
        %v993 = vld [vmem:[%s767 + $0x8] sm:$0xff]
        %v994 = vld [vmem:[%s767 + $0x10] sm:$0xff]
        %v995 = vld [vmem:[%s767 + $0x18] sm:$0xff]
        %v996 = vld [vmem:[%s767 + $0x20] sm:$0xff]
        %v997 = vld [vmem:[%s767 + $0x28] sm:$0xff]
        %v998 = vld [vmem:[%s767 + $0x30] sm:$0xff]
        %v999 = vld [vmem:[%s767 + $0x38] sm:$0xff]
        %v1000 = vld [vmem:[%s767 + $0x40] sm:$0xff]
        %v1001 = vld [vmem:[%s767 + $0x48] sm:$0xff]
        %v1002 = vld [vmem:[%s767 + $0x50] sm:$0xff]
        %v1003 = vld [vmem:[%s767 + $0x58] sm:$0xff]
        %v1004 = vld [vmem:[%s767 + $0x60] sm:$0xff]
        %v1005 = vld [vmem:[%s767 + $0x68] sm:$0xff]
        %v1006 = vld [vmem:[%s767 + $0x70] sm:$0xff]
        %v1007 = vld [vmem:[%s767 + $0x78] sm:$0xff]
        %v1008 = vld [vmem:[%s767 + $0x80] sm:$0xff]
        %v1009 = vld [vmem:[%s767 + $0x88] sm:$0xff]
        %v1010 = vld [vmem:[%s767 + $0x90] sm:$0xff]
        %v1011 = vld [vmem:[%s767 + $0x98] sm:$0xff]
        %v1012 = vld [vmem:[%s767 + $0xa0] sm:$0xff]
        %v1013 = vld [vmem:[%s767 + $0xa8] sm:$0xff]
        %v1014 = vld [vmem:[%s767 + $0xb0] sm:$0xff]
        %v1015 = vld [vmem:[%s767 + $0xb8] sm:$0xff]
        %v1016 = vld [vmem:[%s767 + $0xc0] sm:$0xff]
        %v1017 = vld [vmem:[%s767 + $0xc8] sm:$0xff]
        %v1018 = vld [vmem:[%s767 + $0xd0] sm:$0xff]
        %v1019 = vld [vmem:[%s767 + $0xd8] sm:$0xff]
        %v1020 = vld [vmem:[%s767 + $0xe0] sm:$0xff]
        %v1021 = vld [vmem:[%s767 + $0xe8] sm:$0xff]
        %v1022 = vld [vmem:[%s767 + $0xf0] sm:$0xff]
        %v1023 = vld [vmem:[%s767 + $0xf8] sm:$0xff]
        %v1024 = vld [vmem:[%s767 + $0x100] sm:$0xff]
        %v1025 = vld [vmem:[%s767 + $0x108] sm:$0xff]
        %v1026 = vld [vmem:[%s767 + $0x110] sm:$0xff]
        %v1027 = vld [vmem:[%s767 + $0x118] sm:$0xff]
        %v1028 = vld [vmem:[%s767 + $0x120] sm:$0xff]
        %v1029 = vld [vmem:[%s767 + $0x128] sm:$0xff]
        %v1030 = vld [vmem:[%s767 + $0x130] sm:$0xff]
        %v1031 = vld [vmem:[%s767 + $0x138] sm:$0xff]
        %v1032 = vld [vmem:[%s767 + $0x140] sm:$0xff]
        %v1033 = vld [vmem:[%s767 + $0x148] sm:$0xff]
        %v1034 = vld [vmem:[%s767 + $0x150] sm:$0xff]
        %v1035 = vld [vmem:[%s767 + $0x158] sm:$0xff]
        %v1036 = vld [vmem:[%s767 + $0x160] sm:$0xff]
        %v1037 = vld [vmem:[%s767 + $0x168] sm:$0xff]
        %v1038 = vld [vmem:[%s767 + $0x170] sm:$0xff]
        %v1039 = vld [vmem:[%s767 + $0x178] sm:$0xff]
        %v1040 = vld [vmem:[%s767 + $0x180] sm:$0xff]
        %v1041 = vld [vmem:[%s767 + $0x188] sm:$0xff]
        %v1042 = vld [vmem:[%s767 + $0x190] sm:$0xff]
        %v1043 = vld [vmem:[%s767 + $0x198] sm:$0xff]
        %v1044 = vld [vmem:[%s767 + $0x1a0] sm:$0xff]
        %v1045 = vld [vmem:[%s767 + $0x1a8] sm:$0xff]
        %v1046 = vld [vmem:[%s767 + $0x1b0] sm:$0xff]
        %v1047 = vld [vmem:[%s767 + $0x1b8] sm:$0xff]
        %v1048 = vld [vmem:[%s767 + $0x1c0] sm:$0xff]
        %v1049 = vld [vmem:[%s767 + $0x1c8] sm:$0xff]
        %v1050 = vld [vmem:[%s767 + $0x1d0] sm:$0xff]
        %v1051 = vld [vmem:[%s767 + $0x1d8] sm:$0xff]
        %v1052 = vld [vmem:[%s767 + $0x1e0] sm:$0xff]
        %v1053 = vld [vmem:[%s767 + $0x1e8] sm:$0xff]
        %v1054 = vld [vmem:[%s767 + $0x1f0] sm:$0xff]
        %v1055 = vld [vmem:[%s767 + $0x1f8] sm:$0xff]
        %v1056 = vld [vmem:[%s767 + $0x200] sm:$0xff]
        %v1057 = vld [vmem:[%s767 + $0x208] sm:$0xff]
        %v1058 = vld [vmem:[%s767 + $0x210] sm:$0xff]
        %v1059 = vld [vmem:[%s767 + $0x218] sm:$0xff]
        %v1060 = vld [vmem:[%s767 + $0x220] sm:$0xff]
        %v1061 = vld [vmem:[%s767 + $0x228] sm:$0xff]
        %v1062 = vld [vmem:[%s767 + $0x230] sm:$0xff]
        %v1063 = vld [vmem:[%s767 + $0x238] sm:$0xff]
        %v1064 = vld [vmem:[%s767 + $0x240] sm:$0xff]
        %v1065 = vld [vmem:[%s767 + $0x248] sm:$0xff]
        %v1066 = vld [vmem:[%s767 + $0x250] sm:$0xff]
        %v1067 = vld [vmem:[%s767 + $0x258] sm:$0xff]
        %v1068 = vld [vmem:[%s767 + $0x260] sm:$0xff]
        %v1069 = vld [vmem:[%s767 + $0x268] sm:$0xff]
        %v1070 = vld [vmem:[%s767 + $0x270] sm:$0xff]
        %v1071 = vld [vmem:[%s767 + $0x278] sm:$0xff]
        %v1072 = vld [vmem:[%s767 + $0x280] sm:$0xff]
        %v1073 = vld [vmem:[%s767 + $0x288] sm:$0xff]
        %v1074 = vld [vmem:[%s767 + $0x290] sm:$0xff]
        %v1075 = vld [vmem:[%s767 + $0x298] sm:$0xff]
        %v1076 = vld [vmem:[%s767 + $0x2a0] sm:$0xff]
        %v1077 = vld [vmem:[%s767 + $0x2a8] sm:$0xff]
        %v1078 = vld [vmem:[%s767 + $0x2b0] sm:$0xff]
        %v1079 = vld [vmem:[%s767 + $0x2b8] sm:$0xff]
        %v1080 = vld [vmem:[%s767 + $0x2c0] sm:$0xff]
        %v1081 = vld [vmem:[%s767 + $0x2c8] sm:$0xff]
        %v1082 = vld [vmem:[%s767 + $0x2d0] sm:$0xff]
        %v1083 = vld [vmem:[%s767 + $0x2d8] sm:$0xff]
        %v1084 = vld [vmem:[%s767 + $0x2e0] sm:$0xff]
        %v1085 = vld [vmem:[%s767 + $0x2e8] sm:$0xff]
        %v1086 = vld [vmem:[%s767 + $0x2f0] sm:$0xff]
        %v1087 = vld [vmem:[%s767 + $0x2f8] sm:$0xff]
        %v1088 = vld [vmem:[%s767 + $0x300] sm:$0xff]
        %v1089 = vld [vmem:[%s767 + $0x308] sm:$0xff]
        %v1090 = vld [vmem:[%s767 + $0x310] sm:$0xff]
        %v1091 = vld [vmem:[%s767 + $0x318] sm:$0xff]
        %v1092 = vld [vmem:[%s767 + $0x320] sm:$0xff]
        %v1093 = vld [vmem:[%s767 + $0x328] sm:$0xff]
        %v1094 = vld [vmem:[%s767 + $0x330] sm:$0xff]
        %v1095 = vld [vmem:[%s767 + $0x338] sm:$0xff]
        %v1096 = vld [vmem:[%s767 + $0x340] sm:$0xff]
        %v1097 = vld [vmem:[%s767 + $0x348] sm:$0xff]
        %v1098 = vld [vmem:[%s767 + $0x350] sm:$0xff]
        %v1099 = vld [vmem:[%s767 + $0x358] sm:$0xff]
        %v1100 = vld [vmem:[%s767 + $0x360] sm:$0xff]
        %v1101 = vld [vmem:[%s767 + $0x368] sm:$0xff]
        %v1102 = vld [vmem:[%s767 + $0x370] sm:$0xff]
        %v1103 = vld [vmem:[%s767 + $0x378] sm:$0xff]
        %v1104 = vld [vmem:[%s767 + $0x380] sm:$0xff]
        %v1105 = vld [vmem:[%s767 + $0x388] sm:$0xff]
        %v1106 = vld [vmem:[%s767 + $0x390] sm:$0xff]
        %v1107 = vld [vmem:[%s767 + $0x398] sm:$0xff]
        %v1108 = vld [vmem:[%s767 + $0x3a0] sm:$0xff]
        %v1109 = vld [vmem:[%s767 + $0x3a8] sm:$0xff]
        %v1110 = vld [vmem:[%s767 + $0x3b0] sm:$0xff]
        %v1111 = vld [vmem:[%s767 + $0x3b8] sm:$0xff]
        %v1112 = vld [vmem:[%s767 + $0x3c0] sm:$0xff]
        %v1113 = vld [vmem:[%s767 + $0x3c8] sm:$0xff]
        %v1114 = vld [vmem:[%s767 + $0x3d0] sm:$0xff]
        %v1115 = vld [vmem:[%s767 + $0x3d8] sm:$0xff]
        %v1116 = vld [vmem:[%s767 + $0x3e0] sm:$0xff]
        %v1117 = vld [vmem:[%s767 + $0x3e8] sm:$0xff]
        %v1118 = vld [vmem:[%s767 + $0x3f0] sm:$0xff]
        %v1119 = vld [vmem:[%s767 + $0x3f8] sm:$0xff]
        %v1120 = vld [vmem:[%s767 + $0x400] sm:$0xff]
        %v1121 = vld [vmem:[%s767 + $0x408] sm:$0xff]
        %v1122 = vld [vmem:[%s767 + $0x410] sm:$0xff]
        %v1123 = vld [vmem:[%s767 + $0x418] sm:$0xff]
        %v1124 = vld [vmem:[%s767 + $0x420] sm:$0xff]
        %v1125 = vld [vmem:[%s767 + $0x428] sm:$0xff]
        %v1126 = vld [vmem:[%s767 + $0x430] sm:$0xff]
        %v1127 = vld [vmem:[%s767 + $0x438] sm:$0xff]
        %v1128 = vld [vmem:[%s767 + $0x440] sm:$0xff]
        %v1129 = vld [vmem:[%s767 + $0x448] sm:$0xff]
        %v1130 = vld [vmem:[%s767 + $0x450] sm:$0xff]
        %v1131 = vld [vmem:[%s767 + $0x458] sm:$0xff]
        %v1132 = vld [vmem:[%s767 + $0x460] sm:$0xff]
        %v1133 = vld [vmem:[%s767 + $0x468] sm:$0xff]
        %v1134 = vld [vmem:[%s767 + $0x470] sm:$0xff]
        %v1135 = vld [vmem:[%s767 + $0x478] sm:$0xff]
        %v1136 = vld [vmem:[%s767 + $0x480] sm:$0xff]
        %v1137 = vld [vmem:[%s767 + $0x488] sm:$0xff]
        %v1138 = vld [vmem:[%s767 + $0x490] sm:$0xff]
        %v1139 = vld [vmem:[%s767 + $0x498] sm:$0xff]
        %v1140 = vld [vmem:[%s767 + $0x4a0] sm:$0xff]
        %v1141 = vld [vmem:[%s767 + $0x4a8] sm:$0xff]
        %v1142 = vld [vmem:[%s767 + $0x4b0] sm:$0xff]
        %v1143 = vld [vmem:[%s767 + $0x4b8] sm:$0xff]
        %v1144 = vld [vmem:[%s767 + $0x4c0] sm:$0xff]
        %v1145 = vld [vmem:[%s767 + $0x4c8] sm:$0xff]
        %v1146 = vld [vmem:[%s767 + $0x4d0] sm:$0xff]
        %v1147 = vld [vmem:[%s767 + $0x4d8] sm:$0xff]
        %v1148 = vld [vmem:[%s767 + $0x4e0] sm:$0xff]
        %v1149 = vld [vmem:[%s767 + $0x4e8] sm:$0xff]
        %v1150 = vld [vmem:[%s767 + $0x4f0] sm:$0xff]
        %v1151 = vld [vmem:[%s767 + $0x4f8] sm:$0xff]
        %v1152 = vld [vmem:[%s767 + $0x500] sm:$0xff]
        %v1153 = vld [vmem:[%s767 + $0x508] sm:$0xff]
        %v1154 = vld [vmem:[%s767 + $0x510] sm:$0xff]
        %v1155 = vld [vmem:[%s767 + $0x518] sm:$0xff]
        %v1156 = vld [vmem:[%s767 + $0x520] sm:$0xff]
        %v1157 = vld [vmem:[%s767 + $0x528] sm:$0xff]
        %v1158 = vld [vmem:[%s767 + $0x530] sm:$0xff]
        %v1159 = vld [vmem:[%s767 + $0x538] sm:$0xff]
        %v1160 = vld [vmem:[%s767 + $0x540] sm:$0xff]
        %v1161 = vld [vmem:[%s767 + $0x548] sm:$0xff]
        %v1162 = vld [vmem:[%s767 + $0x550] sm:$0xff]
        %v1163 = vld [vmem:[%s767 + $0x558] sm:$0xff]
        %v1164 = vld [vmem:[%s767 + $0x560] sm:$0xff]
        %v1165 = vld [vmem:[%s767 + $0x568] sm:$0xff]
        %v1166 = vld [vmem:[%s767 + $0x570] sm:$0xff]
        %v1167 = vld [vmem:[%s767 + $0x578] sm:$0xff]
        %v1168 = vld [vmem:[%s767 + $0x580] sm:$0xff]
        %v1169 = vld [vmem:[%s767 + $0x588] sm:$0xff]
        %v1170 = vld [vmem:[%s767 + $0x590] sm:$0xff]
        %v1171 = vld [vmem:[%s767 + $0x598] sm:$0xff]
        %v1172 = vld [vmem:[%s767 + $0x5a0] sm:$0xff]
        %v1173 = vld [vmem:[%s767 + $0x5a8] sm:$0xff]
        %v1174 = vld [vmem:[%s767 + $0x5b0] sm:$0xff]
        %v1175 = vld [vmem:[%s767 + $0x5b8] sm:$0xff]
        %v1176 = vld [vmem:[%s767 + $0x5c0] sm:$0xff]
        %v1177 = vld [vmem:[%s767 + $0x5c8] sm:$0xff]
        %v1178 = vld [vmem:[%s767 + $0x5d0] sm:$0xff]
        %v1179 = vld [vmem:[%s767 + $0x5d8] sm:$0xff]
        %v1180 = vld [vmem:[%s767 + $0x5e0] sm:$0xff]
        %v1181 = vld [vmem:[%s767 + $0x5e8] sm:$0xff]
        %v1182 = vld [vmem:[%s767 + $0x5f0] sm:$0xff]
        %v1183 = vld [vmem:[%s767 + $0x5f8] sm:$0xff]
        %v1184 = vld [vmem:[%s776] sm:$0xff]
        %v1185 = vld [vmem:[%s776 + $0x8] sm:$0xf]
        %v1188 = vlaneseq
        %v1189 = vshrl.u32 %v1188, 7
        %v1190 = vsub.s32 0, %v1189
        %v1191 = vrot.slane %v1184, %v1190
        %v1192 = vlaneseq
        %v1193 = vshrl.u32 %v1192, 7
        %v1194 = vsub.s32 1, %v1193
        %v1195 = vrot.slane %v1184, %v1194
        %v1196 = vlaneseq
        %v1197 = vshrl.u32 %v1196, 7
        %v1198 = vsub.s32 2, %v1197
        %v1199 = vrot.slane %v1184, %v1198
        %v1200 = vlaneseq
        %v1201 = vshrl.u32 %v1200, 7
        %v1202 = vsub.s32 3, %v1201
        %v1203 = vrot.slane %v1184, %v1202
        %v1204 = vlaneseq
        %v1205 = vshrl.u32 %v1204, 7
        %v1206 = vsub.s32 4, %v1205
        %v1207 = vrot.slane %v1184, %v1206
        %v1208 = vlaneseq
        %v1209 = vshrl.u32 %v1208, 7
        %v1210 = vsub.s32 5, %v1209
        %v1211 = vrot.slane %v1184, %v1210
        %v1212 = vlaneseq
        %v1213 = vshrl.u32 %v1212, 7
        %v1214 = vsub.s32 6, %v1213
        %v1215 = vrot.slane %v1184, %v1214
        %v1216 = vlaneseq
        %v1217 = vshrl.u32 %v1216, 7
        %v1218 = vsub.s32 7, %v1217
        %v1219 = vrot.slane %v1184, %v1218
        %v1220 = vlaneseq
        %v1221 = vshrl.u32 %v1220, 7
        %v1222 = vsub.s32 0, %v1221
        %v1223 = vrot.slane %v1185, %v1222
        %v1224 = vlaneseq
        %v1225 = vshrl.u32 %v1224, 7
        %v1226 = vsub.s32 1, %v1225
        %v1227 = vrot.slane %v1185, %v1226
        %v1228 = vlaneseq
        %v1229 = vshrl.u32 %v1228, 7
        %v1230 = vsub.s32 2, %v1229
        %v1231 = vrot.slane %v1185, %v1230
        %v1232 = vlaneseq
        %v1233 = vshrl.u32 %v1232, 7
        %v1234 = vsub.s32 3, %v1233
        %v1235 = vrot.slane %v1185, %v1234
        %v1440 = vunpack.c.l.b16 %v992
        %v1441 = vunpack.c.h.b16 %v992
        %v1442 = vunpack.c.l.b16 %v993
        %v1443 = vunpack.c.h.b16 %v993
        %v1444 = vunpack.c.l.b16 %v994
        %v1445 = vunpack.c.h.b16 %v994
        %v1446 = vunpack.c.l.b16 %v995
        %v1447 = vunpack.c.h.b16 %v995
        %v1448 = vunpack.c.l.b16 %v996
        %v1449 = vunpack.c.h.b16 %v996
        %v1450 = vunpack.c.l.b16 %v997
        %v1451 = vunpack.c.h.b16 %v997
        %v1452 = vunpack.c.l.b16 %v998
        %v1453 = vunpack.c.h.b16 %v998
        %v1454 = vunpack.c.l.b16 %v999
        %v1455 = vunpack.c.h.b16 %v999
        %v1456 = vunpack.c.l.b16 %v1000
        %v1457 = vunpack.c.h.b16 %v1000
        %v1458 = vunpack.c.l.b16 %v1001
        %v1459 = vunpack.c.h.b16 %v1001
        %v1460 = vunpack.c.l.b16 %v1002
        %v1461 = vunpack.c.h.b16 %v1002
        %v1462 = vunpack.c.l.b16 %v1003
        %v1463 = vunpack.c.h.b16 %v1003
        %v1464 = vunpack.c.l.b16 %v1004
        %v1465 = vunpack.c.h.b16 %v1004
        %v1466 = vunpack.c.l.b16 %v1005
        %v1467 = vunpack.c.h.b16 %v1005
        %v1468 = vunpack.c.l.b16 %v1006
        %v1469 = vunpack.c.h.b16 %v1006
        %v1470 = vunpack.c.l.b16 %v1007
        %v1471 = vunpack.c.h.b16 %v1007
        %v1472 = vunpack.c.l.b16 %v1008
        %v1473 = vunpack.c.h.b16 %v1008
        %v1474 = vunpack.c.l.b16 %v1009
        %v1475 = vunpack.c.h.b16 %v1009
        %v1476 = vunpack.c.l.b16 %v1010
        %v1477 = vunpack.c.h.b16 %v1010
        %v1478 = vunpack.c.l.b16 %v1011
        %v1479 = vunpack.c.h.b16 %v1011
        %v1480 = vunpack.c.l.b16 %v1012
        %v1481 = vunpack.c.h.b16 %v1012
        %v1482 = vunpack.c.l.b16 %v1013
        %v1483 = vunpack.c.h.b16 %v1013
        %v1484 = vunpack.c.l.b16 %v1014
        %v1485 = vunpack.c.h.b16 %v1014
        %v1486 = vunpack.c.l.b16 %v1015
        %v1487 = vunpack.c.h.b16 %v1015
        %v1488 = vunpack.c.l.b16 %v1016
        %v1489 = vunpack.c.h.b16 %v1016
        %v1490 = vunpack.c.l.b16 %v1017
        %v1491 = vunpack.c.h.b16 %v1017
        %v1492 = vunpack.c.l.b16 %v1018
        %v1493 = vunpack.c.h.b16 %v1018
        %v1494 = vunpack.c.l.b16 %v1019
        %v1495 = vunpack.c.h.b16 %v1019
        %v1496 = vunpack.c.l.b16 %v1020
        %v1497 = vunpack.c.h.b16 %v1020
        %v1498 = vunpack.c.l.b16 %v1021
        %v1499 = vunpack.c.h.b16 %v1021
        %v1500 = vunpack.c.l.b16 %v1022
        %v1501 = vunpack.c.h.b16 %v1022
        %v1502 = vunpack.c.l.b16 %v1023
        %v1503 = vunpack.c.h.b16 %v1023
        %v1504 = vunpack.c.l.b16 %v1024
        %v1505 = vunpack.c.h.b16 %v1024
        %v1506 = vunpack.c.l.b16 %v1025
        %v1507 = vunpack.c.h.b16 %v1025
        %v1508 = vunpack.c.l.b16 %v1026
        %v1509 = vunpack.c.h.b16 %v1026
        %v1510 = vunpack.c.l.b16 %v1027
        %v1511 = vunpack.c.h.b16 %v1027
        %v1512 = vunpack.c.l.b16 %v1028
        %v1513 = vunpack.c.h.b16 %v1028
        %v1514 = vunpack.c.l.b16 %v1029
        %v1515 = vunpack.c.h.b16 %v1029
        %v1516 = vunpack.c.l.b16 %v1030
        %v1517 = vunpack.c.h.b16 %v1030
        %v1518 = vunpack.c.l.b16 %v1031
        %v1519 = vunpack.c.h.b16 %v1031
        %v1520 = vunpack.c.l.b16 %v1032
        %v1521 = vunpack.c.h.b16 %v1032
        %v1522 = vunpack.c.l.b16 %v1033
        %v1523 = vunpack.c.h.b16 %v1033
        %v1524 = vunpack.c.l.b16 %v1034
        %v1525 = vunpack.c.h.b16 %v1034
        %v1526 = vunpack.c.l.b16 %v1035
        %v1527 = vunpack.c.h.b16 %v1035
        %v1528 = vunpack.c.l.b16 %v1036
        %v1529 = vunpack.c.h.b16 %v1036
        %v1530 = vunpack.c.l.b16 %v1037
        %v1531 = vunpack.c.h.b16 %v1037
        %v1532 = vunpack.c.l.b16 %v1038
        %v1533 = vunpack.c.h.b16 %v1038
        %v1534 = vunpack.c.l.b16 %v1039
        %v1535 = vunpack.c.h.b16 %v1039
        %v1536 = vunpack.c.l.b16 %v1040
        %v1537 = vunpack.c.h.b16 %v1040
        %v1538 = vunpack.c.l.b16 %v1041
        %v1539 = vunpack.c.h.b16 %v1041
        %v1540 = vunpack.c.l.b16 %v1042
        %v1541 = vunpack.c.h.b16 %v1042
        %v1542 = vunpack.c.l.b16 %v1043
        %v1543 = vunpack.c.h.b16 %v1043
        %v1544 = vunpack.c.l.b16 %v1044
        %v1545 = vunpack.c.h.b16 %v1044
        %v1546 = vunpack.c.l.b16 %v1045
        %v1547 = vunpack.c.h.b16 %v1045
        %v1548 = vunpack.c.l.b16 %v1046
        %v1549 = vunpack.c.h.b16 %v1046
        %v1550 = vunpack.c.l.b16 %v1047
        %v1551 = vunpack.c.h.b16 %v1047
        %v1552 = vunpack.c.l.b16 %v1048
        %v1553 = vunpack.c.h.b16 %v1048
        %v1554 = vunpack.c.l.b16 %v1049
        %v1555 = vunpack.c.h.b16 %v1049
        %v1556 = vunpack.c.l.b16 %v1050
        %v1557 = vunpack.c.h.b16 %v1050
        %v1558 = vunpack.c.l.b16 %v1051
        %v1559 = vunpack.c.h.b16 %v1051
        %v1560 = vunpack.c.l.b16 %v1052
        %v1561 = vunpack.c.h.b16 %v1052
        %v1562 = vunpack.c.l.b16 %v1053
        %v1563 = vunpack.c.h.b16 %v1053
        %v1564 = vunpack.c.l.b16 %v1054
        %v1565 = vunpack.c.h.b16 %v1054
        %v1566 = vunpack.c.l.b16 %v1055
        %v1567 = vunpack.c.h.b16 %v1055
        %v1568 = vunpack.c.l.b16 %v1056
        %v1569 = vunpack.c.h.b16 %v1056
        %v1570 = vunpack.c.l.b16 %v1057
        %v1571 = vunpack.c.h.b16 %v1057
        %v1572 = vunpack.c.l.b16 %v1058
        %v1573 = vunpack.c.h.b16 %v1058
        %v1574 = vunpack.c.l.b16 %v1059
        %v1575 = vunpack.c.h.b16 %v1059
        %v1576 = vunpack.c.l.b16 %v1060
        %v1577 = vunpack.c.h.b16 %v1060
        %v1578 = vunpack.c.l.b16 %v1061
        %v1579 = vunpack.c.h.b16 %v1061
        %v1580 = vunpack.c.l.b16 %v1062
        %v1581 = vunpack.c.h.b16 %v1062
        %v1582 = vunpack.c.l.b16 %v1063
        %v1583 = vunpack.c.h.b16 %v1063
        %v1584 = vunpack.c.l.b16 %v1064
        %v1585 = vunpack.c.h.b16 %v1064
        %v1586 = vunpack.c.l.b16 %v1065
        %v1587 = vunpack.c.h.b16 %v1065
        %v1588 = vunpack.c.l.b16 %v1066
        %v1589 = vunpack.c.h.b16 %v1066
        %v1590 = vunpack.c.l.b16 %v1067
        %v1591 = vunpack.c.h.b16 %v1067
        %v1592 = vunpack.c.l.b16 %v1068
        %v1593 = vunpack.c.h.b16 %v1068
        %v1594 = vunpack.c.l.b16 %v1069
        %v1595 = vunpack.c.h.b16 %v1069
        %v1596 = vunpack.c.l.b16 %v1070
        %v1597 = vunpack.c.h.b16 %v1070
        %v1598 = vunpack.c.l.b16 %v1071
        %v1599 = vunpack.c.h.b16 %v1071
        %v1600 = vunpack.c.l.b16 %v1072
        %v1601 = vunpack.c.h.b16 %v1072
        %v1602 = vunpack.c.l.b16 %v1073
        %v1603 = vunpack.c.h.b16 %v1073
        %v1604 = vunpack.c.l.b16 %v1074
        %v1605 = vunpack.c.h.b16 %v1074
        %v1606 = vunpack.c.l.b16 %v1075
        %v1607 = vunpack.c.h.b16 %v1075
        %v1608 = vunpack.c.l.b16 %v1076
        %v1609 = vunpack.c.h.b16 %v1076
        %v1610 = vunpack.c.l.b16 %v1077
        %v1611 = vunpack.c.h.b16 %v1077
        %v1612 = vunpack.c.l.b16 %v1078
        %v1613 = vunpack.c.h.b16 %v1078
        %v1614 = vunpack.c.l.b16 %v1079
        %v1615 = vunpack.c.h.b16 %v1079
        %v1616 = vunpack.c.l.b16 %v1080
        %v1617 = vunpack.c.h.b16 %v1080
        %v1618 = vunpack.c.l.b16 %v1081
        %v1619 = vunpack.c.h.b16 %v1081
        %v1620 = vunpack.c.l.b16 %v1082
        %v1621 = vunpack.c.h.b16 %v1082
        %v1622 = vunpack.c.l.b16 %v1083
        %v1623 = vunpack.c.h.b16 %v1083
        %v1624 = vunpack.c.l.b16 %v1084
        %v1625 = vunpack.c.h.b16 %v1084
        %v1626 = vunpack.c.l.b16 %v1085
        %v1627 = vunpack.c.h.b16 %v1085
        %v1628 = vunpack.c.l.b16 %v1086
        %v1629 = vunpack.c.h.b16 %v1086
        %v1630 = vunpack.c.l.b16 %v1087
        %v1631 = vunpack.c.h.b16 %v1087
        %v1632 = vunpack.c.l.b16 %v1088
        %v1633 = vunpack.c.h.b16 %v1088
        %v1634 = vunpack.c.l.b16 %v1089
        %v1635 = vunpack.c.h.b16 %v1089
        %v1636 = vunpack.c.l.b16 %v1090
        %v1637 = vunpack.c.h.b16 %v1090
        %v1638 = vunpack.c.l.b16 %v1091
        %v1639 = vunpack.c.h.b16 %v1091
        %v1640 = vunpack.c.l.b16 %v1092
        %v1641 = vunpack.c.h.b16 %v1092
        %v1642 = vunpack.c.l.b16 %v1093
        %v1643 = vunpack.c.h.b16 %v1093
        %v1644 = vunpack.c.l.b16 %v1094
        %v1645 = vunpack.c.h.b16 %v1094
        %v1646 = vunpack.c.l.b16 %v1095
        %v1647 = vunpack.c.h.b16 %v1095
        %v1648 = vunpack.c.l.b16 %v1096
        %v1649 = vunpack.c.h.b16 %v1096
        %v1650 = vunpack.c.l.b16 %v1097
        %v1651 = vunpack.c.h.b16 %v1097
        %v1652 = vunpack.c.l.b16 %v1098
        %v1653 = vunpack.c.h.b16 %v1098
        %v1654 = vunpack.c.l.b16 %v1099
        %v1655 = vunpack.c.h.b16 %v1099
        %v1656 = vunpack.c.l.b16 %v1100
        %v1657 = vunpack.c.h.b16 %v1100
        %v1658 = vunpack.c.l.b16 %v1101
        %v1659 = vunpack.c.h.b16 %v1101
        %v1660 = vunpack.c.l.b16 %v1102
        %v1661 = vunpack.c.h.b16 %v1102
        %v1662 = vunpack.c.l.b16 %v1103
        %v1663 = vunpack.c.h.b16 %v1103
        %v1664 = vunpack.c.l.b16 %v1104
        %v1665 = vunpack.c.h.b16 %v1104
        %v1666 = vunpack.c.l.b16 %v1105
        %v1667 = vunpack.c.h.b16 %v1105
        %v1668 = vunpack.c.l.b16 %v1106
        %v1669 = vunpack.c.h.b16 %v1106
        %v1670 = vunpack.c.l.b16 %v1107
        %v1671 = vunpack.c.h.b16 %v1107
        %v1672 = vunpack.c.l.b16 %v1108
        %v1673 = vunpack.c.h.b16 %v1108
        %v1674 = vunpack.c.l.b16 %v1109
        %v1675 = vunpack.c.h.b16 %v1109
        %v1676 = vunpack.c.l.b16 %v1110
        %v1677 = vunpack.c.h.b16 %v1110
        %v1678 = vunpack.c.l.b16 %v1111
        %v1679 = vunpack.c.h.b16 %v1111
        %v1680 = vunpack.c.l.b16 %v1112
        %v1681 = vunpack.c.h.b16 %v1112
        %v1682 = vunpack.c.l.b16 %v1113
        %v1683 = vunpack.c.h.b16 %v1113
        %v1684 = vunpack.c.l.b16 %v1114
        %v1685 = vunpack.c.h.b16 %v1114
        %v1686 = vunpack.c.l.b16 %v1115
        %v1687 = vunpack.c.h.b16 %v1115
        %v1688 = vunpack.c.l.b16 %v1116
        %v1689 = vunpack.c.h.b16 %v1116
        %v1690 = vunpack.c.l.b16 %v1117
        %v1691 = vunpack.c.h.b16 %v1117
        %v1692 = vunpack.c.l.b16 %v1118
        %v1693 = vunpack.c.h.b16 %v1118
        %v1694 = vunpack.c.l.b16 %v1119
        %v1695 = vunpack.c.h.b16 %v1119
        %v1696 = vunpack.c.l.b16 %v1120
        %v1697 = vunpack.c.h.b16 %v1120
        %v1698 = vunpack.c.l.b16 %v1121
        %v1699 = vunpack.c.h.b16 %v1121
        %v1700 = vunpack.c.l.b16 %v1122
        %v1701 = vunpack.c.h.b16 %v1122
        %v1702 = vunpack.c.l.b16 %v1123
        %v1703 = vunpack.c.h.b16 %v1123
        %v1704 = vunpack.c.l.b16 %v1124
        %v1705 = vunpack.c.h.b16 %v1124
        %v1706 = vunpack.c.l.b16 %v1125
        %v1707 = vunpack.c.h.b16 %v1125
        %v1708 = vunpack.c.l.b16 %v1126
        %v1709 = vunpack.c.h.b16 %v1126
        %v1710 = vunpack.c.l.b16 %v1127
        %v1711 = vunpack.c.h.b16 %v1127
        %v1712 = vunpack.c.l.b16 %v1128
        %v1713 = vunpack.c.h.b16 %v1128
        %v1714 = vunpack.c.l.b16 %v1129
        %v1715 = vunpack.c.h.b16 %v1129
        %v1716 = vunpack.c.l.b16 %v1130
        %v1717 = vunpack.c.h.b16 %v1130
        %v1718 = vunpack.c.l.b16 %v1131
        %v1719 = vunpack.c.h.b16 %v1131
        %v1720 = vunpack.c.l.b16 %v1132
        %v1721 = vunpack.c.h.b16 %v1132
        %v1722 = vunpack.c.l.b16 %v1133
        %v1723 = vunpack.c.h.b16 %v1133
        %v1724 = vunpack.c.l.b16 %v1134
        %v1725 = vunpack.c.h.b16 %v1134
        %v1726 = vunpack.c.l.b16 %v1135
        %v1727 = vunpack.c.h.b16 %v1135
        %v1728 = vunpack.c.l.b16 %v1136
        %v1729 = vunpack.c.h.b16 %v1136
        %v1730 = vunpack.c.l.b16 %v1137
        %v1731 = vunpack.c.h.b16 %v1137
        %v1732 = vunpack.c.l.b16 %v1138
        %v1733 = vunpack.c.h.b16 %v1138
        %v1734 = vunpack.c.l.b16 %v1139
        %v1735 = vunpack.c.h.b16 %v1139
        %v1736 = vunpack.c.l.b16 %v1140
        %v1737 = vunpack.c.h.b16 %v1140
        %v1738 = vunpack.c.l.b16 %v1141
        %v1739 = vunpack.c.h.b16 %v1141
        %v1740 = vunpack.c.l.b16 %v1142
        %v1741 = vunpack.c.h.b16 %v1142
        %v1742 = vunpack.c.l.b16 %v1143
        %v1743 = vunpack.c.h.b16 %v1143
        %v1744 = vunpack.c.l.b16 %v1144
        %v1745 = vunpack.c.h.b16 %v1144
        %v1746 = vunpack.c.l.b16 %v1145
        %v1747 = vunpack.c.h.b16 %v1145
        %v1748 = vunpack.c.l.b16 %v1146
        %v1749 = vunpack.c.h.b16 %v1146
        %v1750 = vunpack.c.l.b16 %v1147
        %v1751 = vunpack.c.h.b16 %v1147
        %v1752 = vunpack.c.l.b16 %v1148
        %v1753 = vunpack.c.h.b16 %v1148
        %v1754 = vunpack.c.l.b16 %v1149
        %v1755 = vunpack.c.h.b16 %v1149
        %v1756 = vunpack.c.l.b16 %v1150
        %v1757 = vunpack.c.h.b16 %v1150
        %v1758 = vunpack.c.l.b16 %v1151
        %v1759 = vunpack.c.h.b16 %v1151
        %v1760 = vunpack.c.l.b16 %v1152
        %v1761 = vunpack.c.h.b16 %v1152
        %v1762 = vunpack.c.l.b16 %v1153
        %v1763 = vunpack.c.h.b16 %v1153
        %v1764 = vunpack.c.l.b16 %v1154
        %v1765 = vunpack.c.h.b16 %v1154
        %v1766 = vunpack.c.l.b16 %v1155
        %v1767 = vunpack.c.h.b16 %v1155
        %v1768 = vunpack.c.l.b16 %v1156
        %v1769 = vunpack.c.h.b16 %v1156
        %v1770 = vunpack.c.l.b16 %v1157
        %v1771 = vunpack.c.h.b16 %v1157
        %v1772 = vunpack.c.l.b16 %v1158
        %v1773 = vunpack.c.h.b16 %v1158
        %v1774 = vunpack.c.l.b16 %v1159
        %v1775 = vunpack.c.h.b16 %v1159
        %v1776 = vunpack.c.l.b16 %v1160
        %v1777 = vunpack.c.h.b16 %v1160
        %v1778 = vunpack.c.l.b16 %v1161
        %v1779 = vunpack.c.h.b16 %v1161
        %v1780 = vunpack.c.l.b16 %v1162
        %v1781 = vunpack.c.h.b16 %v1162
        %v1782 = vunpack.c.l.b16 %v1163
        %v1783 = vunpack.c.h.b16 %v1163
        %v1784 = vunpack.c.l.b16 %v1164
        %v1785 = vunpack.c.h.b16 %v1164
        %v1786 = vunpack.c.l.b16 %v1165
        %v1787 = vunpack.c.h.b16 %v1165
        %v1788 = vunpack.c.l.b16 %v1166
        %v1789 = vunpack.c.h.b16 %v1166
        %v1790 = vunpack.c.l.b16 %v1167
        %v1791 = vunpack.c.h.b16 %v1167
        %v1792 = vunpack.c.l.b16 %v1168
        %v1793 = vunpack.c.h.b16 %v1168
        %v1794 = vunpack.c.l.b16 %v1169
        %v1795 = vunpack.c.h.b16 %v1169
        %v1796 = vunpack.c.l.b16 %v1170
        %v1797 = vunpack.c.h.b16 %v1170
        %v1798 = vunpack.c.l.b16 %v1171
        %v1799 = vunpack.c.h.b16 %v1171
        %v1800 = vunpack.c.l.b16 %v1172
        %v1801 = vunpack.c.h.b16 %v1172
        %v1802 = vunpack.c.l.b16 %v1173
        %v1803 = vunpack.c.h.b16 %v1173
        %v1804 = vunpack.c.l.b16 %v1174
        %v1805 = vunpack.c.h.b16 %v1174
        %v1806 = vunpack.c.l.b16 %v1175
        %v1807 = vunpack.c.h.b16 %v1175
        %v1808 = vunpack.c.l.b16 %v1176
        %v1809 = vunpack.c.h.b16 %v1176
        %v1810 = vunpack.c.l.b16 %v1177
        %v1811 = vunpack.c.h.b16 %v1177
        %v1812 = vunpack.c.l.b16 %v1178
        %v1813 = vunpack.c.h.b16 %v1178
        %v1814 = vunpack.c.l.b16 %v1179
        %v1815 = vunpack.c.h.b16 %v1179
        %v1816 = vunpack.c.l.b16 %v1180
        %v1817 = vunpack.c.h.b16 %v1180
        %v1818 = vunpack.c.l.b16 %v1181
        %v1819 = vunpack.c.h.b16 %v1181
        %v1820 = vunpack.c.l.b16 %v1182
        %v1821 = vunpack.c.h.b16 %v1182
        %v1822 = vunpack.c.l.b16 %v1183
        %v1823 = vunpack.c.h.b16 %v1183
        %v1824 = vpack.c.b16 %v1452, %v1440
        %v1825 = vpack.c.b16 %v1453, %v1441
        %v1826 = vpack.c.b16 %v1454, %v1442
        %v1827 = vpack.c.b16 %v1455, %v1443
        %v1828 = vpack.c.b16 %v1456, %v1444
        %v1829 = vpack.c.b16 %v1457, %v1445
        %v1830 = vpack.c.b16 %v1458, %v1446
        %v1831 = vpack.c.b16 %v1459, %v1447
        %v1832 = vpack.c.b16 %v1460, %v1448
        %v1833 = vpack.c.b16 %v1461, %v1449
        %v1834 = vpack.c.b16 %v1462, %v1450
        %v1835 = vpack.c.b16 %v1463, %v1451
        %v1836 = vpack.c.b16 %v1476, %v1464
        %v1837 = vpack.c.b16 %v1477, %v1465
        %v1838 = vpack.c.b16 %v1478, %v1466
        %v1839 = vpack.c.b16 %v1479, %v1467
        %v1840 = vpack.c.b16 %v1480, %v1468
        %v1841 = vpack.c.b16 %v1481, %v1469
        %v1842 = vpack.c.b16 %v1482, %v1470
        %v1843 = vpack.c.b16 %v1483, %v1471
        %v1844 = vpack.c.b16 %v1484, %v1472
        %v1845 = vpack.c.b16 %v1485, %v1473
        %v1846 = vpack.c.b16 %v1486, %v1474
        %v1847 = vpack.c.b16 %v1487, %v1475
        %v1848 = vpack.c.b16 %v1500, %v1488
        %v1849 = vpack.c.b16 %v1501, %v1489
        %v1850 = vpack.c.b16 %v1502, %v1490
        %v1851 = vpack.c.b16 %v1503, %v1491
        %v1852 = vpack.c.b16 %v1504, %v1492
        %v1853 = vpack.c.b16 %v1505, %v1493
        %v1854 = vpack.c.b16 %v1506, %v1494
        %v1855 = vpack.c.b16 %v1507, %v1495
        %v1856 = vpack.c.b16 %v1508, %v1496
        %v1857 = vpack.c.b16 %v1509, %v1497
        %v1858 = vpack.c.b16 %v1510, %v1498
        %v1859 = vpack.c.b16 %v1511, %v1499
        %v1860 = vpack.c.b16 %v1524, %v1512
        %v1861 = vpack.c.b16 %v1525, %v1513
        %v1862 = vpack.c.b16 %v1526, %v1514
        %v1863 = vpack.c.b16 %v1527, %v1515
        %v1864 = vpack.c.b16 %v1528, %v1516
        %v1865 = vpack.c.b16 %v1529, %v1517
        %v1866 = vpack.c.b16 %v1530, %v1518
        %v1867 = vpack.c.b16 %v1531, %v1519
        %v1868 = vpack.c.b16 %v1532, %v1520
        %v1869 = vpack.c.b16 %v1533, %v1521
        %v1870 = vpack.c.b16 %v1534, %v1522
        %v1871 = vpack.c.b16 %v1535, %v1523
        %v1872 = vpack.c.b16 %v1548, %v1536
        %v1873 = vpack.c.b16 %v1549, %v1537
        %v1874 = vpack.c.b16 %v1550, %v1538
        %v1875 = vpack.c.b16 %v1551, %v1539
        %v1876 = vpack.c.b16 %v1552, %v1540
        %v1877 = vpack.c.b16 %v1553, %v1541
        %v1878 = vpack.c.b16 %v1554, %v1542
        %v1879 = vpack.c.b16 %v1555, %v1543
        %v1880 = vpack.c.b16 %v1556, %v1544
        %v1881 = vpack.c.b16 %v1557, %v1545
        %v1882 = vpack.c.b16 %v1558, %v1546
        %v1883 = vpack.c.b16 %v1559, %v1547
        %v1884 = vpack.c.b16 %v1572, %v1560
        %v1885 = vpack.c.b16 %v1573, %v1561
        %v1886 = vpack.c.b16 %v1574, %v1562
        %v1887 = vpack.c.b16 %v1575, %v1563
        %v1888 = vpack.c.b16 %v1576, %v1564
        %v1889 = vpack.c.b16 %v1577, %v1565
        %v1890 = vpack.c.b16 %v1578, %v1566
        %v1891 = vpack.c.b16 %v1579, %v1567
        %v1892 = vpack.c.b16 %v1580, %v1568
        %v1893 = vpack.c.b16 %v1581, %v1569
        %v1894 = vpack.c.b16 %v1582, %v1570
        %v1895 = vpack.c.b16 %v1583, %v1571
        %v1896 = vpack.c.b16 %v1596, %v1584
        %v1897 = vpack.c.b16 %v1597, %v1585
        %v1898 = vpack.c.b16 %v1598, %v1586
        %v1899 = vpack.c.b16 %v1599, %v1587
        %v1900 = vpack.c.b16 %v1600, %v1588
        %v1901 = vpack.c.b16 %v1601, %v1589
        %v1902 = vpack.c.b16 %v1602, %v1590
        %v1903 = vpack.c.b16 %v1603, %v1591
        %v1904 = vpack.c.b16 %v1604, %v1592
        %v1905 = vpack.c.b16 %v1605, %v1593
        %v1906 = vpack.c.b16 %v1606, %v1594
        %v1907 = vpack.c.b16 %v1607, %v1595
        %v1908 = vpack.c.b16 %v1620, %v1608
        %v1909 = vpack.c.b16 %v1621, %v1609
        %v1910 = vpack.c.b16 %v1622, %v1610
        %v1911 = vpack.c.b16 %v1623, %v1611
        %v1912 = vpack.c.b16 %v1624, %v1612
        %v1913 = vpack.c.b16 %v1625, %v1613
        %v1914 = vpack.c.b16 %v1626, %v1614
        %v1915 = vpack.c.b16 %v1627, %v1615
        %v1916 = vpack.c.b16 %v1628, %v1616
        %v1917 = vpack.c.b16 %v1629, %v1617
        %v1918 = vpack.c.b16 %v1630, %v1618
        %v1919 = vpack.c.b16 %v1631, %v1619
        %v1920 = vpack.c.b16 %v1644, %v1632
        %v1921 = vpack.c.b16 %v1645, %v1633
        %v1922 = vpack.c.b16 %v1646, %v1634
        %v1923 = vpack.c.b16 %v1647, %v1635
        %v1924 = vpack.c.b16 %v1648, %v1636
        %v1925 = vpack.c.b16 %v1649, %v1637
        %v1926 = vpack.c.b16 %v1650, %v1638
        %v1927 = vpack.c.b16 %v1651, %v1639
        %v1928 = vpack.c.b16 %v1652, %v1640
        %v1929 = vpack.c.b16 %v1653, %v1641
        %v1930 = vpack.c.b16 %v1654, %v1642
        %v1931 = vpack.c.b16 %v1655, %v1643
        %v1932 = vpack.c.b16 %v1668, %v1656
        %v1933 = vpack.c.b16 %v1669, %v1657
        %v1934 = vpack.c.b16 %v1670, %v1658
        %v1935 = vpack.c.b16 %v1671, %v1659
        %v1936 = vpack.c.b16 %v1672, %v1660
        %v1937 = vpack.c.b16 %v1673, %v1661
        %v1938 = vpack.c.b16 %v1674, %v1662
        %v1939 = vpack.c.b16 %v1675, %v1663
        %v1940 = vpack.c.b16 %v1676, %v1664
        %v1941 = vpack.c.b16 %v1677, %v1665
        %v1942 = vpack.c.b16 %v1678, %v1666
        %v1943 = vpack.c.b16 %v1679, %v1667
        %v1944 = vpack.c.b16 %v1692, %v1680
        %v1945 = vpack.c.b16 %v1693, %v1681
        %v1946 = vpack.c.b16 %v1694, %v1682
        %v1947 = vpack.c.b16 %v1695, %v1683
        %v1948 = vpack.c.b16 %v1696, %v1684
        %v1949 = vpack.c.b16 %v1697, %v1685
        %v1950 = vpack.c.b16 %v1698, %v1686
        %v1951 = vpack.c.b16 %v1699, %v1687
        %v1952 = vpack.c.b16 %v1700, %v1688
        %v1953 = vpack.c.b16 %v1701, %v1689
        %v1954 = vpack.c.b16 %v1702, %v1690
        %v1955 = vpack.c.b16 %v1703, %v1691
        %v1956 = vpack.c.b16 %v1716, %v1704
        %v1957 = vpack.c.b16 %v1717, %v1705
        %v1958 = vpack.c.b16 %v1718, %v1706
        %v1959 = vpack.c.b16 %v1719, %v1707
        %v1960 = vpack.c.b16 %v1720, %v1708
        %v1961 = vpack.c.b16 %v1721, %v1709
        %v1962 = vpack.c.b16 %v1722, %v1710
        %v1963 = vpack.c.b16 %v1723, %v1711
        %v1964 = vpack.c.b16 %v1724, %v1712
        %v1965 = vpack.c.b16 %v1725, %v1713
        %v1966 = vpack.c.b16 %v1726, %v1714
        %v1967 = vpack.c.b16 %v1727, %v1715
        %v1968 = vpack.c.b16 %v1740, %v1728
        %v1969 = vpack.c.b16 %v1741, %v1729
        %v1970 = vpack.c.b16 %v1742, %v1730
        %v1971 = vpack.c.b16 %v1743, %v1731
        %v1972 = vpack.c.b16 %v1744, %v1732
        %v1973 = vpack.c.b16 %v1745, %v1733
        %v1974 = vpack.c.b16 %v1746, %v1734
        %v1975 = vpack.c.b16 %v1747, %v1735
        %v1976 = vpack.c.b16 %v1748, %v1736
        %v1977 = vpack.c.b16 %v1749, %v1737
        %v1978 = vpack.c.b16 %v1750, %v1738
        %v1979 = vpack.c.b16 %v1751, %v1739
        %v1980 = vpack.c.b16 %v1764, %v1752
        %v1981 = vpack.c.b16 %v1765, %v1753
        %v1982 = vpack.c.b16 %v1766, %v1754
        %v1983 = vpack.c.b16 %v1767, %v1755
        %v1984 = vpack.c.b16 %v1768, %v1756
        %v1985 = vpack.c.b16 %v1769, %v1757
        %v1986 = vpack.c.b16 %v1770, %v1758
        %v1987 = vpack.c.b16 %v1771, %v1759
        %v1988 = vpack.c.b16 %v1772, %v1760
        %v1989 = vpack.c.b16 %v1773, %v1761
        %v1990 = vpack.c.b16 %v1774, %v1762
        %v1991 = vpack.c.b16 %v1775, %v1763
        %v1992 = vpack.c.b16 %v1788, %v1776
        %v1993 = vpack.c.b16 %v1789, %v1777
        %v1994 = vpack.c.b16 %v1790, %v1778
        %v1995 = vpack.c.b16 %v1791, %v1779
        %v1996 = vpack.c.b16 %v1792, %v1780
        %v1997 = vpack.c.b16 %v1793, %v1781
        %v1998 = vpack.c.b16 %v1794, %v1782
        %v1999 = vpack.c.b16 %v1795, %v1783
        %v2000 = vpack.c.b16 %v1796, %v1784
        %v2001 = vpack.c.b16 %v1797, %v1785
        %v2002 = vpack.c.b16 %v1798, %v1786
        %v2003 = vpack.c.b16 %v1799, %v1787
        %v2004 = vpack.c.b16 %v1812, %v1800
        %v2005 = vpack.c.b16 %v1813, %v1801
        %v2006 = vpack.c.b16 %v1814, %v1802
        %v2007 = vpack.c.b16 %v1815, %v1803
        %v2008 = vpack.c.b16 %v1816, %v1804
        %v2009 = vpack.c.b16 %v1817, %v1805
        %v2010 = vpack.c.b16 %v1818, %v1806
        %v2011 = vpack.c.b16 %v1819, %v1807
        %v2012 = vpack.c.b16 %v1820, %v1808
        %v2013 = vpack.c.b16 %v1821, %v1809
        %v2014 = vpack.c.b16 %v1822, %v1810
        %v2015 = vpack.c.b16 %v1823, %v1811
        %2208 = vmatprep.subr.bf16.mxu0 %v1825
        %2209 = vmatpush1.bf16.msra.mxu0 %v1824
        %2210 = vmatprep.subr.bf16.mxu0 %v1837
        %2211 = vmatpush1.bf16.msra.mxu0 %v1836
        %2212 = vmatprep.subr.bf16.mxu0 %v1849
        %2213 = vmatpush1.bf16.msra.mxu0 %v1848
        %2214 = vmatprep.subr.bf16.mxu0 %v1861
        %2215 = vmatpush1.bf16.msra.mxu0 %v1860
        %2216 = vmatprep.subr.bf16.mxu0 %v1873
        %2217 = vmatpush1.bf16.msra.mxu0 %v1872
        %2218 = vmatprep.subr.bf16.mxu0 %v1885
        %2219 = vmatpush1.bf16.msra.mxu0 %v1884
        %2220 = vmatprep.subr.bf16.mxu0 %v1897
        %2221 = vmatpush1.bf16.msra.mxu0 %v1896
        %2222 = vmatprep.subr.bf16.mxu0 %v1909
        %2223 = vmatpush1.bf16.msra.mxu0 %v1908
        %2224 = vmatprep.subr.bf16.mxu0 %v1921
        %2225 = vmatpush1.bf16.msra.mxu0 %v1920
        %2226 = vmatprep.subr.bf16.mxu0 %v1933
        %2227 = vmatpush1.bf16.msra.mxu0 %v1932
        %2228 = vmatprep.subr.bf16.mxu0 %v1945
        %2229 = vmatpush1.bf16.msra.mxu0 %v1944
        %2230 = vmatprep.subr.bf16.mxu0 %v1957
        %2231 = vmatpush1.bf16.msra.mxu0 %v1956
        %2232 = vmatprep.subr.bf16.mxu0 %v1969
        %2233 = vmatpush1.bf16.msra.mxu0 %v1968
        %2234 = vmatprep.subr.bf16.mxu0 %v1981
        %2235 = vmatpush1.bf16.msra.mxu0 %v1980
        %2236 = vmatprep.subr.bf16.mxu0 %v1993
        %2237 = vmatpush1.bf16.msra.mxu0 %v1992
        %2238 = vmatprep.subr.bf16.mxu0 %v2005
        %2239 = vmatpush1.bf16.msra.mxu0 %v2004
        %2240 = vmatprep.mubr.bf16.mxu0 %v991
        %2241 = vmatmul.mubr.bf16.gmra.mrb[0].mxu0 %v990
        %v2242 = vpop.f32.mrb[0].mxu0
        %v2243 = vadd.f32 %v1191, %v2242
        %v2244 = vpop.f32.mrb[0].mxu0
        %v2245 = vadd.f32 %v1195, %v2244
        %v2246 = vpop.f32.mrb[0].mxu0
        %v2247 = vadd.f32 %v1191, %v2246
        %v2248 = vpop.f32.mrb[0].mxu0
        %v2249 = vadd.f32 %v1195, %v2248
        %2250 = vdwg.mxu0
        %2251 = vmatprep.subr.bf16.mxu0 %v1827
        %2252 = vmatpush1.bf16.msra.mxu0 %v1826
        %2253 = vmatprep.subr.bf16.mxu0 %v1839
        %2254 = vmatpush1.bf16.msra.mxu0 %v1838
        %2255 = vmatprep.subr.bf16.mxu0 %v1851
        %2256 = vmatpush1.bf16.msra.mxu0 %v1850
        %2257 = vmatprep.subr.bf16.mxu0 %v1863
        %2258 = vmatpush1.bf16.msra.mxu0 %v1862
        %2259 = vmatprep.subr.bf16.mxu0 %v1875
        %2260 = vmatpush1.bf16.msra.mxu0 %v1874
        %2261 = vmatprep.subr.bf16.mxu0 %v1887
        %2262 = vmatpush1.bf16.msra.mxu0 %v1886
        %2263 = vmatprep.subr.bf16.mxu0 %v1899
        %2264 = vmatpush1.bf16.msra.mxu0 %v1898
        %2265 = vmatprep.subr.bf16.mxu0 %v1911
        %2266 = vmatpush1.bf16.msra.mxu0 %v1910
        %2267 = vmatprep.subr.bf16.mxu0 %v1923
        %2268 = vmatpush1.bf16.msra.mxu0 %v1922
        %2269 = vmatprep.subr.bf16.mxu0 %v1935
        %2270 = vmatpush1.bf16.msra.mxu0 %v1934
        %2271 = vmatprep.subr.bf16.mxu0 %v1947
        %2272 = vmatpush1.bf16.msra.mxu0 %v1946
        %2273 = vmatprep.subr.bf16.mxu0 %v1959
        %2274 = vmatpush1.bf16.msra.mxu0 %v1958
        %2275 = vmatprep.subr.bf16.mxu0 %v1971
        %2276 = vmatpush1.bf16.msra.mxu0 %v1970
        %2277 = vmatprep.subr.bf16.mxu0 %v1983
        %2278 = vmatpush1.bf16.msra.mxu0 %v1982
        %2279 = vmatprep.subr.bf16.mxu0 %v1995
        %2280 = vmatpush1.bf16.msra.mxu0 %v1994
        %2281 = vmatprep.subr.bf16.mxu0 %v2007
        %2282 = vmatpush1.bf16.msra.mxu0 %v2006
        %2283 = vmatprep.mubr.bf16.mxu0 %v991
        %2284 = vmatmul.mubr.bf16.gmra.mrb[0].mxu0 %v990
        %v2285 = vpop.f32.mrb[0].mxu0
        %v2286 = vadd.f32 %v1199, %v2285
        %v2287 = vpop.f32.mrb[0].mxu0
        %v2288 = vadd.f32 %v1203, %v2287
        %v2289 = vpop.f32.mrb[0].mxu0
        %v2290 = vadd.f32 %v1199, %v2289
        %v2291 = vpop.f32.mrb[0].mxu0
        %v2292 = vadd.f32 %v1203, %v2291
        %2293 = vdwg.mxu0
        %2294 = vmatprep.subr.bf16.mxu0 %v1829
        %2295 = vmatpush1.bf16.msra.mxu0 %v1828
        %2296 = vmatprep.subr.bf16.mxu0 %v1841
        %2297 = vmatpush1.bf16.msra.mxu0 %v1840
        %2298 = vmatprep.subr.bf16.mxu0 %v1853
        %2299 = vmatpush1.bf16.msra.mxu0 %v1852
        %2300 = vmatprep.subr.bf16.mxu0 %v1865
        %2301 = vmatpush1.bf16.msra.mxu0 %v1864
        %2302 = vmatprep.subr.bf16.mxu0 %v1877
        %2303 = vmatpush1.bf16.msra.mxu0 %v1876
        %2304 = vmatprep.subr.bf16.mxu0 %v1889
        %2305 = vmatpush1.bf16.msra.mxu0 %v1888
        %2306 = vmatprep.subr.bf16.mxu0 %v1901
        %2307 = vmatpush1.bf16.msra.mxu0 %v1900
        %2308 = vmatprep.subr.bf16.mxu0 %v1913
        %2309 = vmatpush1.bf16.msra.mxu0 %v1912
        %2310 = vmatprep.subr.bf16.mxu0 %v1925
        %2311 = vmatpush1.bf16.msra.mxu0 %v1924
        %2312 = vmatprep.subr.bf16.mxu0 %v1937
        %2313 = vmatpush1.bf16.msra.mxu0 %v1936
        %2314 = vmatprep.subr.bf16.mxu0 %v1949
        %2315 = vmatpush1.bf16.msra.mxu0 %v1948
        %2316 = vmatprep.subr.bf16.mxu0 %v1961
        %2317 = vmatpush1.bf16.msra.mxu0 %v1960
        %2318 = vmatprep.subr.bf16.mxu0 %v1973
        %2319 = vmatpush1.bf16.msra.mxu0 %v1972
        %2320 = vmatprep.subr.bf16.mxu0 %v1985
        %2321 = vmatpush1.bf16.msra.mxu0 %v1984
        %2322 = vmatprep.subr.bf16.mxu0 %v1997
        %2323 = vmatpush1.bf16.msra.mxu0 %v1996
        %2324 = vmatprep.subr.bf16.mxu0 %v2009
        %2325 = vmatpush1.bf16.msra.mxu0 %v2008
        %2326 = vmatprep.mubr.bf16.mxu0 %v991
        %2327 = vmatmul.mubr.bf16.gmra.mrb[0].mxu0 %v990
        %v2328 = vpop.f32.mrb[0].mxu0
        %v2329 = vadd.f32 %v1207, %v2328
        %v2330 = vpop.f32.mrb[0].mxu0
        %v2331 = vadd.f32 %v1211, %v2330
        %v2332 = vpop.f32.mrb[0].mxu0
        %v2333 = vadd.f32 %v1207, %v2332
        %v2334 = vpop.f32.mrb[0].mxu0
        %v2335 = vadd.f32 %v1211, %v2334
        %2336 = vdwg.mxu0
        %2337 = vmatprep.subr.bf16.mxu0 %v1831
        %2338 = vmatpush1.bf16.msra.mxu0 %v1830
        %2339 = vmatprep.subr.bf16.mxu0 %v1843
        %2340 = vmatpush1.bf16.msra.mxu0 %v1842
        %2341 = vmatprep.subr.bf16.mxu0 %v1855
        %2342 = vmatpush1.bf16.msra.mxu0 %v1854
        %2343 = vmatprep.subr.bf16.mxu0 %v1867
        %2344 = vmatpush1.bf16.msra.mxu0 %v1866
        %2345 = vmatprep.subr.bf16.mxu0 %v1879
        %2346 = vmatpush1.bf16.msra.mxu0 %v1878
        %2347 = vmatprep.subr.bf16.mxu0 %v1891
        %2348 = vmatpush1.bf16.msra.mxu0 %v1890
        %2349 = vmatprep.subr.bf16.mxu0 %v1903
        %2350 = vmatpush1.bf16.msra.mxu0 %v1902
        %2351 = vmatprep.subr.bf16.mxu0 %v1915
        %2352 = vmatpush1.bf16.msra.mxu0 %v1914
        %2353 = vmatprep.subr.bf16.mxu0 %v1927
        %2354 = vmatpush1.bf16.msra.mxu0 %v1926
        %2355 = vmatprep.subr.bf16.mxu0 %v1939
        %2356 = vmatpush1.bf16.msra.mxu0 %v1938
        %2357 = vmatprep.subr.bf16.mxu0 %v1951
        %2358 = vmatpush1.bf16.msra.mxu0 %v1950
        %2359 = vmatprep.subr.bf16.mxu0 %v1963
        %2360 = vmatpush1.bf16.msra.mxu0 %v1962
        %2361 = vmatprep.subr.bf16.mxu0 %v1975
        %2362 = vmatpush1.bf16.msra.mxu0 %v1974
        %2363 = vmatprep.subr.bf16.mxu0 %v1987
        %2364 = vmatpush1.bf16.msra.mxu0 %v1986
        %2365 = vmatprep.subr.bf16.mxu0 %v1999
        %2366 = vmatpush1.bf16.msra.mxu0 %v1998
        %2367 = vmatprep.subr.bf16.mxu0 %v2011
        %2368 = vmatpush1.bf16.msra.mxu0 %v2010
        %2369 = vmatprep.mubr.bf16.mxu0 %v991
        %2370 = vmatmul.mubr.bf16.gmra.mrb[0].mxu0 %v990
        %v2371 = vpop.f32.mrb[0].mxu0
        %v2372 = vadd.f32 %v1215, %v2371
        %v2373 = vpop.f32.mrb[0].mxu0
        %v2374 = vadd.f32 %v1219, %v2373
        %v2375 = vpop.f32.mrb[0].mxu0
        %v2376 = vadd.f32 %v1215, %v2375
        %v2377 = vpop.f32.mrb[0].mxu0
        %v2378 = vadd.f32 %v1219, %v2377
        %2379 = vdwg.mxu0
        %2380 = vmatprep.subr.bf16.mxu0 %v1833
        %2381 = vmatpush1.bf16.msra.mxu0 %v1832
        %2382 = vmatprep.subr.bf16.mxu0 %v1845
        %2383 = vmatpush1.bf16.msra.mxu0 %v1844
        %2384 = vmatprep.subr.bf16.mxu0 %v1857
        %2385 = vmatpush1.bf16.msra.mxu0 %v1856
        %2386 = vmatprep.subr.bf16.mxu0 %v1869
        %2387 = vmatpush1.bf16.msra.mxu0 %v1868
        %2388 = vmatprep.subr.bf16.mxu0 %v1881
        %2389 = vmatpush1.bf16.msra.mxu0 %v1880
        %2390 = vmatprep.subr.bf16.mxu0 %v1893
        %2391 = vmatpush1.bf16.msra.mxu0 %v1892
        %2392 = vmatprep.subr.bf16.mxu0 %v1905
        %2393 = vmatpush1.bf16.msra.mxu0 %v1904
        %2394 = vmatprep.subr.bf16.mxu0 %v1917
        %2395 = vmatpush1.bf16.msra.mxu0 %v1916
        %2396 = vmatprep.subr.bf16.mxu0 %v1929
        %2397 = vmatpush1.bf16.msra.mxu0 %v1928
        %2398 = vmatprep.subr.bf16.mxu0 %v1941
        %2399 = vmatpush1.bf16.msra.mxu0 %v1940
        %2400 = vmatprep.subr.bf16.mxu0 %v1953
        %2401 = vmatpush1.bf16.msra.mxu0 %v1952
        %2402 = vmatprep.subr.bf16.mxu0 %v1965
        %2403 = vmatpush1.bf16.msra.mxu0 %v1964
        %2404 = vmatprep.subr.bf16.mxu0 %v1977
        %2405 = vmatpush1.bf16.msra.mxu0 %v1976
        %2406 = vmatprep.subr.bf16.mxu0 %v1989
        %2407 = vmatpush1.bf16.msra.mxu0 %v1988
        %2408 = vmatprep.subr.bf16.mxu0 %v2001
        %2409 = vmatpush1.bf16.msra.mxu0 %v2000
        %2410 = vmatprep.subr.bf16.mxu0 %v2013
        %2411 = vmatpush1.bf16.msra.mxu0 %v2012
        %2412 = vmatprep.mubr.bf16.mxu0 %v991
        %2413 = vmatmul.mubr.bf16.gmra.mrb[0].mxu0 %v990
        %v2414 = vpop.f32.mrb[0].mxu0
        %v2415 = vadd.f32 %v1223, %v2414
        %v2416 = vpop.f32.mrb[0].mxu0
        %v2417 = vadd.f32 %v1227, %v2416
        %v2418 = vpop.f32.mrb[0].mxu0
        %v2419 = vadd.f32 %v1223, %v2418
        %v2420 = vpop.f32.mrb[0].mxu0
        %v2421 = vadd.f32 %v1227, %v2420
        %2422 = vdwg.mxu0
        %2423 = vmatprep.subr.bf16.mxu0 %v1835
        %2424 = vmatpush1.bf16.msra.mxu0 %v1834
        %2425 = vmatprep.subr.bf16.mxu0 %v1847
        %2426 = vmatpush1.bf16.msra.mxu0 %v1846
        %2427 = vmatprep.subr.bf16.mxu0 %v1859
        %2428 = vmatpush1.bf16.msra.mxu0 %v1858
        %2429 = vmatprep.subr.bf16.mxu0 %v1871
        %2430 = vmatpush1.bf16.msra.mxu0 %v1870
        %2431 = vmatprep.subr.bf16.mxu0 %v1883
        %2432 = vmatpush1.bf16.msra.mxu0 %v1882
        %2433 = vmatprep.subr.bf16.mxu0 %v1895
        %2434 = vmatpush1.bf16.msra.mxu0 %v1894
        %2435 = vmatprep.subr.bf16.mxu0 %v1907
        %2436 = vmatpush1.bf16.msra.mxu0 %v1906
        %2437 = vmatprep.subr.bf16.mxu0 %v1919
        %2438 = vmatpush1.bf16.msra.mxu0 %v1918
        %2439 = vmatprep.subr.bf16.mxu0 %v1931
        %2440 = vmatpush1.bf16.msra.mxu0 %v1930
        %2441 = vmatprep.subr.bf16.mxu0 %v1943
        %2442 = vmatpush1.bf16.msra.mxu0 %v1942
        %2443 = vmatprep.subr.bf16.mxu0 %v1955
        %2444 = vmatpush1.bf16.msra.mxu0 %v1954
        %2445 = vmatprep.subr.bf16.mxu0 %v1967
        %2446 = vmatpush1.bf16.msra.mxu0 %v1966
        %2447 = vmatprep.subr.bf16.mxu0 %v1979
        %2448 = vmatpush1.bf16.msra.mxu0 %v1978
        %2449 = vmatprep.subr.bf16.mxu0 %v1991
        %2450 = vmatpush1.bf16.msra.mxu0 %v1990
        %2451 = vmatprep.subr.bf16.mxu0 %v2003
        %2452 = vmatpush1.bf16.msra.mxu0 %v2002
        %2453 = vmatprep.subr.bf16.mxu0 %v2015
        %2454 = vmatpush1.bf16.msra.mxu0 %v2014
        %2455 = vmatprep.mubr.bf16.mxu0 %v991
        %2456 = vmatmul.mubr.bf16.gmra.mrb[0].mxu0 %v990
        %v2457 = vpop.f32.mrb[0].mxu0
        %v2458 = vadd.f32 %v1231, %v2457
        %v2459 = vpop.f32.mrb[0].mxu0
        %v2460 = vadd.f32 %v1235, %v2459
        %v2461 = vpop.f32.mrb[0].mxu0
        %v2462 = vadd.f32 %v1231, %v2461
        %v2463 = vpop.f32.mrb[0].mxu0
        %v2464 = vadd.f32 %v1235, %v2463
        %2465 = vdwg.mxu0
        %v2466 = vpack.c.bf16 %v2247, %v2243
        %v2467 = vpack.c.bf16 %v2249, %v2245
        %v2468 = vpack.c.bf16 %v2290, %v2286
        %v2469 = vpack.c.bf16 %v2292, %v2288
        %v2470 = vpack.c.bf16 %v2333, %v2329
        %v2471 = vpack.c.bf16 %v2335, %v2331
        %v2472 = vpack.c.bf16 %v2376, %v2372
        %v2473 = vpack.c.bf16 %v2378, %v2374
        %v2474 = vpack.c.bf16 %v2419, %v2415
        %v2475 = vpack.c.bf16 %v2421, %v2417
        %v2476 = vpack.c.bf16 %v2462, %v2458
        %v2477 = vpack.c.bf16 %v2464, %v2460
        %v2478 = vld [vmem:[#allocation6] sm:$0xff]
        %2479 = vmatprep.subr.bf16.mxu0 %v2471
        %2480 = vmatpush1.bf16.xpose.msra.mxu0 %v2470
        %2481 = vmatprep.subr.bf16.mxu0 0
        %2482 = vmatpush1.bf16.xpose.msra.mxu0 0
        %2483 = vmatprep.subr.bf16.mxu0 0
        %2484 = vmatpush1.bf16.xpose.msra.mxu0 0
        %2485 = vmatprep.subr.bf16.mxu0 0
        %2486 = vmatpush1.bf16.xpose.msra.mxu0 0
        %2487 = vmatprep.subr.bf16.mxu0 0
        %2488 = vmatpush1.bf16.xpose.msra.mxu0 0
        %2489 = vmatprep.subr.bf16.mxu0 0
        %2490 = vmatpush1.bf16.xpose.msra.mxu0 0
        %2491 = vmatprep.subr.bf16.mxu0 0
        %2492 = vmatpush1.bf16.xpose.msra.mxu0 0
        %2493 = vmatprep.subr.bf16.mxu0 0
        %2494 = vmatpush1.bf16.xpose.msra.mxu0 0
        %2495 = vmatprep.subr.bf16.mxu0 0
        %2496 = vmatpush1.bf16.xpose.msra.mxu0 0
        %2497 = vmatprep.subr.bf16.mxu0 0
        %2498 = vmatpush1.bf16.xpose.msra.mxu0 0
        %2499 = vmatprep.subr.bf16.mxu0 0
        %2500 = vmatpush1.bf16.xpose.msra.mxu0 0
        %2501 = vmatprep.subr.bf16.mxu0 0
        %2502 = vmatpush1.bf16.xpose.msra.mxu0 0
        %2503 = vmatprep.subr.bf16.mxu0 0
        %2504 = vmatpush1.bf16.xpose.msra.mxu0 0
        %2505 = vmatprep.subr.bf16.mxu0 0
        %2506 = vmatpush1.bf16.xpose.msra.mxu0 0
        %2507 = vmatprep.subr.bf16.mxu0 0
        %2508 = vmatpush1.bf16.xpose.msra.mxu0 0
        %2509 = vmatprep.subr.bf16.mxu0 0
        %2510 = vmatpush1.bf16.xpose.msra.mxu0 0
        %2511 = vmatprep.mubr.bf16.mxu0 %v2467
        %2512 = vmatmul.mubr.bf16.gmra.mrb[0].mxu0 %v2466
        %v2513 = vpop.f32.mrb[0].mxu0
        %v2514 = vadd.f32 %v2478, %v2513
        %v2515 = vpop.f32.mrb[0].mxu0
        %v2516 = vpop.f32.mrb[0].mxu0
        %v2517 = vpop.f32.mrb[0].mxu0
        %2518 = vdwg.mxu0
        %vm2519 = vcmask 64512
        %v2520 = vsel %vm2519, %v2514, -inf
        %2521 = vmax.xlane.f32.xlu0 %v2520
        %v2522 = vpop.xlane.xlu0 %2521
        %v2523 = vsub.f32 %v2514, %v2522
        %v2524 = vmul.f32 %v2523, 1.442695
        %v2525 = vpow.pop %v2524
        %v2526 = vsel %vm2519, %v2525, 0.0
        %2527 = vadd.xlane.f32.xlu0 %v2526
        %v2528 = vpop.xlane.xlu0 %2527
        %v2529 = vrcp.pop %v2528
        %v2530 = vmul.f32 %v2525, %v2529
        %v2531 = vpack.c.bf16 %v2530, %v2530
        %v2533 = vsel %vm2519, %v2531, 0
        %vm2535 = vcmask 1043456
        %v2537 = vsel %vm2535, %v2474, 0
        %v2540 = vsel %vm2535, %v2475, 0
        %2542 = vmatprep.subr.bf16.mxu0 %v2540
        %2543 = vmatpush1.bf16.msra.mxu0 %v2537
        %2544 = vmatprep.subr.bf16.mxu0 0
        %2545 = vmatpush1.bf16.msra.mxu0 0
        %2546 = vmatprep.subr.bf16.mxu0 0
        %2547 = vmatpush1.bf16.msra.mxu0 0
        %2548 = vmatprep.subr.bf16.mxu0 0
        %2549 = vmatpush1.bf16.msra.mxu0 0
        %2550 = vmatprep.subr.bf16.mxu0 0
        %2551 = vmatpush1.bf16.msra.mxu0 0
        %2552 = vmatprep.subr.bf16.mxu0 0
        %2553 = vmatpush1.bf16.msra.mxu0 0
        %2554 = vmatprep.subr.bf16.mxu0 0
        %2555 = vmatpush1.bf16.msra.mxu0 0
        %2556 = vmatprep.subr.bf16.mxu0 0
        %2557 = vmatpush1.bf16.msra.mxu0 0
        %2558 = vmatprep.subr.bf16.mxu0 0
        %2559 = vmatpush1.bf16.msra.mxu0 0
        %2560 = vmatprep.subr.bf16.mxu0 0
        %2561 = vmatpush1.bf16.msra.mxu0 0
        %2562 = vmatprep.subr.bf16.mxu0 0
        %2563 = vmatpush1.bf16.msra.mxu0 0
        %2564 = vmatprep.subr.bf16.mxu0 0
        %2565 = vmatpush1.bf16.msra.mxu0 0
        %2566 = vmatprep.subr.bf16.mxu0 0
        %2567 = vmatpush1.bf16.msra.mxu0 0
        %2568 = vmatprep.subr.bf16.mxu0 0
        %2569 = vmatpush1.bf16.msra.mxu0 0
        %2570 = vmatprep.subr.bf16.mxu0 0
        %2571 = vmatpush1.bf16.msra.mxu0 0
        %2572 = vmatprep.subr.bf16.mxu0 0
        %2573 = vmatpush1.bf16.msra.mxu0 0
        %2574 = vmatprep.mubr.bf16.mxu0 0
        %2575 = vmatmul.mubr.bf16.gmra.mrb[0].mxu0 %v2533
        %v2576 = vpop.f32.mrb[0].mxu0
        %v2577 = vadd.f32 0.0, %v2576
        %v2578 = vpop.f32.mrb[0].mxu0
        %v2579 = vadd.f32 0.0, %v2578
        %v2580 = vpop.f32.mrb[0].mxu0
        %v2581 = vpop.f32.mrb[0].mxu0
        %2582 = vdwg.mxu0
        %s2583 = scalar_lea.vmem [#allocation6], 8
        %v2584 = vld [vmem:[%s2583] sm:$0xff]
        %2585 = vmatprep.subr.bf16.mxu0 %v2473
        %2586 = vmatpush1.bf16.xpose.msra.mxu0 %v2472
        %2587 = vmatprep.subr.bf16.mxu0 0
        %2588 = vmatpush1.bf16.xpose.msra.mxu0 0
        %2589 = vmatprep.subr.bf16.mxu0 0
        %2590 = vmatpush1.bf16.xpose.msra.mxu0 0
        %2591 = vmatprep.subr.bf16.mxu0 0
        %2592 = vmatpush1.bf16.xpose.msra.mxu0 0
        %2593 = vmatprep.subr.bf16.mxu0 0
        %2594 = vmatpush1.bf16.xpose.msra.mxu0 0
        %2595 = vmatprep.subr.bf16.mxu0 0
        %2596 = vmatpush1.bf16.xpose.msra.mxu0 0
        %2597 = vmatprep.subr.bf16.mxu0 0
        %2598 = vmatpush1.bf16.xpose.msra.mxu0 0
        %2599 = vmatprep.subr.bf16.mxu0 0
        %2600 = vmatpush1.bf16.xpose.msra.mxu0 0
        %2601 = vmatprep.subr.bf16.mxu0 0
        %2602 = vmatpush1.bf16.xpose.msra.mxu0 0
        %2603 = vmatprep.subr.bf16.mxu0 0
        %2604 = vmatpush1.bf16.xpose.msra.mxu0 0
        %2605 = vmatprep.subr.bf16.mxu0 0
        %2606 = vmatpush1.bf16.xpose.msra.mxu0 0
        %2607 = vmatprep.subr.bf16.mxu0 0
        %2608 = vmatpush1.bf16.xpose.msra.mxu0 0
        %2609 = vmatprep.subr.bf16.mxu0 0
        %2610 = vmatpush1.bf16.xpose.msra.mxu0 0
        %2611 = vmatprep.subr.bf16.mxu0 0
        %2612 = vmatpush1.bf16.xpose.msra.mxu0 0
        %2613 = vmatprep.subr.bf16.mxu0 0
        %2614 = vmatpush1.bf16.xpose.msra.mxu0 0
        %2615 = vmatprep.subr.bf16.mxu0 0
        %2616 = vmatpush1.bf16.xpose.msra.mxu0 0
        %2617 = vmatprep.mubr.bf16.mxu0 %v2469
        %2618 = vmatmul.mubr.bf16.gmra.mrb[0].mxu0 %v2468
        %v2619 = vpop.f32.mrb[0].mxu0
        %v2620 = vadd.f32 %v2584, %v2619
        %v2621 = vpop.f32.mrb[0].mxu0
        %v2622 = vpop.f32.mrb[0].mxu0
        %v2623 = vpop.f32.mrb[0].mxu0
        %2624 = vdwg.mxu0
        %v2625 = vsel %vm2519, %v2620, -inf
        %2626 = vmax.xlane.f32.xlu0 %v2625
        %v2627 = vpop.xlane.xlu0 %2626
        %v2628 = vsub.f32 %v2620, %v2627
        %v2629 = vmul.f32 %v2628, 1.442695
        %v2630 = vpow.pop %v2629
        %v2631 = vsel %vm2519, %v2630, 0.0
        %2632 = vadd.xlane.f32.xlu0 %v2631
        %v2633 = vpop.xlane.xlu0 %2632
        %v2634 = vrcp.pop %v2633
        %v2635 = vmul.f32 %v2630, %v2634
        %v2636 = vpack.c.bf16 %v2635, %v2635
        %v2638 = vsel %vm2519, %v2636, 0
        %v2641 = vsel %vm2535, %v2476, 0
        %v2644 = vsel %vm2535, %v2477, 0
        %2646 = vmatprep.subr.bf16.mxu0 %v2644
        %2647 = vmatpush1.bf16.msra.mxu0 %v2641
        %2648 = vmatprep.subr.bf16.mxu0 0
        %2649 = vmatpush1.bf16.msra.mxu0 0
        %2650 = vmatprep.subr.bf16.mxu0 0
        %2651 = vmatpush1.bf16.msra.mxu0 0
        %2652 = vmatprep.subr.bf16.mxu0 0
        %2653 = vmatpush1.bf16.msra.mxu0 0
        %2654 = vmatprep.subr.bf16.mxu0 0
        %2655 = vmatpush1.bf16.msra.mxu0 0
        %2656 = vmatprep.subr.bf16.mxu0 0
        %2657 = vmatpush1.bf16.msra.mxu0 0
        %2658 = vmatprep.subr.bf16.mxu0 0
        %2659 = vmatpush1.bf16.msra.mxu0 0
        %2660 = vmatprep.subr.bf16.mxu0 0
        %2661 = vmatpush1.bf16.msra.mxu0 0
        %2662 = vmatprep.subr.bf16.mxu0 0
        %2663 = vmatpush1.bf16.msra.mxu0 0
        %2664 = vmatprep.subr.bf16.mxu0 0
        %2665 = vmatpush1.bf16.msra.mxu0 0
        %2666 = vmatprep.subr.bf16.mxu0 0
        %2667 = vmatpush1.bf16.msra.mxu0 0
        %2668 = vmatprep.subr.bf16.mxu0 0
        %2669 = vmatpush1.bf16.msra.mxu0 0
        %2670 = vmatprep.subr.bf16.mxu0 0
        %2671 = vmatpush1.bf16.msra.mxu0 0
        %2672 = vmatprep.subr.bf16.mxu0 0
        %2673 = vmatpush1.bf16.msra.mxu0 0
        %2674 = vmatprep.subr.bf16.mxu0 0
        %2675 = vmatpush1.bf16.msra.mxu0 0
        %2676 = vmatprep.subr.bf16.mxu0 0
        %2677 = vmatpush1.bf16.msra.mxu0 0
        %2678 = vmatprep.mubr.bf16.mxu0 0
        %2679 = vmatmul.mubr.bf16.gmra.mrb[0].mxu0 %v2638
        %v2680 = vpop.f32.mrb[0].mxu0
        %v2681 = vadd.f32 0.0, %v2680
        %v2682 = vpop.f32.mrb[0].mxu0
        %v2683 = vadd.f32 0.0, %v2682
        %v2684 = vpop.f32.mrb[0].mxu0
        %v2685 = vpop.f32.mrb[0].mxu0
        %2686 = vdwg.mxu0
        %s2687 = scalar_lea.vmem [#allocation6], 16
        %v2688 = vld [vmem:[%s2687] sm:$0xff]
        %v2691 = vrot.slane %v2466, 4
        %v2692 = vrot.slane %v2467, 4
        %v2697 = vrot.slane %v2470, 4
        %v2698 = vrot.slane %v2471, 4
        %2701 = vmatprep.subr.bf16.mxu0 %v2698
        %2702 = vmatpush1.bf16.xpose.msra.mxu0 %v2697
        %2703 = vmatprep.subr.bf16.mxu0 0
        %2704 = vmatpush1.bf16.xpose.msra.mxu0 0
        %2705 = vmatprep.subr.bf16.mxu0 0
        %2706 = vmatpush1.bf16.xpose.msra.mxu0 0
        %2707 = vmatprep.subr.bf16.mxu0 0
        %2708 = vmatpush1.bf16.xpose.msra.mxu0 0
        %2709 = vmatprep.subr.bf16.mxu0 0
        %2710 = vmatpush1.bf16.xpose.msra.mxu0 0
        %2711 = vmatprep.subr.bf16.mxu0 0
        %2712 = vmatpush1.bf16.xpose.msra.mxu0 0
        %2713 = vmatprep.subr.bf16.mxu0 0
        %2714 = vmatpush1.bf16.xpose.msra.mxu0 0
        %2715 = vmatprep.subr.bf16.mxu0 0
        %2716 = vmatpush1.bf16.xpose.msra.mxu0 0
        %2717 = vmatprep.subr.bf16.mxu0 0
        %2718 = vmatpush1.bf16.xpose.msra.mxu0 0
        %2719 = vmatprep.subr.bf16.mxu0 0
        %2720 = vmatpush1.bf16.xpose.msra.mxu0 0
        %2721 = vmatprep.subr.bf16.mxu0 0
        %2722 = vmatpush1.bf16.xpose.msra.mxu0 0
        %2723 = vmatprep.subr.bf16.mxu0 0
        %2724 = vmatpush1.bf16.xpose.msra.mxu0 0
        %2725 = vmatprep.subr.bf16.mxu0 0
        %2726 = vmatpush1.bf16.xpose.msra.mxu0 0
        %2727 = vmatprep.subr.bf16.mxu0 0
        %2728 = vmatpush1.bf16.xpose.msra.mxu0 0
        %2729 = vmatprep.subr.bf16.mxu0 0
        %2730 = vmatpush1.bf16.xpose.msra.mxu0 0
        %2731 = vmatprep.subr.bf16.mxu0 0
        %2732 = vmatpush1.bf16.xpose.msra.mxu0 0
        %2733 = vmatprep.mubr.bf16.mxu0 %v2692
        %2734 = vmatmul.mubr.bf16.gmra.mrb[0].mxu0 %v2691
        %v2735 = vpop.f32.mrb[0].mxu0
        %v2736 = vadd.f32 %v2688, %v2735
        %v2737 = vpop.f32.mrb[0].mxu0
        %v2738 = vpop.f32.mrb[0].mxu0
        %v2739 = vpop.f32.mrb[0].mxu0
        %2740 = vdwg.mxu0
        %v2741 = vsel %vm2519, %v2736, -inf
        %2742 = vmax.xlane.f32.xlu0 %v2741
        %v2743 = vpop.xlane.xlu0 %2742
        %v2744 = vsub.f32 %v2736, %v2743
        %v2745 = vmul.f32 %v2744, 1.442695
        %v2746 = vpow.pop %v2745
        %v2747 = vsel %vm2519, %v2746, 0.0
        %2748 = vadd.xlane.f32.xlu0 %v2747
        %v2749 = vpop.xlane.xlu0 %2748
        %v2750 = vrcp.pop %v2749
        %v2751 = vmul.f32 %v2746, %v2750
        %v2752 = vpack.c.bf16 %v2751, %v2751
        %v2755 = vrot.slane %v2474, 4
        %v2756 = vrot.slane %v2475, 4
        %v2758 = vsel %vm2519, %v2752, 0
        %v2761 = vsel %vm2535, %v2755, 0
        %v2764 = vsel %vm2535, %v2756, 0
        %2766 = vmatprep.subr.bf16.mxu0 %v2764
        %2767 = vmatpush1.bf16.msra.mxu0 %v2761
        %2768 = vmatprep.subr.bf16.mxu0 0
        %2769 = vmatpush1.bf16.msra.mxu0 0
        %2770 = vmatprep.subr.bf16.mxu0 0
        %2771 = vmatpush1.bf16.msra.mxu0 0
        %2772 = vmatprep.subr.bf16.mxu0 0
        %2773 = vmatpush1.bf16.msra.mxu0 0
        %2774 = vmatprep.subr.bf16.mxu0 0
        %2775 = vmatpush1.bf16.msra.mxu0 0
        %2776 = vmatprep.subr.bf16.mxu0 0
        %2777 = vmatpush1.bf16.msra.mxu0 0
        %2778 = vmatprep.subr.bf16.mxu0 0
        %2779 = vmatpush1.bf16.msra.mxu0 0
        %2780 = vmatprep.subr.bf16.mxu0 0
        %2781 = vmatpush1.bf16.msra.mxu0 0
        %2782 = vmatprep.subr.bf16.mxu0 0
        %2783 = vmatpush1.bf16.msra.mxu0 0
        %2784 = vmatprep.subr.bf16.mxu0 0
        %2785 = vmatpush1.bf16.msra.mxu0 0
        %2786 = vmatprep.subr.bf16.mxu0 0
        %2787 = vmatpush1.bf16.msra.mxu0 0
        %2788 = vmatprep.subr.bf16.mxu0 0
        %2789 = vmatpush1.bf16.msra.mxu0 0
        %2790 = vmatprep.subr.bf16.mxu0 0
        %2791 = vmatpush1.bf16.msra.mxu0 0
        %2792 = vmatprep.subr.bf16.mxu0 0
        %2793 = vmatpush1.bf16.msra.mxu0 0
        %2794 = vmatprep.subr.bf16.mxu0 0
        %2795 = vmatpush1.bf16.msra.mxu0 0
        %2796 = vmatprep.subr.bf16.mxu0 0
        %2797 = vmatpush1.bf16.msra.mxu0 0
        %2798 = vmatprep.mubr.bf16.mxu0 0
        %2799 = vmatmul.mubr.bf16.gmra.mrb[0].mxu0 %v2758
        %v2800 = vpop.f32.mrb[0].mxu0
        %v2801 = vadd.f32 0.0, %v2800
        %v2802 = vpop.f32.mrb[0].mxu0
        %v2803 = vadd.f32 0.0, %v2802
        %v2804 = vpop.f32.mrb[0].mxu0
        %v2805 = vpop.f32.mrb[0].mxu0
        %2806 = vdwg.mxu0
        %s2807 = scalar_lea.vmem [#allocation6], 24
        %v2808 = vld [vmem:[%s2807] sm:$0xff]
        %v2811 = vrot.slane %v2468, 4
        %v2812 = vrot.slane %v2469, 4
        %v2817 = vrot.slane %v2472, 4
        %v2818 = vrot.slane %v2473, 4
        %2821 = vmatprep.subr.bf16.mxu0 %v2818
        %2822 = vmatpush1.bf16.xpose.msra.mxu0 %v2817
        %2823 = vmatprep.subr.bf16.mxu0 0
        %2824 = vmatpush1.bf16.xpose.msra.mxu0 0
        %2825 = vmatprep.subr.bf16.mxu0 0
        %2826 = vmatpush1.bf16.xpose.msra.mxu0 0
        %2827 = vmatprep.subr.bf16.mxu0 0
        %2828 = vmatpush1.bf16.xpose.msra.mxu0 0
        %2829 = vmatprep.subr.bf16.mxu0 0
        %2830 = vmatpush1.bf16.xpose.msra.mxu0 0
        %2831 = vmatprep.subr.bf16.mxu0 0
        %2832 = vmatpush1.bf16.xpose.msra.mxu0 0
        %2833 = vmatprep.subr.bf16.mxu0 0
        %2834 = vmatpush1.bf16.xpose.msra.mxu0 0
        %2835 = vmatprep.subr.bf16.mxu0 0
        %2836 = vmatpush1.bf16.xpose.msra.mxu0 0
        %2837 = vmatprep.subr.bf16.mxu0 0
        %2838 = vmatpush1.bf16.xpose.msra.mxu0 0
        %2839 = vmatprep.subr.bf16.mxu0 0
        %2840 = vmatpush1.bf16.xpose.msra.mxu0 0
        %2841 = vmatprep.subr.bf16.mxu0 0
        %2842 = vmatpush1.bf16.xpose.msra.mxu0 0
        %2843 = vmatprep.subr.bf16.mxu0 0
        %2844 = vmatpush1.bf16.xpose.msra.mxu0 0
        %2845 = vmatprep.subr.bf16.mxu0 0
        %2846 = vmatpush1.bf16.xpose.msra.mxu0 0
        %2847 = vmatprep.subr.bf16.mxu0 0
        %2848 = vmatpush1.bf16.xpose.msra.mxu0 0
        %2849 = vmatprep.subr.bf16.mxu0 0
        %2850 = vmatpush1.bf16.xpose.msra.mxu0 0
        %2851 = vmatprep.subr.bf16.mxu0 0
        %2852 = vmatpush1.bf16.xpose.msra.mxu0 0
        %2853 = vmatprep.mubr.bf16.mxu0 %v2812
        %2854 = vmatmul.mubr.bf16.gmra.mrb[0].mxu0 %v2811
        %v2855 = vpop.f32.mrb[0].mxu0
        %v2856 = vadd.f32 %v2808, %v2855
        %v2857 = vpop.f32.mrb[0].mxu0
        %v2858 = vpop.f32.mrb[0].mxu0
        %v2859 = vpop.f32.mrb[0].mxu0
        %2860 = vdwg.mxu0
        %v2861 = vsel %vm2519, %v2856, -inf
        %2862 = vmax.xlane.f32.xlu0 %v2861
        %v2863 = vpop.xlane.xlu0 %2862
        %v2864 = vsub.f32 %v2856, %v2863
        %v2865 = vmul.f32 %v2864, 1.442695
        %v2866 = vpow.pop %v2865
        %v2867 = vsel %vm2519, %v2866, 0.0
        %2868 = vadd.xlane.f32.xlu0 %v2867
        %v2869 = vpop.xlane.xlu0 %2868
        %v2870 = vrcp.pop %v2869
        %v2871 = vmul.f32 %v2866, %v2870
        %v2872 = vpack.c.bf16 %v2871, %v2871
        %v2875 = vrot.slane %v2476, 4
        %v2876 = vrot.slane %v2477, 4
        %v2878 = vsel %vm2519, %v2872, 0
        %v2881 = vsel %vm2535, %v2875, 0
        %v2884 = vsel %vm2535, %v2876, 0
        %2886 = vmatprep.subr.bf16.mxu0 %v2884
        %2887 = vmatpush1.bf16.msra.mxu0 %v2881
        %2888 = vmatprep.subr.bf16.mxu0 0
        %2889 = vmatpush1.bf16.msra.mxu0 0
        %2890 = vmatprep.subr.bf16.mxu0 0
        %2891 = vmatpush1.bf16.msra.mxu0 0
        %2892 = vmatprep.subr.bf16.mxu0 0
        %2893 = vmatpush1.bf16.msra.mxu0 0
        %2894 = vmatprep.subr.bf16.mxu0 0
        %2895 = vmatpush1.bf16.msra.mxu0 0
        %2896 = vmatprep.subr.bf16.mxu0 0
        %2897 = vmatpush1.bf16.msra.mxu0 0
        %2898 = vmatprep.subr.bf16.mxu0 0
        %2899 = vmatpush1.bf16.msra.mxu0 0
        %2900 = vmatprep.subr.bf16.mxu0 0
        %2901 = vmatpush1.bf16.msra.mxu0 0
        %2902 = vmatprep.subr.bf16.mxu0 0
        %2903 = vmatpush1.bf16.msra.mxu0 0
        %2904 = vmatprep.subr.bf16.mxu0 0
        %2905 = vmatpush1.bf16.msra.mxu0 0
        %2906 = vmatprep.subr.bf16.mxu0 0
        %2907 = vmatpush1.bf16.msra.mxu0 0
        %2908 = vmatprep.subr.bf16.mxu0 0
        %2909 = vmatpush1.bf16.msra.mxu0 0
        %2910 = vmatprep.subr.bf16.mxu0 0
        %2911 = vmatpush1.bf16.msra.mxu0 0
        %2912 = vmatprep.subr.bf16.mxu0 0
        %2913 = vmatpush1.bf16.msra.mxu0 0
        %2914 = vmatprep.subr.bf16.mxu0 0
        %2915 = vmatpush1.bf16.msra.mxu0 0
        %2916 = vmatprep.subr.bf16.mxu0 0
        %2917 = vmatpush1.bf16.msra.mxu0 0
        %2918 = vmatprep.mubr.bf16.mxu0 0
        %2919 = vmatmul.mubr.bf16.gmra.mrb[0].mxu0 %v2878
        %v2920 = vpop.f32.mrb[0].mxu0
        %v2921 = vadd.f32 0.0, %v2920
        %v2922 = vpop.f32.mrb[0].mxu0
        %v2923 = vadd.f32 0.0, %v2922
        %v2924 = vpop.f32.mrb[0].mxu0
        %v2925 = vpop.f32.mrb[0].mxu0
        %2926 = vdwg.mxu0
        %v2927 = vpack.c.bf16 %v2801, %v2577
        %v2928 = vpack.c.bf16 %v2803, %v2579
        %v2929 = vpack.c.bf16 %v2921, %v2681
        %v2930 = vpack.c.bf16 %v2923, %v2683
        %v2931 = vld [vmem:[%s785] sm:$0xff]
        %v2932 = vld [vmem:[%s785 + $0x8] sm:$0xff]
        %v2933 = vld [vmem:[%s785 + $0x10] sm:$0xff]
        %v2934 = vld [vmem:[%s785 + $0x18] sm:$0xff]
        %v2935 = vld [vmem:[%s785 + $0x20] sm:$0xff]
        %v2936 = vld [vmem:[%s785 + $0x28] sm:$0xff]
        %v2937 = vld [vmem:[%s785 + $0x30] sm:$0xff]
        %v2938 = vld [vmem:[%s785 + $0x38] sm:$0xff]
        %v2939 = vld [vmem:[%s785 + $0x40] sm:$0xff]
        %v2940 = vld [vmem:[%s785 + $0x48] sm:$0xff]
        %v2941 = vld [vmem:[%s785 + $0x50] sm:$0xff]
        %v2942 = vld [vmem:[%s785 + $0x58] sm:$0xff]
        %v2943 = vld [vmem:[%s785 + $0x60] sm:$0xff]
        %v2944 = vld [vmem:[%s785 + $0x68] sm:$0xff]
        %v2945 = vld [vmem:[%s785 + $0x70] sm:$0xff]
        %v2946 = vld [vmem:[%s785 + $0x78] sm:$0xff]
        %v2947 = vld [vmem:[%s785 + $0x80] sm:$0xff]
        %v2948 = vld [vmem:[%s785 + $0x88] sm:$0xff]
        %v2949 = vld [vmem:[%s785 + $0x90] sm:$0xff]
        %v2950 = vld [vmem:[%s785 + $0x98] sm:$0xff]
        %v2951 = vld [vmem:[%s785 + $0xa0] sm:$0xff]
        %v2952 = vld [vmem:[%s785 + $0xa8] sm:$0xff]
        %v2953 = vld [vmem:[%s785 + $0xb0] sm:$0xff]
        %v2954 = vld [vmem:[%s785 + $0xb8] sm:$0xff]
        %v2955 = vld [vmem:[%s785 + $0xc0] sm:$0xff]
        %v2956 = vld [vmem:[%s785 + $0xc8] sm:$0xff]
        %v2957 = vld [vmem:[%s785 + $0xd0] sm:$0xff]
        %v2958 = vld [vmem:[%s785 + $0xd8] sm:$0xff]
        %v2959 = vld [vmem:[%s785 + $0xe0] sm:$0xff]
        %v2960 = vld [vmem:[%s785 + $0xe8] sm:$0xff]
        %v2961 = vld [vmem:[%s785 + $0xf0] sm:$0xff]
        %v2962 = vld [vmem:[%s785 + $0xf8] sm:$0xff]
        %v2963 = vld [vmem:[%s785 + $0x100] sm:$0xff]
        %v2964 = vld [vmem:[%s785 + $0x108] sm:$0xff]
        %v2965 = vld [vmem:[%s785 + $0x110] sm:$0xff]
        %v2966 = vld [vmem:[%s785 + $0x118] sm:$0xff]
        %v2967 = vld [vmem:[%s785 + $0x120] sm:$0xff]
        %v2968 = vld [vmem:[%s785 + $0x128] sm:$0xff]
        %v2969 = vld [vmem:[%s785 + $0x130] sm:$0xff]
        %v2970 = vld [vmem:[%s785 + $0x138] sm:$0xff]
        %v2971 = vld [vmem:[%s785 + $0x140] sm:$0xff]
        %v2972 = vld [vmem:[%s785 + $0x148] sm:$0xff]
        %v2973 = vld [vmem:[%s785 + $0x150] sm:$0xff]
        %v2974 = vld [vmem:[%s785 + $0x158] sm:$0xff]
        %v2975 = vld [vmem:[%s785 + $0x160] sm:$0xff]
        %v2976 = vld [vmem:[%s785 + $0x168] sm:$0xff]
        %v2977 = vld [vmem:[%s785 + $0x170] sm:$0xff]
        %v2978 = vld [vmem:[%s785 + $0x178] sm:$0xff]
        %v2979 = vld [vmem:[%s785 + $0x180] sm:$0xff]
        %v2980 = vld [vmem:[%s785 + $0x188] sm:$0xff]
        %v2981 = vld [vmem:[%s785 + $0x190] sm:$0xff]
        %v2982 = vld [vmem:[%s785 + $0x198] sm:$0xff]
        %v2983 = vld [vmem:[%s785 + $0x1a0] sm:$0xff]
        %v2984 = vld [vmem:[%s785 + $0x1a8] sm:$0xff]
        %v2985 = vld [vmem:[%s785 + $0x1b0] sm:$0xff]
        %v2986 = vld [vmem:[%s785 + $0x1b8] sm:$0xff]
        %v2987 = vld [vmem:[%s785 + $0x1c0] sm:$0xff]
        %v2988 = vld [vmem:[%s785 + $0x1c8] sm:$0xff]
        %v2989 = vld [vmem:[%s785 + $0x1d0] sm:$0xff]
        %v2990 = vld [vmem:[%s785 + $0x1d8] sm:$0xff]
        %v2991 = vld [vmem:[%s785 + $0x1e0] sm:$0xff]
        %v2992 = vld [vmem:[%s785 + $0x1e8] sm:$0xff]
        %v2993 = vld [vmem:[%s785 + $0x1f0] sm:$0xff]
        %v2994 = vld [vmem:[%s785 + $0x1f8] sm:$0xff]
        %v2995 = vld [vmem:[%s794] sm:$0x3]
        %v2997 = vlaneseq
        %v2998 = vshrl.u32 %v2997, 7
        %v2999 = vsub.s32 0, %v2998
        %v3000 = vrot.slane %v2995, %v2999
        %v3001 = vlaneseq
        %v3002 = vshrl.u32 %v3001, 7
        %v3003 = vsub.s32 1, %v3002
        %v3004 = vrot.slane %v2995, %v3003
        %v3071 = vunpack.c.l.b16 %v2931
        %v3072 = vunpack.c.h.b16 %v2931
        %v3073 = vunpack.c.l.b16 %v2932
        %v3074 = vunpack.c.h.b16 %v2932
        %v3075 = vunpack.c.l.b16 %v2933
        %v3076 = vunpack.c.h.b16 %v2933
        %v3077 = vunpack.c.l.b16 %v2934
        %v3078 = vunpack.c.h.b16 %v2934
        %v3079 = vunpack.c.l.b16 %v2935
        %v3080 = vunpack.c.h.b16 %v2935
        %v3081 = vunpack.c.l.b16 %v2936
        %v3082 = vunpack.c.h.b16 %v2936
        %v3083 = vunpack.c.l.b16 %v2937
        %v3084 = vunpack.c.h.b16 %v2937
        %v3085 = vunpack.c.l.b16 %v2938
        %v3086 = vunpack.c.h.b16 %v2938
        %v3087 = vunpack.c.l.b16 %v2939
        %v3088 = vunpack.c.h.b16 %v2939
        %v3089 = vunpack.c.l.b16 %v2940
        %v3090 = vunpack.c.h.b16 %v2940
        %v3091 = vunpack.c.l.b16 %v2941
        %v3092 = vunpack.c.h.b16 %v2941
        %v3093 = vunpack.c.l.b16 %v2942
        %v3094 = vunpack.c.h.b16 %v2942
        %v3095 = vunpack.c.l.b16 %v2943
        %v3096 = vunpack.c.h.b16 %v2943
        %v3097 = vunpack.c.l.b16 %v2944
        %v3098 = vunpack.c.h.b16 %v2944
        %v3099 = vunpack.c.l.b16 %v2945
        %v3100 = vunpack.c.h.b16 %v2945
        %v3101 = vunpack.c.l.b16 %v2946
        %v3102 = vunpack.c.h.b16 %v2946
        %v3103 = vunpack.c.l.b16 %v2947
        %v3104 = vunpack.c.h.b16 %v2947
        %v3105 = vunpack.c.l.b16 %v2948
        %v3106 = vunpack.c.h.b16 %v2948
        %v3107 = vunpack.c.l.b16 %v2949
        %v3108 = vunpack.c.h.b16 %v2949
        %v3109 = vunpack.c.l.b16 %v2950
        %v3110 = vunpack.c.h.b16 %v2950
        %v3111 = vunpack.c.l.b16 %v2951
        %v3112 = vunpack.c.h.b16 %v2951
        %v3113 = vunpack.c.l.b16 %v2952
        %v3114 = vunpack.c.h.b16 %v2952
        %v3115 = vunpack.c.l.b16 %v2953
        %v3116 = vunpack.c.h.b16 %v2953
        %v3117 = vunpack.c.l.b16 %v2954
        %v3118 = vunpack.c.h.b16 %v2954
        %v3119 = vunpack.c.l.b16 %v2955
        %v3120 = vunpack.c.h.b16 %v2955
        %v3121 = vunpack.c.l.b16 %v2956
        %v3122 = vunpack.c.h.b16 %v2956
        %v3123 = vunpack.c.l.b16 %v2957
        %v3124 = vunpack.c.h.b16 %v2957
        %v3125 = vunpack.c.l.b16 %v2958
        %v3126 = vunpack.c.h.b16 %v2958
        %v3127 = vunpack.c.l.b16 %v2959
        %v3128 = vunpack.c.h.b16 %v2959
        %v3129 = vunpack.c.l.b16 %v2960
        %v3130 = vunpack.c.h.b16 %v2960
        %v3131 = vunpack.c.l.b16 %v2961
        %v3132 = vunpack.c.h.b16 %v2961
        %v3133 = vunpack.c.l.b16 %v2962
        %v3134 = vunpack.c.h.b16 %v2962
        %v3135 = vunpack.c.l.b16 %v2963
        %v3136 = vunpack.c.h.b16 %v2963
        %v3137 = vunpack.c.l.b16 %v2964
        %v3138 = vunpack.c.h.b16 %v2964
        %v3139 = vunpack.c.l.b16 %v2965
        %v3140 = vunpack.c.h.b16 %v2965
        %v3141 = vunpack.c.l.b16 %v2966
        %v3142 = vunpack.c.h.b16 %v2966
        %v3143 = vunpack.c.l.b16 %v2967
        %v3144 = vunpack.c.h.b16 %v2967
        %v3145 = vunpack.c.l.b16 %v2968
        %v3146 = vunpack.c.h.b16 %v2968
        %v3147 = vunpack.c.l.b16 %v2969
        %v3148 = vunpack.c.h.b16 %v2969
        %v3149 = vunpack.c.l.b16 %v2970
        %v3150 = vunpack.c.h.b16 %v2970
        %v3151 = vunpack.c.l.b16 %v2971
        %v3152 = vunpack.c.h.b16 %v2971
        %v3153 = vunpack.c.l.b16 %v2972
        %v3154 = vunpack.c.h.b16 %v2972
        %v3155 = vunpack.c.l.b16 %v2973
        %v3156 = vunpack.c.h.b16 %v2973
        %v3157 = vunpack.c.l.b16 %v2974
        %v3158 = vunpack.c.h.b16 %v2974
        %v3159 = vunpack.c.l.b16 %v2975
        %v3160 = vunpack.c.h.b16 %v2975
        %v3161 = vunpack.c.l.b16 %v2976
        %v3162 = vunpack.c.h.b16 %v2976
        %v3163 = vunpack.c.l.b16 %v2977
        %v3164 = vunpack.c.h.b16 %v2977
        %v3165 = vunpack.c.l.b16 %v2978
        %v3166 = vunpack.c.h.b16 %v2978
        %v3167 = vunpack.c.l.b16 %v2979
        %v3168 = vunpack.c.h.b16 %v2979
        %v3169 = vunpack.c.l.b16 %v2980
        %v3170 = vunpack.c.h.b16 %v2980
        %v3171 = vunpack.c.l.b16 %v2981
        %v3172 = vunpack.c.h.b16 %v2981
        %v3173 = vunpack.c.l.b16 %v2982
        %v3174 = vunpack.c.h.b16 %v2982
        %v3175 = vunpack.c.l.b16 %v2983
        %v3176 = vunpack.c.h.b16 %v2983
        %v3177 = vunpack.c.l.b16 %v2984
        %v3178 = vunpack.c.h.b16 %v2984
        %v3179 = vunpack.c.l.b16 %v2985
        %v3180 = vunpack.c.h.b16 %v2985
        %v3181 = vunpack.c.l.b16 %v2986
        %v3182 = vunpack.c.h.b16 %v2986
        %v3183 = vunpack.c.l.b16 %v2987
        %v3184 = vunpack.c.h.b16 %v2987
        %v3185 = vunpack.c.l.b16 %v2988
        %v3186 = vunpack.c.h.b16 %v2988
        %v3187 = vunpack.c.l.b16 %v2989
        %v3188 = vunpack.c.h.b16 %v2989
        %v3189 = vunpack.c.l.b16 %v2990
        %v3190 = vunpack.c.h.b16 %v2990
        %v3191 = vunpack.c.l.b16 %v2991
        %v3192 = vunpack.c.h.b16 %v2991
        %v3193 = vunpack.c.l.b16 %v2992
        %v3194 = vunpack.c.h.b16 %v2992
        %v3195 = vunpack.c.l.b16 %v2993
        %v3196 = vunpack.c.h.b16 %v2993
        %v3197 = vunpack.c.l.b16 %v2994
        %v3198 = vunpack.c.h.b16 %v2994
        %v3199 = vpack.c.b16 %v3073, %v3071
        %v3200 = vpack.c.b16 %v3074, %v3072
        %v3201 = vpack.c.b16 %v3077, %v3075
        %v3202 = vpack.c.b16 %v3078, %v3076
        %v3203 = vpack.c.b16 %v3081, %v3079
        %v3204 = vpack.c.b16 %v3082, %v3080
        %v3205 = vpack.c.b16 %v3085, %v3083
        %v3206 = vpack.c.b16 %v3086, %v3084
        %v3207 = vpack.c.b16 %v3089, %v3087
        %v3208 = vpack.c.b16 %v3090, %v3088
        %v3209 = vpack.c.b16 %v3093, %v3091
        %v3210 = vpack.c.b16 %v3094, %v3092
        %v3211 = vpack.c.b16 %v3097, %v3095
        %v3212 = vpack.c.b16 %v3098, %v3096
        %v3213 = vpack.c.b16 %v3101, %v3099
        %v3214 = vpack.c.b16 %v3102, %v3100
        %v3215 = vpack.c.b16 %v3105, %v3103
        %v3216 = vpack.c.b16 %v3106, %v3104
        %v3217 = vpack.c.b16 %v3109, %v3107
        %v3218 = vpack.c.b16 %v3110, %v3108
        %v3219 = vpack.c.b16 %v3113, %v3111
        %v3220 = vpack.c.b16 %v3114, %v3112
        %v3221 = vpack.c.b16 %v3117, %v3115
        %v3222 = vpack.c.b16 %v3118, %v3116
        %v3223 = vpack.c.b16 %v3121, %v3119
        %v3224 = vpack.c.b16 %v3122, %v3120
        %v3225 = vpack.c.b16 %v3125, %v3123
        %v3226 = vpack.c.b16 %v3126, %v3124
        %v3227 = vpack.c.b16 %v3129, %v3127
        %v3228 = vpack.c.b16 %v3130, %v3128
        %v3229 = vpack.c.b16 %v3133, %v3131
        %v3230 = vpack.c.b16 %v3134, %v3132
        %v3231 = vpack.c.b16 %v3137, %v3135
        %v3232 = vpack.c.b16 %v3138, %v3136
        %v3233 = vpack.c.b16 %v3141, %v3139
        %v3234 = vpack.c.b16 %v3142, %v3140
        %v3235 = vpack.c.b16 %v3145, %v3143
        %v3236 = vpack.c.b16 %v3146, %v3144
        %v3237 = vpack.c.b16 %v3149, %v3147
        %v3238 = vpack.c.b16 %v3150, %v3148
        %v3239 = vpack.c.b16 %v3153, %v3151
        %v3240 = vpack.c.b16 %v3154, %v3152
        %v3241 = vpack.c.b16 %v3157, %v3155
        %v3242 = vpack.c.b16 %v3158, %v3156
        %v3243 = vpack.c.b16 %v3161, %v3159
        %v3244 = vpack.c.b16 %v3162, %v3160
        %v3245 = vpack.c.b16 %v3165, %v3163
        %v3246 = vpack.c.b16 %v3166, %v3164
        %v3247 = vpack.c.b16 %v3169, %v3167
        %v3248 = vpack.c.b16 %v3170, %v3168
        %v3249 = vpack.c.b16 %v3173, %v3171
        %v3250 = vpack.c.b16 %v3174, %v3172
        %v3251 = vpack.c.b16 %v3177, %v3175
        %v3252 = vpack.c.b16 %v3178, %v3176
        %v3253 = vpack.c.b16 %v3181, %v3179
        %v3254 = vpack.c.b16 %v3182, %v3180
        %v3255 = vpack.c.b16 %v3185, %v3183
        %v3256 = vpack.c.b16 %v3186, %v3184
        %v3257 = vpack.c.b16 %v3189, %v3187
        %v3258 = vpack.c.b16 %v3190, %v3188
        %v3259 = vpack.c.b16 %v3193, %v3191
        %v3260 = vpack.c.b16 %v3194, %v3192
        %v3261 = vpack.c.b16 %v3197, %v3195
        %v3262 = vpack.c.b16 %v3198, %v3196
        %3327 = vmatprep.subr.bf16.mxu0 %v3200
        %3328 = vmatpush1.bf16.msra.mxu0 %v3199
        %3329 = vmatprep.subr.bf16.mxu0 %v3202
        %3330 = vmatpush1.bf16.msra.mxu0 %v3201
        %3331 = vmatprep.subr.bf16.mxu0 %v3204
        %3332 = vmatpush1.bf16.msra.mxu0 %v3203
        %3333 = vmatprep.subr.bf16.mxu0 %v3206
        %3334 = vmatpush1.bf16.msra.mxu0 %v3205
        %3335 = vmatprep.subr.bf16.mxu0 %v3208
        %3336 = vmatpush1.bf16.msra.mxu0 %v3207
        %3337 = vmatprep.subr.bf16.mxu0 %v3210
        %3338 = vmatpush1.bf16.msra.mxu0 %v3209
        %3339 = vmatprep.subr.bf16.mxu0 %v3212
        %3340 = vmatpush1.bf16.msra.mxu0 %v3211
        %3341 = vmatprep.subr.bf16.mxu0 %v3214
        %3342 = vmatpush1.bf16.msra.mxu0 %v3213
        %3343 = vmatprep.subr.bf16.mxu0 %v3216
        %3344 = vmatpush1.bf16.msra.mxu0 %v3215
        %3345 = vmatprep.subr.bf16.mxu0 %v3218
        %3346 = vmatpush1.bf16.msra.mxu0 %v3217
        %3347 = vmatprep.subr.bf16.mxu0 %v3220
        %3348 = vmatpush1.bf16.msra.mxu0 %v3219
        %3349 = vmatprep.subr.bf16.mxu0 %v3222
        %3350 = vmatpush1.bf16.msra.mxu0 %v3221
        %3351 = vmatprep.subr.bf16.mxu0 %v3224
        %3352 = vmatpush1.bf16.msra.mxu0 %v3223
        %3353 = vmatprep.subr.bf16.mxu0 %v3226
        %3354 = vmatpush1.bf16.msra.mxu0 %v3225
        %3355 = vmatprep.subr.bf16.mxu0 %v3228
        %3356 = vmatpush1.bf16.msra.mxu0 %v3227
        %3357 = vmatprep.subr.bf16.mxu0 %v3230
        %3358 = vmatpush1.bf16.msra.mxu0 %v3229
        %3359 = vmatprep.mubr.bf16.mxu0 %v2928
        %3360 = vmatmul.mubr.bf16.gmra.mrb[0].mxu0 %v2927
        %v3361 = vpop.f32.mrb[0].mxu0
        %v3362 = vadd.f32 %v3000, %v3361
        %v3363 = vpop.f32.mrb[0].mxu0
        %v3364 = vadd.f32 %v3004, %v3363
        %v3365 = vpop.f32.mrb[0].mxu0
        %v3366 = vadd.f32 %v3000, %v3365
        %v3367 = vpop.f32.mrb[0].mxu0
        %v3368 = vadd.f32 %v3004, %v3367
        %3369 = vdwg.mxu0
        %3370 = vmatprep.subr.bf16.mxu0 %v3232
        %3371 = vmatpush1.bf16.msra.mxu0 %v3231
        %3372 = vmatprep.subr.bf16.mxu0 %v3234
        %3373 = vmatpush1.bf16.msra.mxu0 %v3233
        %3374 = vmatprep.subr.bf16.mxu0 %v3236
        %3375 = vmatpush1.bf16.msra.mxu0 %v3235
        %3376 = vmatprep.subr.bf16.mxu0 %v3238
        %3377 = vmatpush1.bf16.msra.mxu0 %v3237
        %3378 = vmatprep.subr.bf16.mxu0 %v3240
        %3379 = vmatpush1.bf16.msra.mxu0 %v3239
        %3380 = vmatprep.subr.bf16.mxu0 %v3242
        %3381 = vmatpush1.bf16.msra.mxu0 %v3241
        %3382 = vmatprep.subr.bf16.mxu0 %v3244
        %3383 = vmatpush1.bf16.msra.mxu0 %v3243
        %3384 = vmatprep.subr.bf16.mxu0 %v3246
        %3385 = vmatpush1.bf16.msra.mxu0 %v3245
        %3386 = vmatprep.subr.bf16.mxu0 %v3248
        %3387 = vmatpush1.bf16.msra.mxu0 %v3247
        %3388 = vmatprep.subr.bf16.mxu0 %v3250
        %3389 = vmatpush1.bf16.msra.mxu0 %v3249
        %3390 = vmatprep.subr.bf16.mxu0 %v3252
        %3391 = vmatpush1.bf16.msra.mxu0 %v3251
        %3392 = vmatprep.subr.bf16.mxu0 %v3254
        %3393 = vmatpush1.bf16.msra.mxu0 %v3253
        %3394 = vmatprep.subr.bf16.mxu0 %v3256
        %3395 = vmatpush1.bf16.msra.mxu0 %v3255
        %3396 = vmatprep.subr.bf16.mxu0 %v3258
        %3397 = vmatpush1.bf16.msra.mxu0 %v3257
        %3398 = vmatprep.subr.bf16.mxu0 %v3260
        %3399 = vmatpush1.bf16.msra.mxu0 %v3259
        %3400 = vmatprep.subr.bf16.mxu0 %v3262
        %3401 = vmatpush1.bf16.msra.mxu0 %v3261
        %3402 = vmatprep.mubr.bf16.mxu0 %v2930
        %3403 = vmatmul.mubr.bf16.gmra.mrb[0].mxu0 %v2929
        %v3404 = vpop.f32.mrb[0].mxu0
        %v3405 = vadd.f32 %v3362, %v3404
        %v3406 = vpop.f32.mrb[0].mxu0
        %v3407 = vadd.f32 %v3364, %v3406
        %v3408 = vpop.f32.mrb[0].mxu0
        %v3409 = vadd.f32 %v3366, %v3408
        %v3410 = vpop.f32.mrb[0].mxu0
        %v3411 = vadd.f32 %v3368, %v3410
        %3412 = vdwg.mxu0
        %v3413 = vadd.f32 %v986, %v3405
        %v3414 = vadd.f32 %v987, %v3407
        %v3415 = vadd.f32 %v988, %v3409
        %v3416 = vadd.f32 %v989, %v3411
        %v3417 = vld [vmem:[%s839] sm:$0x3]
        %v3418 = vld [vmem:[%s848] sm:$0x3]
        %v3419 = vadd.f32 %v3413, %v3414
        %3420 = vadd.xlane.f32.xlu0 %v3419
        %v3421 = vpop.xlane.xlu0 %3420
        %v3422 = vadd.f32 %v3415, %v3416
        %3423 = vadd.xlane.f32.xlu0 %v3422
        %v3424 = vpop.xlane.xlu0 %3423
        %v3425 = vmul.f32 %v3421, 0.005
        %v3426 = vmul.f32 %v3424, 0.005
        %v3427 = vmul.f32 %v3413, %v3413
        %v3428 = vmul.f32 %v3414, %v3414
        %v3429 = vmul.f32 %v3415, %v3415
        %v3430 = vmul.f32 %v3416, %v3416
        %v3431 = vadd.f32 %v3427, %v3428
        %3432 = vadd.xlane.f32.xlu0 %v3431
        %v3433 = vpop.xlane.xlu0 %3432
        %v3434 = vadd.f32 %v3429, %v3430
        %3435 = vadd.xlane.f32.xlu0 %v3434
        %v3436 = vpop.xlane.xlu0 %3435
        %v3437 = vmul.f32 %v3433, 0.005
        %v3438 = vmul.f32 %v3436, 0.005
        %v3439 = vmul.f32 %v3425, %v3425
        %v3440 = vmul.f32 %v3426, %v3426
        %v3441 = vsub.f32 %v3437, %v3439
        %v3442 = vsub.f32 %v3438, %v3440
        %v3443 = vsub.f32 %v3413, %v3425
        %v3444 = vsub.f32 %v3414, %v3425
        %v3445 = vsub.f32 %v3415, %v3426
        %v3446 = vsub.f32 %v3416, %v3426
        %v3447 = vadd.f32 %v3441, 1e-05
        %v3448 = vadd.f32 %v3442, 1e-05
        %v3449 = vrsqrt.pop %v3447
        %v3450 = vrsqrt.pop %v3448
        %v3451 = vmul.f32 %v3443, %v3449
        %v3452 = vmul.f32 %v3444, %v3449
        %v3453 = vmul.f32 %v3445, %v3450
        %v3454 = vmul.f32 %v3446, %v3450
        %v3456 = vlaneseq
        %v3457 = vshrl.u32 %v3456, 7
        %v3458 = vsub.s32 0, %v3457
        %v3459 = vrot.slane %v3417, %v3458
        %v3460 = vlaneseq
        %v3461 = vshrl.u32 %v3460, 7
        %v3462 = vsub.s32 1, %v3461
        %v3463 = vrot.slane %v3417, %v3462
        %v3466 = vmul.f32 %v3451, %v3459
        %v3467 = vmul.f32 %v3452, %v3463
        %v3468 = vmul.f32 %v3453, %v3459
        %v3469 = vmul.f32 %v3454, %v3463
        %v3471 = vlaneseq
        %v3472 = vshrl.u32 %v3471, 7
        %v3473 = vsub.s32 0, %v3472
        %v3474 = vrot.slane %v3418, %v3473
        %v3475 = vlaneseq
        %v3476 = vshrl.u32 %v3475, 7
        %v3477 = vsub.s32 1, %v3476
        %v3478 = vrot.slane %v3418, %v3477
        %v3481 = vadd.f32 %v3466, %v3474
        %v3482 = vadd.f32 %v3467, %v3478
        %v3483 = vadd.f32 %v3468, %v3474
        %v3484 = vadd.f32 %v3469, %v3478
        %v3485 = vpack.c.bf16 %v3483, %v3481
        %v3486 = vpack.c.bf16 %v3484, %v3482
        %v3487 = vld [vmem:[%s803] sm:$0xff]
        %v3488 = vld [vmem:[%s803 + $0x8] sm:$0xff]
        %v3489 = vld [vmem:[%s803 + $0x10] sm:$0xff]
        %v3490 = vld [vmem:[%s803 + $0x18] sm:$0xff]
        %v3491 = vld [vmem:[%s803 + $0x20] sm:$0xff]
        %v3492 = vld [vmem:[%s803 + $0x28] sm:$0xff]
        %v3493 = vld [vmem:[%s803 + $0x30] sm:$0xff]
        %v3494 = vld [vmem:[%s803 + $0x38] sm:$0xff]
        %v3495 = vld [vmem:[%s803 + $0x40] sm:$0xff]
        %v3496 = vld [vmem:[%s803 + $0x48] sm:$0xff]
        %v3497 = vld [vmem:[%s803 + $0x50] sm:$0xff]
        %v3498 = vld [vmem:[%s803 + $0x58] sm:$0xff]
        %v3499 = vld [vmem:[%s803 + $0x60] sm:$0xff]
        %v3500 = vld [vmem:[%s803 + $0x68] sm:$0xff]
        %v3501 = vld [vmem:[%s803 + $0x70] sm:$0xff]
        %v3502 = vld [vmem:[%s803 + $0x78] sm:$0xff]
        %v3503 = vld [vmem:[%s803 + $0x80] sm:$0xff]
        %v3504 = vld [vmem:[%s803 + $0x88] sm:$0xff]
        %v3505 = vld [vmem:[%s803 + $0x90] sm:$0xff]
        %v3506 = vld [vmem:[%s803 + $0x98] sm:$0xff]
        %v3507 = vld [vmem:[%s803 + $0xa0] sm:$0xff]
        %v3508 = vld [vmem:[%s803 + $0xa8] sm:$0xff]
        %v3509 = vld [vmem:[%s803 + $0xb0] sm:$0xff]
        %v3510 = vld [vmem:[%s803 + $0xb8] sm:$0xff]
        %v3511 = vld [vmem:[%s803 + $0xc0] sm:$0xff]
        %v3512 = vld [vmem:[%s803 + $0xc8] sm:$0xff]
        %v3513 = vld [vmem:[%s803 + $0xd0] sm:$0xff]
        %v3514 = vld [vmem:[%s803 + $0xd8] sm:$0xff]
        %v3515 = vld [vmem:[%s803 + $0xe0] sm:$0xff]
        %v3516 = vld [vmem:[%s803 + $0xe8] sm:$0xff]
        %v3517 = vld [vmem:[%s803 + $0xf0] sm:$0xff]
        %v3518 = vld [vmem:[%s803 + $0xf8] sm:$0xff]
        %v3519 = vld [vmem:[%s812] sm:$0x3]
        %v3521 = vlaneseq
        %v3522 = vshrl.u32 %v3521, 7
        %v3523 = vsub.s32 0, %v3522
        %v3524 = vrot.slane %v3519, %v3523
        %v3525 = vlaneseq
        %v3526 = vshrl.u32 %v3525, 7
        %v3527 = vsub.s32 1, %v3526
        %v3528 = vrot.slane %v3519, %v3527
        %v3563 = vunpack.c.l.b16 %v3487
        %v3564 = vunpack.c.h.b16 %v3487
        %v3565 = vunpack.c.l.b16 %v3488
        %v3566 = vunpack.c.h.b16 %v3488
        %v3567 = vunpack.c.l.b16 %v3489
        %v3568 = vunpack.c.h.b16 %v3489
        %v3569 = vunpack.c.l.b16 %v3490
        %v3570 = vunpack.c.h.b16 %v3490
        %v3571 = vunpack.c.l.b16 %v3491
        %v3572 = vunpack.c.h.b16 %v3491
        %v3573 = vunpack.c.l.b16 %v3492
        %v3574 = vunpack.c.h.b16 %v3492
        %v3575 = vunpack.c.l.b16 %v3493
        %v3576 = vunpack.c.h.b16 %v3493
        %v3577 = vunpack.c.l.b16 %v3494
        %v3578 = vunpack.c.h.b16 %v3494
        %v3579 = vunpack.c.l.b16 %v3495
        %v3580 = vunpack.c.h.b16 %v3495
        %v3581 = vunpack.c.l.b16 %v3496
        %v3582 = vunpack.c.h.b16 %v3496
        %v3583 = vunpack.c.l.b16 %v3497
        %v3584 = vunpack.c.h.b16 %v3497
        %v3585 = vunpack.c.l.b16 %v3498
        %v3586 = vunpack.c.h.b16 %v3498
        %v3587 = vunpack.c.l.b16 %v3499
        %v3588 = vunpack.c.h.b16 %v3499
        %v3589 = vunpack.c.l.b16 %v3500
        %v3590 = vunpack.c.h.b16 %v3500
        %v3591 = vunpack.c.l.b16 %v3501
        %v3592 = vunpack.c.h.b16 %v3501
        %v3593 = vunpack.c.l.b16 %v3502
        %v3594 = vunpack.c.h.b16 %v3502
        %v3595 = vunpack.c.l.b16 %v3503
        %v3596 = vunpack.c.h.b16 %v3503
        %v3597 = vunpack.c.l.b16 %v3504
        %v3598 = vunpack.c.h.b16 %v3504
        %v3599 = vunpack.c.l.b16 %v3505
        %v3600 = vunpack.c.h.b16 %v3505
        %v3601 = vunpack.c.l.b16 %v3506
        %v3602 = vunpack.c.h.b16 %v3506
        %v3603 = vunpack.c.l.b16 %v3507
        %v3604 = vunpack.c.h.b16 %v3507
        %v3605 = vunpack.c.l.b16 %v3508
        %v3606 = vunpack.c.h.b16 %v3508
        %v3607 = vunpack.c.l.b16 %v3509
        %v3608 = vunpack.c.h.b16 %v3509
        %v3609 = vunpack.c.l.b16 %v3510
        %v3610 = vunpack.c.h.b16 %v3510
        %v3611 = vunpack.c.l.b16 %v3511
        %v3612 = vunpack.c.h.b16 %v3511
        %v3613 = vunpack.c.l.b16 %v3512
        %v3614 = vunpack.c.h.b16 %v3512
        %v3615 = vunpack.c.l.b16 %v3513
        %v3616 = vunpack.c.h.b16 %v3513
        %v3617 = vunpack.c.l.b16 %v3514
        %v3618 = vunpack.c.h.b16 %v3514
        %v3619 = vunpack.c.l.b16 %v3515
        %v3620 = vunpack.c.h.b16 %v3515
        %v3621 = vunpack.c.l.b16 %v3516
        %v3622 = vunpack.c.h.b16 %v3516
        %v3623 = vunpack.c.l.b16 %v3517
        %v3624 = vunpack.c.h.b16 %v3517
        %v3625 = vunpack.c.l.b16 %v3518
        %v3626 = vunpack.c.h.b16 %v3518
        %v3627 = vpack.c.b16 %v3565, %v3563
        %v3628 = vpack.c.b16 %v3566, %v3564
        %v3629 = vpack.c.b16 %v3569, %v3567
        %v3630 = vpack.c.b16 %v3570, %v3568
        %v3631 = vpack.c.b16 %v3573, %v3571
        %v3632 = vpack.c.b16 %v3574, %v3572
        %v3633 = vpack.c.b16 %v3577, %v3575
        %v3634 = vpack.c.b16 %v3578, %v3576
        %v3635 = vpack.c.b16 %v3581, %v3579
        %v3636 = vpack.c.b16 %v3582, %v3580
        %v3637 = vpack.c.b16 %v3585, %v3583
        %v3638 = vpack.c.b16 %v3586, %v3584
        %v3639 = vpack.c.b16 %v3589, %v3587
        %v3640 = vpack.c.b16 %v3590, %v3588
        %v3641 = vpack.c.b16 %v3593, %v3591
        %v3642 = vpack.c.b16 %v3594, %v3592
        %v3643 = vpack.c.b16 %v3597, %v3595
        %v3644 = vpack.c.b16 %v3598, %v3596
        %v3645 = vpack.c.b16 %v3601, %v3599
        %v3646 = vpack.c.b16 %v3602, %v3600
        %v3647 = vpack.c.b16 %v3605, %v3603
        %v3648 = vpack.c.b16 %v3606, %v3604
        %v3649 = vpack.c.b16 %v3609, %v3607
        %v3650 = vpack.c.b16 %v3610, %v3608
        %v3651 = vpack.c.b16 %v3613, %v3611
        %v3652 = vpack.c.b16 %v3614, %v3612
        %v3653 = vpack.c.b16 %v3617, %v3615
        %v3654 = vpack.c.b16 %v3618, %v3616
        %v3655 = vpack.c.b16 %v3621, %v3619
        %v3656 = vpack.c.b16 %v3622, %v3620
        %v3657 = vpack.c.b16 %v3625, %v3623
        %v3658 = vpack.c.b16 %v3626, %v3624
        %3691 = vmatprep.subr.bf16.mxu0 %v3628
        %3692 = vmatpush1.bf16.msra.mxu0 %v3627
        %3693 = vmatprep.subr.bf16.mxu0 %v3630
        %3694 = vmatpush1.bf16.msra.mxu0 %v3629
        %3695 = vmatprep.subr.bf16.mxu0 %v3632
        %3696 = vmatpush1.bf16.msra.mxu0 %v3631
        %3697 = vmatprep.subr.bf16.mxu0 %v3634
        %3698 = vmatpush1.bf16.msra.mxu0 %v3633
        %3699 = vmatprep.subr.bf16.mxu0 %v3636
        %3700 = vmatpush1.bf16.msra.mxu0 %v3635
        %3701 = vmatprep.subr.bf16.mxu0 %v3638
        %3702 = vmatpush1.bf16.msra.mxu0 %v3637
        %3703 = vmatprep.subr.bf16.mxu0 %v3640
        %3704 = vmatpush1.bf16.msra.mxu0 %v3639
        %3705 = vmatprep.subr.bf16.mxu0 %v3642
        %3706 = vmatpush1.bf16.msra.mxu0 %v3641
        %3707 = vmatprep.subr.bf16.mxu0 %v3644
        %3708 = vmatpush1.bf16.msra.mxu0 %v3643
        %3709 = vmatprep.subr.bf16.mxu0 %v3646
        %3710 = vmatpush1.bf16.msra.mxu0 %v3645
        %3711 = vmatprep.subr.bf16.mxu0 %v3648
        %3712 = vmatpush1.bf16.msra.mxu0 %v3647
        %3713 = vmatprep.subr.bf16.mxu0 %v3650
        %3714 = vmatpush1.bf16.msra.mxu0 %v3649
        %3715 = vmatprep.subr.bf16.mxu0 %v3652
        %3716 = vmatpush1.bf16.msra.mxu0 %v3651
        %3717 = vmatprep.subr.bf16.mxu0 %v3654
        %3718 = vmatpush1.bf16.msra.mxu0 %v3653
        %3719 = vmatprep.subr.bf16.mxu0 %v3656
        %3720 = vmatpush1.bf16.msra.mxu0 %v3655
        %3721 = vmatprep.subr.bf16.mxu0 %v3658
        %3722 = vmatpush1.bf16.msra.mxu0 %v3657
        %3723 = vmatprep.mubr.bf16.mxu0 %v3486
        %3724 = vmatmul.mubr.bf16.gmra.mrb[0].mxu0 %v3485
        %v3725 = vpop.f32.mrb[0].mxu0
        %v3726 = vadd.f32 %v3524, %v3725
        %v3727 = vpop.f32.mrb[0].mxu0
        %v3728 = vadd.f32 %v3528, %v3727
        %v3729 = vpop.f32.mrb[0].mxu0
        %v3730 = vadd.f32 %v3524, %v3729
        %v3731 = vpop.f32.mrb[0].mxu0
        %v3732 = vadd.f32 %v3528, %v3731
        %3733 = vdwg.mxu0
        %v3734 = vmax.f32 %v3726, 0.0
        %v3735 = vmax.f32 %v3728, 0.0
        %v3736 = vmax.f32 %v3730, 0.0
        %v3737 = vmax.f32 %v3732, 0.0
        %v3738 = vpack.c.bf16 %v3736, %v3734
        %v3739 = vpack.c.bf16 %v3737, %v3735
        %v3740 = vld [vmem:[%s821] sm:$0xff]
        %v3741 = vld [vmem:[%s821 + $0x8] sm:$0xff]
        %v3742 = vld [vmem:[%s821 + $0x10] sm:$0xff]
        %v3743 = vld [vmem:[%s821 + $0x18] sm:$0xff]
        %v3744 = vld [vmem:[%s821 + $0x20] sm:$0xff]
        %v3745 = vld [vmem:[%s821 + $0x28] sm:$0xff]
        %v3746 = vld [vmem:[%s821 + $0x30] sm:$0xff]
        %v3747 = vld [vmem:[%s821 + $0x38] sm:$0xff]
        %v3748 = vld [vmem:[%s821 + $0x40] sm:$0xff]
        %v3749 = vld [vmem:[%s821 + $0x48] sm:$0xff]
        %v3750 = vld [vmem:[%s821 + $0x50] sm:$0xff]
        %v3751 = vld [vmem:[%s821 + $0x58] sm:$0xff]
        %v3752 = vld [vmem:[%s821 + $0x60] sm:$0xff]
        %v3753 = vld [vmem:[%s821 + $0x68] sm:$0xff]
        %v3754 = vld [vmem:[%s821 + $0x70] sm:$0xff]
        %v3755 = vld [vmem:[%s821 + $0x78] sm:$0xff]
        %v3756 = vld [vmem:[%s821 + $0x80] sm:$0xff]
        %v3757 = vld [vmem:[%s821 + $0x88] sm:$0xff]
        %v3758 = vld [vmem:[%s821 + $0x90] sm:$0xff]
        %v3759 = vld [vmem:[%s821 + $0x98] sm:$0xff]
        %v3760 = vld [vmem:[%s821 + $0xa0] sm:$0xff]
        %v3761 = vld [vmem:[%s821 + $0xa8] sm:$0xff]
        %v3762 = vld [vmem:[%s821 + $0xb0] sm:$0xff]
        %v3763 = vld [vmem:[%s821 + $0xb8] sm:$0xff]
        %v3764 = vld [vmem:[%s821 + $0xc0] sm:$0xff]
        %v3765 = vld [vmem:[%s821 + $0xc8] sm:$0xff]
        %v3766 = vld [vmem:[%s821 + $0xd0] sm:$0xff]
        %v3767 = vld [vmem:[%s821 + $0xd8] sm:$0xff]
        %v3768 = vld [vmem:[%s821 + $0xe0] sm:$0xff]
        %v3769 = vld [vmem:[%s821 + $0xe8] sm:$0xff]
        %v3770 = vld [vmem:[%s821 + $0xf0] sm:$0xff]
        %v3771 = vld [vmem:[%s821 + $0xf8] sm:$0xff]
        %v3772 = vld [vmem:[%s830] sm:$0x3]
        %v3774 = vlaneseq
        %v3775 = vshrl.u32 %v3774, 7
        %v3776 = vsub.s32 0, %v3775
        %v3777 = vrot.slane %v3772, %v3776
        %v3778 = vlaneseq
        %v3779 = vshrl.u32 %v3778, 7
        %v3780 = vsub.s32 1, %v3779
        %v3781 = vrot.slane %v3772, %v3780
        %v3816 = vunpack.c.l.b16 %v3740
        %v3817 = vunpack.c.h.b16 %v3740
        %v3818 = vunpack.c.l.b16 %v3741
        %v3819 = vunpack.c.h.b16 %v3741
        %v3820 = vunpack.c.l.b16 %v3742
        %v3821 = vunpack.c.h.b16 %v3742
        %v3822 = vunpack.c.l.b16 %v3743
        %v3823 = vunpack.c.h.b16 %v3743
        %v3824 = vunpack.c.l.b16 %v3744
        %v3825 = vunpack.c.h.b16 %v3744
        %v3826 = vunpack.c.l.b16 %v3745
        %v3827 = vunpack.c.h.b16 %v3745
        %v3828 = vunpack.c.l.b16 %v3746
        %v3829 = vunpack.c.h.b16 %v3746
        %v3830 = vunpack.c.l.b16 %v3747
        %v3831 = vunpack.c.h.b16 %v3747
        %v3832 = vunpack.c.l.b16 %v3748
        %v3833 = vunpack.c.h.b16 %v3748
        %v3834 = vunpack.c.l.b16 %v3749
        %v3835 = vunpack.c.h.b16 %v3749
        %v3836 = vunpack.c.l.b16 %v3750
        %v3837 = vunpack.c.h.b16 %v3750
        %v3838 = vunpack.c.l.b16 %v3751
        %v3839 = vunpack.c.h.b16 %v3751
        %v3840 = vunpack.c.l.b16 %v3752
        %v3841 = vunpack.c.h.b16 %v3752
        %v3842 = vunpack.c.l.b16 %v3753
        %v3843 = vunpack.c.h.b16 %v3753
        %v3844 = vunpack.c.l.b16 %v3754
        %v3845 = vunpack.c.h.b16 %v3754
        %v3846 = vunpack.c.l.b16 %v3755
        %v3847 = vunpack.c.h.b16 %v3755
        %v3848 = vunpack.c.l.b16 %v3756
        %v3849 = vunpack.c.h.b16 %v3756
        %v3850 = vunpack.c.l.b16 %v3757
        %v3851 = vunpack.c.h.b16 %v3757
        %v3852 = vunpack.c.l.b16 %v3758
        %v3853 = vunpack.c.h.b16 %v3758
        %v3854 = vunpack.c.l.b16 %v3759
        %v3855 = vunpack.c.h.b16 %v3759
        %v3856 = vunpack.c.l.b16 %v3760
        %v3857 = vunpack.c.h.b16 %v3760
        %v3858 = vunpack.c.l.b16 %v3761
        %v3859 = vunpack.c.h.b16 %v3761
        %v3860 = vunpack.c.l.b16 %v3762
        %v3861 = vunpack.c.h.b16 %v3762
        %v3862 = vunpack.c.l.b16 %v3763
        %v3863 = vunpack.c.h.b16 %v3763
        %v3864 = vunpack.c.l.b16 %v3764
        %v3865 = vunpack.c.h.b16 %v3764
        %v3866 = vunpack.c.l.b16 %v3765
        %v3867 = vunpack.c.h.b16 %v3765
        %v3868 = vunpack.c.l.b16 %v3766
        %v3869 = vunpack.c.h.b16 %v3766
        %v3870 = vunpack.c.l.b16 %v3767
        %v3871 = vunpack.c.h.b16 %v3767
        %v3872 = vunpack.c.l.b16 %v3768
        %v3873 = vunpack.c.h.b16 %v3768
        %v3874 = vunpack.c.l.b16 %v3769
        %v3875 = vunpack.c.h.b16 %v3769
        %v3876 = vunpack.c.l.b16 %v3770
        %v3877 = vunpack.c.h.b16 %v3770
        %v3878 = vunpack.c.l.b16 %v3771
        %v3879 = vunpack.c.h.b16 %v3771
        %v3880 = vpack.c.b16 %v3818, %v3816
        %v3881 = vpack.c.b16 %v3819, %v3817
        %v3882 = vpack.c.b16 %v3822, %v3820
        %v3883 = vpack.c.b16 %v3823, %v3821
        %v3884 = vpack.c.b16 %v3826, %v3824
        %v3885 = vpack.c.b16 %v3827, %v3825
        %v3886 = vpack.c.b16 %v3830, %v3828
        %v3887 = vpack.c.b16 %v3831, %v3829
        %v3888 = vpack.c.b16 %v3834, %v3832
        %v3889 = vpack.c.b16 %v3835, %v3833
        %v3890 = vpack.c.b16 %v3838, %v3836
        %v3891 = vpack.c.b16 %v3839, %v3837
        %v3892 = vpack.c.b16 %v3842, %v3840
        %v3893 = vpack.c.b16 %v3843, %v3841
        %v3894 = vpack.c.b16 %v3846, %v3844
        %v3895 = vpack.c.b16 %v3847, %v3845
        %v3896 = vpack.c.b16 %v3850, %v3848
        %v3897 = vpack.c.b16 %v3851, %v3849
        %v3898 = vpack.c.b16 %v3854, %v3852
        %v3899 = vpack.c.b16 %v3855, %v3853
        %v3900 = vpack.c.b16 %v3858, %v3856
        %v3901 = vpack.c.b16 %v3859, %v3857
        %v3902 = vpack.c.b16 %v3862, %v3860
        %v3903 = vpack.c.b16 %v3863, %v3861
        %v3904 = vpack.c.b16 %v3866, %v3864
        %v3905 = vpack.c.b16 %v3867, %v3865
        %v3906 = vpack.c.b16 %v3870, %v3868
        %v3907 = vpack.c.b16 %v3871, %v3869
        %v3908 = vpack.c.b16 %v3874, %v3872
        %v3909 = vpack.c.b16 %v3875, %v3873
        %v3910 = vpack.c.b16 %v3878, %v3876
        %v3911 = vpack.c.b16 %v3879, %v3877
        %3944 = vmatprep.subr.bf16.mxu0 %v3881
        %3945 = vmatpush1.bf16.msra.mxu0 %v3880
        %3946 = vmatprep.subr.bf16.mxu0 %v3883
        %3947 = vmatpush1.bf16.msra.mxu0 %v3882
        %3948 = vmatprep.subr.bf16.mxu0 %v3885
        %3949 = vmatpush1.bf16.msra.mxu0 %v3884
        %3950 = vmatprep.subr.bf16.mxu0 %v3887
        %3951 = vmatpush1.bf16.msra.mxu0 %v3886
        %3952 = vmatprep.subr.bf16.mxu0 %v3889
        %3953 = vmatpush1.bf16.msra.mxu0 %v3888
        %3954 = vmatprep.subr.bf16.mxu0 %v3891
        %3955 = vmatpush1.bf16.msra.mxu0 %v3890
        %3956 = vmatprep.subr.bf16.mxu0 %v3893
        %3957 = vmatpush1.bf16.msra.mxu0 %v3892
        %3958 = vmatprep.subr.bf16.mxu0 %v3895
        %3959 = vmatpush1.bf16.msra.mxu0 %v3894
        %3960 = vmatprep.subr.bf16.mxu0 %v3897
        %3961 = vmatpush1.bf16.msra.mxu0 %v3896
        %3962 = vmatprep.subr.bf16.mxu0 %v3899
        %3963 = vmatpush1.bf16.msra.mxu0 %v3898
        %3964 = vmatprep.subr.bf16.mxu0 %v3901
        %3965 = vmatpush1.bf16.msra.mxu0 %v3900
        %3966 = vmatprep.subr.bf16.mxu0 %v3903
        %3967 = vmatpush1.bf16.msra.mxu0 %v3902
        %3968 = vmatprep.subr.bf16.mxu0 %v3905
        %3969 = vmatpush1.bf16.msra.mxu0 %v3904
        %3970 = vmatprep.subr.bf16.mxu0 %v3907
        %3971 = vmatpush1.bf16.msra.mxu0 %v3906
        %3972 = vmatprep.subr.bf16.mxu0 %v3909
        %3973 = vmatpush1.bf16.msra.mxu0 %v3908
        %3974 = vmatprep.subr.bf16.mxu0 %v3911
        %3975 = vmatpush1.bf16.msra.mxu0 %v3910
        %3976 = vmatprep.mubr.bf16.mxu0 %v3739
        %3977 = vmatmul.mubr.bf16.gmra.mrb[0].mxu0 %v3738
        %v3978 = vpop.f32.mrb[0].mxu0
        %v3979 = vadd.f32 %v3777, %v3978
        %v3980 = vpop.f32.mrb[0].mxu0
        %v3981 = vadd.f32 %v3781, %v3980
        %v3982 = vpop.f32.mrb[0].mxu0
        %v3983 = vadd.f32 %v3777, %v3982
        %v3984 = vpop.f32.mrb[0].mxu0
        %v3985 = vadd.f32 %v3781, %v3984
        %3986 = vdwg.mxu0
        %v3987 = vadd.f32 %v3481, %v3979
        %v3988 = vadd.f32 %v3482, %v3981
        %v3989 = vadd.f32 %v3483, %v3983
        %v3990 = vadd.f32 %v3484, %v3985
        %v3991 = vld [vmem:[%s857] sm:$0x3]
        %v3992 = vld [vmem:[%s866] sm:$0x3]
        %v3993 = vadd.f32 %v3987, %v3988
        %3994 = vadd.xlane.f32.xlu0 %v3993
        %v3995 = vpop.xlane.xlu0 %3994
        %v3996 = vadd.f32 %v3989, %v3990
        %3997 = vadd.xlane.f32.xlu0 %v3996
        %v3998 = vpop.xlane.xlu0 %3997
        %v3999 = vmul.f32 %v3995, 0.005
        %v4000 = vmul.f32 %v3998, 0.005
        %v4001 = vmul.f32 %v3987, %v3987
        %v4002 = vmul.f32 %v3988, %v3988
        %v4003 = vmul.f32 %v3989, %v3989
        %v4004 = vmul.f32 %v3990, %v3990
        %v4005 = vadd.f32 %v4001, %v4002
        %4006 = vadd.xlane.f32.xlu0 %v4005
        %v4007 = vpop.xlane.xlu0 %4006
        %v4008 = vadd.f32 %v4003, %v4004
        %4009 = vadd.xlane.f32.xlu0 %v4008
        %v4010 = vpop.xlane.xlu0 %4009
        %v4011 = vmul.f32 %v4007, 0.005
        %v4012 = vmul.f32 %v4010, 0.005
        %v4013 = vmul.f32 %v3999, %v3999
        %v4014 = vmul.f32 %v4000, %v4000
        %v4015 = vsub.f32 %v4011, %v4013
        %v4016 = vsub.f32 %v4012, %v4014
        %v4017 = vsub.f32 %v3987, %v3999
        %v4018 = vsub.f32 %v3988, %v3999
        %v4019 = vsub.f32 %v3989, %v4000
        %v4020 = vsub.f32 %v3990, %v4000
        %v4021 = vadd.f32 %v4015, 1e-05
        %v4022 = vadd.f32 %v4016, 1e-05
        %v4023 = vrsqrt.pop %v4021
        %v4024 = vrsqrt.pop %v4022
        %v4025 = vmul.f32 %v4017, %v4023
        %v4026 = vmul.f32 %v4018, %v4023
        %v4027 = vmul.f32 %v4019, %v4024
        %v4028 = vmul.f32 %v4020, %v4024
        %v4030 = vlaneseq
        %v4031 = vshrl.u32 %v4030, 7
        %v4032 = vsub.s32 0, %v4031
        %v4033 = vrot.slane %v3991, %v4032
        %v4034 = vlaneseq
        %v4035 = vshrl.u32 %v4034, 7
        %v4036 = vsub.s32 1, %v4035
        %v4037 = vrot.slane %v3991, %v4036
        %v4040 = vmul.f32 %v4025, %v4033
        %v4041 = vmul.f32 %v4026, %v4037
        %v4042 = vmul.f32 %v4027, %v4033
        %v4043 = vmul.f32 %v4028, %v4037
        %v4045 = vlaneseq
        %v4046 = vshrl.u32 %v4045, 7
        %v4047 = vsub.s32 0, %v4046
        %v4048 = vrot.slane %v3992, %v4047
        %v4049 = vlaneseq
        %v4050 = vshrl.u32 %v4049, 7
        %v4051 = vsub.s32 1, %v4050
        %v4052 = vrot.slane %v3992, %v4051
        %v4055 = vadd.f32 %v4040, %v4048
        %v4056 = vadd.f32 %v4041, %v4052
        %v4057 = vadd.f32 %v4042, %v4048
        %v4058 = vadd.f32 %v4043, %v4052
        %4059 = vst [vmem:[#allocation2] sm:$0xff] %v4055
        %4060 = vst [vmem:[#allocation2 + $0x8] sm:$0xff] %v4056
        %4061 = vst [vmem:[#allocation2 + $0x10] sm:$0xff] %v4057
        %4062 = vst [vmem:[#allocation2 + $0x18] sm:$0xff] %v4058
        %p4063 = scmp.eq.s32.totalorder %s31, 1
        // Predicated region
        $region153: #{tpu_custom_call.1} parent=83 // pred_check
          %p4064 = pneg %p4063
        $region154: #{tpu_custom_call.1} parent=83 // pred_check_branch
          %4066 = sbr.rel (%p4064) target = $region156
        $region155: #{tpu_custom_call.1} parent=83 // pred_region
          %v4067 = vpack.c.bf16 %v4057, %v4055
          %v4068 = vpack.c.bf16 %v4058, %v4056
          %v4069 = vld [vmem:[#allocation20] sm:$0xf]
          %v4070 = vld [vmem:[#allocation20 + $0x4] sm:$0xf]
          %v4071 = vld [vmem:[#allocation20 + $0x8] sm:$0xf]
          %v4072 = vld [vmem:[#allocation20 + $0xc] sm:$0xf]
          %v4073 = vld [vmem:[#allocation20 + $0x10] sm:$0xf]
          %v4074 = vld [vmem:[#allocation20 + $0x14] sm:$0xf]
          %v4075 = vld [vmem:[#allocation20 + $0x18] sm:$0xf]
          %v4076 = vld [vmem:[#allocation20 + $0x1c] sm:$0xf]
          %v4077 = vld [vmem:[#allocation20 + $0x20] sm:$0xf]
          %v4078 = vld [vmem:[#allocation20 + $0x24] sm:$0xf]
          %v4079 = vld [vmem:[#allocation20 + $0x28] sm:$0xf]
          %v4080 = vld [vmem:[#allocation20 + $0x2c] sm:$0xf]
          %v4081 = vld [vmem:[#allocation20 + $0x30] sm:$0xf]
          %v4082 = vld [vmem:[#allocation20 + $0x34] sm:$0xf]
          %v4083 = vld [vmem:[#allocation20 + $0x38] sm:$0xf]
          %v4084 = vld [vmem:[#allocation20 + $0x3c] sm:$0xf]
          %v4085 = vld [vmem:[#allocation20 + $0x40] sm:$0xf]
          %v4086 = vld [vmem:[#allocation20 + $0x44] sm:$0xf]
          %v4087 = vld [vmem:[#allocation20 + $0x48] sm:$0xf]
          %v4088 = vld [vmem:[#allocation20 + $0x4c] sm:$0xf]
          %v4089 = vld [vmem:[#allocation20 + $0x50] sm:$0xf]
          %v4090 = vld [vmem:[#allocation20 + $0x54] sm:$0xf]
          %v4091 = vld [vmem:[#allocation20 + $0x58] sm:$0xf]
          %v4092 = vld [vmem:[#allocation20 + $0x5c] sm:$0xf]
          %v4093 = vld [vmem:[#allocation20 + $0x60] sm:$0xf]
          %v4094 = vld [vmem:[#allocation20 + $0x64] sm:$0xf]
          %v4095 = vld [vmem:[#allocation20 + $0x68] sm:$0xf]
          %v4096 = vld [vmem:[#allocation20 + $0x6c] sm:$0xf]
          %v4097 = vld [vmem:[#allocation20 + $0x70] sm:$0xf]
          %v4098 = vld [vmem:[#allocation20 + $0x74] sm:$0xf]
          %v4099 = vld [vmem:[#allocation20 + $0x78] sm:$0xf]
          %v4100 = vld [vmem:[#allocation20 + $0x7c] sm:$0xf]
          %v4101 = vld [vmem:[#allocation21] sm:$0x1]
          %v4103 = vlaneseq
          %v4104 = vshrl.u32 %v4103, 7
          %v4105 = vsub.s32 0, %v4104
          %v4106 = vrot.slane %v4101, %v4105
          %v4140 = vunpack.c.l.b16 %v4069
          %v4141 = vunpack.c.l.b16 %v4070
          %v4142 = vunpack.c.l.b16 %v4071
          %v4143 = vunpack.c.l.b16 %v4072
          %v4144 = vunpack.c.l.b16 %v4073
          %v4145 = vunpack.c.l.b16 %v4074
          %v4146 = vunpack.c.l.b16 %v4075
          %v4147 = vunpack.c.l.b16 %v4076
          %v4148 = vunpack.c.l.b16 %v4077
          %v4149 = vunpack.c.l.b16 %v4078
          %v4150 = vunpack.c.l.b16 %v4079
          %v4151 = vunpack.c.l.b16 %v4080
          %v4152 = vunpack.c.l.b16 %v4081
          %v4153 = vunpack.c.l.b16 %v4082
          %v4154 = vunpack.c.l.b16 %v4083
          %v4155 = vunpack.c.l.b16 %v4084
          %v4156 = vunpack.c.l.b16 %v4085
          %v4157 = vunpack.c.l.b16 %v4086
          %v4158 = vunpack.c.l.b16 %v4087
          %v4159 = vunpack.c.l.b16 %v4088
          %v4160 = vunpack.c.l.b16 %v4089
          %v4161 = vunpack.c.l.b16 %v4090
          %v4162 = vunpack.c.l.b16 %v4091
          %v4163 = vunpack.c.l.b16 %v4092
          %v4164 = vunpack.c.l.b16 %v4093
          %v4165 = vunpack.c.l.b16 %v4094
          %v4166 = vunpack.c.l.b16 %v4095
          %v4167 = vunpack.c.l.b16 %v4096
          %v4168 = vunpack.c.l.b16 %v4097
          %v4169 = vunpack.c.l.b16 %v4098
          %v4170 = vunpack.c.l.b16 %v4099
          %v4171 = vunpack.c.l.b16 %v4100
          %v4172 = vpack.c.b16 %v4141, %v4140
          %v4173 = vpack.c.b16 %v4143, %v4142
          %v4174 = vpack.c.b16 %v4145, %v4144
          %v4175 = vpack.c.b16 %v4147, %v4146
          %v4176 = vpack.c.b16 %v4149, %v4148
          %v4177 = vpack.c.b16 %v4151, %v4150
          %v4178 = vpack.c.b16 %v4153, %v4152
          %v4179 = vpack.c.b16 %v4155, %v4154
          %v4180 = vpack.c.b16 %v4157, %v4156
          %v4181 = vpack.c.b16 %v4159, %v4158
          %v4182 = vpack.c.b16 %v4161, %v4160
          %v4183 = vpack.c.b16 %v4163, %v4162
          %v4184 = vpack.c.b16 %v4165, %v4164
          %v4185 = vpack.c.b16 %v4167, %v4166
          %v4186 = vpack.c.b16 %v4169, %v4168
          %v4187 = vpack.c.b16 %v4171, %v4170
          %4204 = vmatprep.subr.bf16.mxu0 0
          %4205 = vmatpush1.bf16.msra.mxu0 %v4172
          %4206 = vmatprep.subr.bf16.mxu0 0
          %4207 = vmatpush1.bf16.msra.mxu0 %v4173
          %4208 = vmatprep.subr.bf16.mxu0 0
          %4209 = vmatpush1.bf16.msra.mxu0 %v4174
          %4210 = vmatprep.subr.bf16.mxu0 0
          %4211 = vmatpush1.bf16.msra.mxu0 %v4175
          %4212 = vmatprep.subr.bf16.mxu0 0
          %4213 = vmatpush1.bf16.msra.mxu0 %v4176
          %4214 = vmatprep.subr.bf16.mxu0 0
          %4215 = vmatpush1.bf16.msra.mxu0 %v4177
          %4216 = vmatprep.subr.bf16.mxu0 0
          %4217 = vmatpush1.bf16.msra.mxu0 %v4178
          %4218 = vmatprep.subr.bf16.mxu0 0
          %4219 = vmatpush1.bf16.msra.mxu0 %v4179
          %4220 = vmatprep.subr.bf16.mxu0 0
          %4221 = vmatpush1.bf16.msra.mxu0 %v4180
          %4222 = vmatprep.subr.bf16.mxu0 0
          %4223 = vmatpush1.bf16.msra.mxu0 %v4181
          %4224 = vmatprep.subr.bf16.mxu0 0
          %4225 = vmatpush1.bf16.msra.mxu0 %v4182
          %4226 = vmatprep.subr.bf16.mxu0 0
          %4227 = vmatpush1.bf16.msra.mxu0 %v4183
          %4228 = vmatprep.subr.bf16.mxu0 0
          %4229 = vmatpush1.bf16.msra.mxu0 %v4184
          %4230 = vmatprep.subr.bf16.mxu0 0
          %4231 = vmatpush1.bf16.msra.mxu0 %v4185
          %4232 = vmatprep.subr.bf16.mxu0 0
          %4233 = vmatpush1.bf16.msra.mxu0 %v4186
          %4234 = vmatprep.subr.bf16.mxu0 0
          %4235 = vmatpush1.bf16.msra.mxu0 %v4187
          %4236 = vmatprep.mubr.bf16.mxu0 %v4068
          %4237 = vmatmul.mubr.bf16.gmra.mrb[0].mxu0 %v4067
          %v4238 = vpop.f32.mrb[0].mxu0
          %v4239 = vadd.f32 %v4106, %v4238
          %v4240 = vpop.f32.mrb[0].mxu0
          %v4241 = vpop.f32.mrb[0].mxu0
          %v4242 = vadd.f32 %v4106, %v4241
          %v4243 = vpop.f32.mrb[0].mxu0
          %4244 = vdwg.mxu0
          %4245 = vst [vmem:[#allocation23] sm:$0xff] %v4239
          %4246 = vst [vmem:[#allocation23 + $0x8] sm:$0xff] %v4242
        $region156: #{tpu_custom_call.1} parent=83 // pred_fallthru
          _
        // Predicated region
        $region157: #{tpu_custom_call.1} parent=83 // pred_check
          %p4247 = pneg %p440
        $region158: #{tpu_custom_call.1} parent=83 // pred_check_branch
          %4249 = sbr.rel (%p4247) target = $region160
        $region159: #{tpu_custom_call.1} parent=83 // pred_region
          %s4251 = ssub.s32 256, 256
          %4252 = vsyncadd [#allocation5], %s4251
          %s4253 = sshll.u32 [#allocation23], 4
          %s4254 = int_to_ptr.vmem [resolvable:$true] %s4253
          %4259 = dma.vmem_to_hbm [thread:$0]  %s4254, 256, %s16, [#allocation5], 128, 128, 8
        $region160: #{tpu_custom_call.1} parent=83 // pred_fallthru
          _
        // Predicated region
        $region161: #{tpu_custom_call.1} parent=83 // pred_check
          %p4260 = pneg %p440
        $region162: #{tpu_custom_call.1} parent=83 // pred_check_branch
          %4262 = sbr.rel (%p4260) target = $region164
        $region163: #{tpu_custom_call.1} parent=83 // pred_region
          %4263 = dma.done [#allocation5], 256
        $region164: #{tpu_custom_call.1} parent=83 // pred_fallthru
          _
      $region84: #{tpu_custom_call.1} parent=5 // pred_fallthru
        _
      %p4264 = scmp.le.s32.totalorder 2, %s26
      // Predicated region
      $region165: #{tpu_custom_call.1} parent=5 // pred_check
        %p4265 = pneg %p4264
      $region166: #{tpu_custom_call.1} parent=5 // pred_check_branch
        %4267 = sbr.rel (%p4265) target = $region168
      $region167: #{tpu_custom_call.1} parent=5 // pred_region
        %s4268 = ssub.s32 %s26, 2
      $region168: #{tpu_custom_call.1} parent=5 // pred_fallthru
        _
    $region6: #{tpu_custom_call.1} parent=1 // loop_footer
      %s30 = sadd.s32 1, %s26
    $region7: #{tpu_custom_call.1} parent=1 // loop_footer_branch
      %25 = sbr.rel target = $region3
    $region8: #{tpu_custom_call.1} parent=1 // loop_exit
      _
    %4269 = vsyncpa [#allocation4], 1
    %s4270 = scalar_lea.sflag [#allocation4], 1
    %4271 = vsyncpa %s4270, 1
    %4272 = vsyncpa [#allocation7], 1
    %4273 = vsyncpa [#allocation22], 1
    %4274 = vsyncpa [#allocation5], 1
    %s4275 = scalar_lea.sflag [#allocation5], 1
    %4276 = vsyncpa %s4275, 1

</llo_original>
